<compile_context>
chip_gen: v5e
topology: v5e:2x2
jax: 0.10.0
libtpu: 0.0.40
codegen_flags: <defaults>
</compile_context>

<pallas_src>
import functools
import math

import jax
import jax.numpy as jnp
from jax.experimental import pallas as pl
from jax.experimental.pallas import tpu as pltpu

D_STATE = 64   # d_state
D_CONV = 4     # d_conv
EXPAND = 2     # expand
LN_EPS = 1e-5  # torch.nn.LayerNorm default eps
TS = 8         # timestep sub-tile (sublane granularity) used by the serial scan


def _silu(v):
    # v * sigmoid(v); sigmoid via a single EUP tanh instead of exp + reciprocal.
    return v * (0.5 * jnp.tanh(0.5 * v) + 0.5)


def _softplus(v):
    safe = jnp.minimum(v, 20.0)
    return jnp.where(v > 20.0, v, jnp.log1p(jnp.exp(safe)))


def _mamba_stack_kernel(
    x_ref,       # (Bb, T, C)      input block (only read at layer 0)
    w_in_ref,    # (1, C, 2*Di)    fused in_proj weight, pre-transposed  [x | z]   bf16
    w_conv_ref,  # (1, D_CONV, Di) depthwise conv taps; tap k hits x[t-(D_CONV-1)+k]
    w_xp_ref,    # (1, Di, XPp)    fused x_proj (+folded dt_proj) weight [B|C|dt|0] bf16
    a_log_ref,   # (1, N, Di)      A_log^T ;  A = -exp(A_log)
    w_out_ref,   # (1, Di, C)      out_proj weight, pre-transposed                 bf16
    vec_ref,     # (1, 8, Di)      rows: ln_w, ln_b, b_conv, b_dt, D, (pad)
    o_ref,       # (Bb, T, C)      residual stream, resident across the layer grid axis
    xpad_ref,    # scratch (Bb, T+8, Di)       zero-padded conv input
    delta_ref,   # scratch (Bb, T, Di)         softplus(dt)
    du_ref,      # scratch (Bb, T, Di)         delta * u
    b_ref,       # scratch (Bb, T, N)          B
    cc_ref,      # scratch (Bb, T, N)          C
    y_ref,       # scratch (Bb, T, Di)         ssm output
    dA_ref,      # scratch (Bb, n_slots*Tc, N, Di)   exp(delta*A), chunked
    dBu_ref,     # scratch (Bb, n_slots*Tc, N, Di)   delta*B*u,    chunked
    *, tc, n_chunks, n_slots,
):
    Bb, T, C = x_ref.shape
    Di = w_conv_ref.shape[2]
    N = a_log_ref.shape[1]
    M = Bb * T
    n_sub = tc // TS

    layer = pl.program_id(1)

    @pl.when(layer == 0)
    def _init():
        o_ref[...] = x_ref[...]          # initialize the resident residual stream

    res = o_ref[...]                     # (Bb, T, C)

    vecs = vec_ref[0]                    # (8, Di)
    ln_w, ln_b = vecs[0:1, :C], vecs[1:2, :C]                        # (1, C)
    b_conv, b_dt, d_skip = vecs[2:3, :], vecs[3:4, :], vecs[4:5, :]  # (1, Di)

    # ---- LayerNorm over channels; batch*time folded into the matmul M axis ----
    xm = res.reshape(M, C)
    mu = jnp.mean(xm, axis=-1, keepdims=True)
    xc = xm - mu
    var = jnp.mean(xc * xc, axis=-1, keepdims=True)
    yn = xc * jax.lax.rsqrt(var + LN_EPS) * ln_w + ln_b              # (M, C) f32

    # ---- fused in_proj (bias=False): one (M,C)@(C,2Di) bf16 MXU matmul ----
    xz = jnp.dot(yn.astype(jnp.bfloat16), w_in_ref[0],
                 preferred_element_type=jnp.float32)                 # (M, 2Di) f32
    xpart = xz[:, :Di].reshape(Bb, T, Di)
    z = xz[:, Di:]                                                   # (M, Di)

    # ---- causal depthwise conv1d via one zero-padded scratch + SiLU ----
    PAD = xpad_ref.shape[1] - T
    wc = w_conv_ref[0]                                               # (D_CONV, Di)
    xpad_ref[:, :PAD, :] = jnp.zeros((Bb, PAD, Di), jnp.float32)
    xpad_ref[:, PAD:, :] = xpart
    acc = xpart * wc[D_CONV - 1:D_CONV, :]
    for k in range(D_CONV - 1):
        s = D_CONV - 1 - k
        acc = acc + xpad_ref[:, PAD - s:PAD - s + T, :] * wc[k:k + 1, :]
    u3 = _silu(acc + b_conv)                                         # (Bb, T, Di)
    u = u3.reshape(M, Di)

    # ---- fused x_proj (+ folded dt_proj): one (M,Di)@(Di,XPp) bf16 matmul ----
    bcd = jnp.dot(u.astype(jnp.bfloat16), w_xp_ref[0],
                  preferred_element_type=jnp.float32)                # (M, XPp) f32
    b_ref[...] = bcd[:, :N].reshape(Bb, T, N)
    cc_ref[...] = bcd[:, N:2 * N].reshape(Bb, T, N)
    delta3 = _softplus(bcd[:, 2 * N:2 * N + Di] + b_dt).reshape(Bb, T, Di)
    delta_ref[...] = delta3
    du_ref[...] = delta3 * u3

    # ---- selective scan, (N, Di) state layout: N on sublanes, Di on lanes ----
    A = -jnp.exp(a_log_ref[0])                                       # (N, Di)

    def precompute_window(t_src, t_dst):
        # dA / dBu for TS timesteps: delta broadcast over N sublanes, B over Di lanes.
        t_src = pl.multiple_of(t_src, TS)
        t_dst = pl.multiple_of(t_dst, TS)
        d = delta_ref[:, pl.ds(t_src, TS), :]                        # (Bb, TS, Di)
        du = du_ref[:, pl.ds(t_src, TS), :]
        bm = b_ref[:, pl.ds(t_src, TS), :]                           # (Bb, TS, N)
        dA_ref[:, pl.ds(t_dst, TS), :, :] = jnp.exp(d[:, :, None, :] * A)
        dBu_ref[:, pl.ds(t_dst, TS), :, :] = du[:, :, None, :] * bm[:, :, :, None]

    # prologue: precompute chunk 0 into slot 0
    def _pro(s, carry):
        precompute_window(s * TS, s * TS)
        return carry
    jax.lax.fori_loop(0, n_sub, _pro, 0)

    def chunk_body(ci, h):
        if n_slots == 2:
            slot = jax.lax.rem(ci, 2)
            base = slot * tc
            dst_next = (1 - slot) * tc
            t_next = jnp.minimum(ci + 1, n_chunks - 1) * tc
        else:
            base = 0
        t0 = ci * tc

        def sub_body(s, h):
            toff = s * TS
            if n_slots == 2:
                # Precompute the matching TS window of the NEXT chunk into the other
                # slot; same loop body as the recurrence so the EUP/VPU precompute
                # overlaps the serial scan (wasted once on the final chunk).
                precompute_window(t_next + toff, dst_next + toff)
            t_abs = pl.multiple_of(t0 + toff, TS)
            c_blk = cc_ref[:, pl.ds(t_abs, TS), :]                   # (Bb, TS, N)
            ys = []
            for j in range(TS):
                dA_t = dA_ref[:, base + toff + j, :, :]              # (Bb, N, Di)
                dBu_t = dBu_ref[:, base + toff + j, :, :]
                h = dA_t * h + dBu_t
                # reduce over N (sublanes); c broadcast over Di lanes
                ys.append(jnp.sum(h * c_blk[:, j, :, None], axis=1))  # (Bb, Di)
            y_ref[:, pl.ds(t_abs, TS), :] = jnp.stack(ys, axis=1)     # (Bb, TS, Di)
            return h

        return jax.lax.fori_loop(0, n_sub, sub_body, h)

    # h carried in vregs (loop carry); for very large Bb*N*Di the compiler spills it.
    h0 = jnp.zeros((Bb, N, Di), jnp.float32)
    jax.lax.fori_loop(0, n_chunks, chunk_body, h0)

    # ---- D skip, SiLU gate, out_proj (bias=False), residual add ----
    y_ssm = y_ref[...].reshape(M, Di) + d_skip * u
    y_gated = y_ssm * _silu(z)
    out = jnp.dot(y_gated.astype(jnp.bfloat16), w_out_ref[0],
                  preferred_element_type=jnp.float32)                # (M, C)
    o_ref[...] = res + out.reshape(Bb, T, C)


# ------------------------------ wrapper helpers -------------------------------

def _round_up(v, m):
    return ((v + m - 1) // m) * m


def _pack_vec(p, Di):
    """Pack the per-layer vector parameters into one (8, Di) row block."""
    def row(v):
        v = jnp.asarray(v, jnp.float32).reshape(-1)
        return jnp.pad(v, (0, Di - v.shape[0]))
    rows = [row(p["ln_w"]), row(p["ln_b"]), row(p["b_conv"]), row(p["b_dt"]), row(p["D"])]
    rows += [jnp.zeros((Di,), jnp.float32)] * (8 - len(rows))
    return jnp.stack(rows, axis=0)


def _vmem_capacity_bytes():
    try:
        cap = int(pltpu.get_tpu_info().vmem_capacity_bytes)
        if cap > 0:
            return cap
    except Exception:
        pass
    try:
        if "v7" in jax.devices()[0].device_kind.lower():
            return 64 * 1024 * 1024
    except Exception:
        pass
    return 128 * 1024 * 1024


def _has_two_tensorcores():
    try:
        return "v7" in jax.devices()[0].device_kind.lower()
    except Exception:
        return False


def _vmem_estimate(Bb, Tc, T, C, Di, N, XPp, n_slots):
    f32, bf16 = 4, 2
    io_blocks = 2 * 2 * Bb * T * C * f32                      # x + o, double-buffered
    weights = 2 * (C * 2 * Di * bf16 + D_CONV * Di * f32 + Di * XPp * bf16
                   + N * Di * f32 + Di * C * bf16 + 8 * Di * f32)
    scratch = (Bb * (T + 8) * Di + 3 * Bb * T * Di + 2 * Bb * T * N
               + 2 * n_slots * Bb * Tc * N * Di) * f32
    live_vals = Bb * T * (2 * Di + XPp + 4 * Di + 2 * C) * f32  # xz, bcd, u3, z, ... (rough)
    return io_blocks + weights + scratch + live_vals


def _choose_tiling(B, T_pad, C, Di, N, XPp, batch_block=None, time_chunk=None):
    budget = int(_vmem_capacity_bytes() * 0.85)
    # Time-chunk candidates: divisors of T_pad, multiples of TS, preferring ~128-256.
    tcands = [t for t in range(T_pad, 0, -1) if T_pad % t == 0 and t % TS == 0]
    tcands.sort(key=lambda t: (t > 256, -t if t <= 256 else t))
    if time_chunk is not None:
        assert T_pad % time_chunk == 0 and time_chunk % TS == 0
        tcands = [time_chunk]
    bb_cap = B
    if _has_two_tensorcores() and B >= 2:
        bb_cap = B // 2           # keep grid[0] >= 2 so both TensorCores get work
    bcands = [b for b in range(B, 0, -1) if B % b == 0 and b <= bb_cap]
    if batch_block is not None:
        assert B % batch_block == 0
        bcands = [batch_block]
    for Bb in bcands:             # maximize Bb first (cuts per-layer weight re-DMA)
        for Tc in tcands:
            ns = 1 if Tc == T_pad else 2
            if _vmem_estimate(Bb, Tc, T_pad, C, Di, N, XPp, ns) <= budget:
                return Bb, Tc, budget
    return (bcands[-1] if bcands else 1), min(tcands), budget


def mamba_blocks_forward(x_bft, params, *, batch_block=None, time_chunk=None):
    """MambaBlocks.forward with inference_params=None.  x_bft: (B, channels, T)."""
    # TODO(synk): inference_params (stateful incremental decoding) path not implemented.
    B, C, T = x_bft.shape
    L = len(params)
    Di = EXPAND * C
    N = D_STATE
    XP = 2 * N + Di                      # fused x_proj output columns: [B | C | dt]
    XPp = _round_up(XP, 128)             # lane-aligned matmul output width

    T_pad = _round_up(T, TS)
    x_btc = jnp.transpose(x_bft, (0, 2, 1)).astype(jnp.float32)    # 'b f t -> b t f'
    if T_pad != T:
        x_btc = jnp.pad(x_btc, ((0, 0), (0, T_pad - T), (0, 0)))

    # Stack parameters across layers, pre-transpose, fold dt_proj into x_proj, and cast
    # the MXU operands to bf16 (scan / LN / per-channel vectors stay f32).
    # TODO(synk): pad channels to a multiple of 128 with a masked LayerNorm for models
    #             whose d_model is not already lane-aligned.
    def fuse_xp(p):
        dt_fused = p["w_dt"] @ p["w_xp_dt"]                              # (Di, Di)
        w = jnp.concatenate([p["w_xp_b"], p["w_xp_c"], dt_fused], axis=0).T  # (Di, XP)
        return jnp.pad(w, ((0, 0), (0, XPp - XP)))

    w_in_t = jnp.stack([jnp.concatenate([p["w_in_x"], p["w_in_z"]], axis=0).T
                        for p in params]).astype(jnp.bfloat16)
    w_conv = jnp.stack([p["w_conv"] for p in params]).astype(jnp.float32)
    w_xp_t = jnp.stack([fuse_xp(p) for p in params]).astype(jnp.bfloat16)
    a_log_t = jnp.stack([p["a_log"].T for p in params]).astype(jnp.float32)   # (L, N, Di)
    w_out_t = jnp.stack([p["w_out"].T for p in params]).astype(jnp.bfloat16)
    vecs = jnp.stack([_pack_vec(p, Di) for p in params])

    Bb, Tc, vmem_limit = _choose_tiling(B, T_pad, C, Di, N, XPp,
                                        batch_block=batch_block, time_chunk=time_chunk)
    n_chunks = T_pad // Tc
    n_slots = 1 if n_chunks == 1 else 2

    grid = (B // Bb, L)   # layer axis innermost: residual stream stays resident in VMEM

    kernel = functools.partial(_mamba_stack_kernel,
                               tc=Tc, n_chunks=n_chunks, n_slots=n_slots)

    grid_spec = pltpu.PrefetchScalarGridSpec(
        num_scalar_prefetch=0,
        grid=grid,
        in_specs=[
            pl.BlockSpec((Bb, T_pad, C), lambda b, l: (b, 0, 0)),          # x
            pl.BlockSpec((1, C, 2 * Di), lambda b, l: (l, 0, 0)),          # in_proj^T
            pl.BlockSpec((1, D_CONV, Di), lambda b, l: (l, 0, 0)),         # conv taps
            pl.BlockSpec((1, Di, XPp), lambda b, l: (l, 0, 0)),            # x_proj^T fused
            pl.BlockSpec((1, N, Di), lambda b, l: (l, 0, 0)),              # A_log^T
            pl.BlockSpec((1, Di, C), lambda b, l: (l, 0, 0)),              # out_proj^T
            pl.BlockSpec((1, 8, Di), lambda b, l: (l, 0, 0)),              # packed vectors
        ],
        out_specs=pl.BlockSpec((Bb, T_pad, C), lambda b, l: (b, 0, 0)),
        scratch_shapes=[
            pltpu.VMEM((Bb, T_pad + 8, Di), jnp.float32),        # xpad (causal conv)
            pltpu.VMEM((Bb, T_pad, Di), jnp.float32),            # delta
            pltpu.VMEM((Bb, T_pad, Di), jnp.float32),            # delta*u
            pltpu.VMEM((Bb, T_pad, N), jnp.float32),             # B
            pltpu.VMEM((Bb, T_pad, N), jnp.float32),             # C
            pltpu.VMEM((Bb, T_pad, Di), jnp.float32),            # y (ssm output)
            pltpu.VMEM((Bb, n_slots * Tc, N, Di), jnp.float32),  # dA  (chunk, dbl-buf)
            pltpu.VMEM((Bb, n_slots * Tc, N, Di), jnp.float32),  # dBu (chunk, dbl-buf)
        ],
    )

    y = pl.pallas_call(
        kernel,
        out_shape=jax.ShapeDtypeStruct((B, T_pad, C), jnp.float32),
        grid_spec=grid_spec,
        compiler_params=pltpu.CompilerParams(
            dimension_semantics=("parallel", "arbitrary"),
            vmem_limit_bytes=vmem_limit,
        ),
    )(x_btc, w_in_t, w_conv, w_xp_t, a_log_t, w_out_t, vecs)

    return jnp.transpose(y[:, :T, :], (0, 2, 1))    # 'b t f -> b f t'


# ----------------------- deterministic parameter init ------------------------

def init_params(key, length, channels):
    Di = EXPAND * channels
    R = max(1, math.ceil(channels / 16))   # dt_rank = "auto"
    N = D_STATE
    params = []
    for i in range(length):
        ks = jax.random.split(jax.random.fold_in(key, i), 10)
        # Mamba-style dt bias: inverse-softplus of dt ~ LogUniform(1e-3, 1e-1)
        dt = jnp.exp(jax.random.uniform(ks[7], (1, Di), jnp.float32)
                     * (math.log(0.1) - math.log(1e-3)) + math.log(1e-3))
        b_dt = dt + jnp.log(-jnp.expm1(-dt))
        p = dict(
            ln_w=jnp.ones((1, channels), jnp.float32),
            ln_b=jnp.zeros((1, channels), jnp.float32),
            w_in_x=0.1 * jax.random.normal(ks[0], (Di, channels), jnp.float32),
            w_in_z=0.1 * jax.random.normal(ks[1], (Di, channels), jnp.float32),
            w_conv=0.3 * jax.random.normal(ks[2], (D_CONV, Di), jnp.float32),
            b_conv=0.1 * jax.random.normal(ks[3], (1, Di), jnp.float32),
            w_xp_dt=0.1 * jax.random.normal(ks[4], (R, Di), jnp.float32),
            w_xp_b=0.1 * jax.random.normal(ks[5], (N, Di), jnp.float32),
            w_xp_c=0.1 * jax.random.normal(ks[6], (N, Di), jnp.float32),
            w_dt=(1.0 / math.sqrt(R)) * jax.random.normal(ks[8], (Di, R), jnp.float32),
            b_dt=b_dt,
            a_log=jnp.log(jnp.broadcast_to(
                jnp.arange(1, N + 1, dtype=jnp.float32)[None, :], (Di, N))),
            D=jnp.ones((Di, 1), jnp.float32),
            w_out=0.1 * jax.random.normal(ks[9], (channels, Di), jnp.float32),
        )
        params.append(p)
    return params


# -------------------------- pure-JAX reference check -------------------------

def _ref_layer(x, p):
    T = x.shape[1]
    mu = x.mean(-1, keepdims=True)
    var = ((x - mu) ** 2).mean(-1, keepdims=True)
    y = (x - mu) / jnp.sqrt(var + LN_EPS) * p["ln_w"][0] + p["ln_b"][0]

    xpart = jnp.einsum("btc,dc->btd", y, p["w_in_x"])
    z = jnp.einsum("btc,dc->btd", y, p["w_in_z"])

    xpad = jnp.pad(xpart, ((0, 0), (D_CONV - 1, 0), (0, 0)))
    acc = sum(xpad[:, k:k + T, :] * p["w_conv"][k][None, None, :]
              for k in range(D_CONV))
    u = jax.nn.silu(acc + p["b_conv"][0])

    dt_low = jnp.einsum("btd,rd->btr", u, p["w_xp_dt"])
    Bm = jnp.einsum("btd,nd->btn", u, p["w_xp_b"])
    Cm = jnp.einsum("btd,nd->btn", u, p["w_xp_c"])
    delta = jax.nn.softplus(jnp.einsum("btr,dr->btd", dt_low, p["w_dt"]) + p["b_dt"][0])

    A = -jnp.exp(p["a_log"])
    dA = jnp.exp(delta[..., None] * A[None, None])               # (B,T,Di,N)
    dBu = (delta * u)[..., None] * Bm[:, :, None, :]             # (B,T,Di,N)

    def step(h, inp):
        dA_t, dBu_t, c_t = inp
        h = dA_t * h + dBu_t
        return h, jnp.sum(h * c_t[:, None, :], axis=-1)

    Di = p["w_in_x"].shape[0]
    h0 = jnp.zeros((x.shape[0], Di, p["a_log"].shape[1]), jnp.float32)
    _, ys = jax.lax.scan(step, h0,
                         (jnp.moveaxis(dA, 1, 0), jnp.moveaxis(dBu, 1, 0),
                          jnp.moveaxis(Cm, 1, 0)))
    y_ssm = jnp.moveaxis(ys, 0, 1) + p["D"][:, 0] * u
    out = jnp.einsum("btd,cd->btc", y_ssm * jax.nn.silu(z), p["w_out"])
    return x + out


def ref_forward(x_bft, params):
    x = jnp.transpose(x_bft, (0, 2, 1))
    for p in params:
        x = _ref_layer(x, p)
    return jnp.transpose(x, (0, 2, 1))


if __name__ == "__main__":
    B, CHANNELS, T = 2, 32, 8
    LENGTH = 2   # number of (LayerNorm -> Mamba -> residual) blocks

    key = jax.random.PRNGKey(0)
    params = init_params(jax.random.fold_in(key, 17), LENGTH, CHANNELS)
    x = jax.random.normal(jax.random.fold_in(key, 3), (B, CHANNELS, T), jnp.float32)

    out = jax.block_until_ready(mamba_blocks_forward(x, params))
    ref = jax.block_until_ready(ref_forward(x, params))

    assert out.shape == (B, CHANNELS, T) and out.dtype == jnp.float32
    assert bool(jnp.all(jnp.isfinite(out)))
    max_err = float(jnp.max(jnp.abs(out - ref)))
    assert max_err < 5e-2, f"mismatch vs reference: {max_err}"
    print("KERNEL_OK")
</pallas_src>

<mosaic_0001>
module attributes {stable_mosaic.version = 11 : i64} {
  func.func @_mamba_stack_kernel(%arg0: i32, %arg1: i32, %arg2: memref<2x8x32xf32, #tpu.memory_space<vmem>>, %arg3: memref<1x32x128xbf16, #tpu.memory_space<vmem>>, %arg4: memref<1x4x64xf32, #tpu.memory_space<vmem>>, %arg5: memref<1x64x256xbf16, #tpu.memory_space<vmem>>, %arg6: memref<1x64x64xf32, #tpu.memory_space<vmem>>, %arg7: memref<1x64x32xbf16, #tpu.memory_space<vmem>>, %arg8: memref<1x8x64xf32, #tpu.memory_space<vmem>>, %arg9: memref<2x8x32xf32, #tpu.memory_space<vmem>>, %arg10: memref<2x16x64xf32, #tpu.memory_space<vmem>>, %arg11: memref<2x8x64xf32, #tpu.memory_space<vmem>>, %arg12: memref<2x8x64xf32, #tpu.memory_space<vmem>>, %arg13: memref<2x8x64xf32, #tpu.memory_space<vmem>>, %arg14: memref<2x8x64xf32, #tpu.memory_space<vmem>>, %arg15: memref<2x8x64xf32, #tpu.memory_space<vmem>>, %arg16: memref<2x8x64x64xf32, #tpu.memory_space<vmem>>, %arg17: memref<2x8x64x64xf32, #tpu.memory_space<vmem>>) attributes {dimension_semantics = [#tpu.dimension_semantics<parallel>, #tpu.dimension_semantics<arbitrary>], iteration_bounds = array<i64: 1, 2>, scalar_prefetch = 0 : i64, scratch_operands = 8 : i64, tpu.core_type = #tpu.core_type<tc>, window_params = [{transform_indices = @transform_0, window_bounds = array<i64: 2, 8, 32>}, {transform_indices = @transform_1, window_bounds = array<i64: 1, 32, 128>}, {transform_indices = @transform_2, window_bounds = array<i64: 1, 4, 64>}, {transform_indices = @transform_3, window_bounds = array<i64: 1, 64, 256>}, {transform_indices = @transform_4, window_bounds = array<i64: 1, 64, 64>}, {transform_indices = @transform_5, window_bounds = array<i64: 1, 64, 32>}, {transform_indices = @transform_6, window_bounds = array<i64: 1, 8, 64>}, {transform_indices = @transform_7, window_bounds = array<i64: 2, 8, 32>}]} {
    %c0_i32 = arith.constant 0 : i32
    %0 = arith.cmpi eq, %arg1, %c0_i32 : i32
    %1 = arith.extui %0 : i1 to i32
    %c0_i32_0 = arith.constant 0 : i32
    %2 = arith.cmpi ne, %1, %c0_i32_0 : i32
    scf.if %2 {
      %c0_174 = arith.constant 0 : index
      %c0_175 = arith.constant 0 : index
      %c0_176 = arith.constant 0 : index
      %315 = vector.load %arg2[%c0_174, %c0_175, %c0_176] : memref<2x8x32xf32, #tpu.memory_space<vmem>>, vector<2x8x32xf32>
      %c0_177 = arith.constant 0 : index
      %c0_178 = arith.constant 0 : index
      %c0_179 = arith.constant 0 : index
      %316 = vector.load %arg9[%c0_177, %c0_178, %c0_179] : memref<2x8x32xf32, #tpu.memory_space<vmem>>, vector<2x8x32xf32>
      tpu.vector_store %arg9[%c0_177, %c0_178, %c0_179], %315 {strides = array<i32>} : memref<2x8x32xf32, #tpu.memory_space<vmem>>, vector<2x8x32xf32>,
    } else {
    }
    %c0 = arith.constant 0 : index
    %c0_1 = arith.constant 0 : index
    %c0_2 = arith.constant 0 : index
    %3 = vector.load %arg9[%c0, %c0_1, %c0_2] : memref<2x8x32xf32, #tpu.memory_space<vmem>>, vector<2x8x32xf32>
    %c0_3 = arith.constant 0 : index
    %c0_4 = arith.constant 0 : index
    %c0_5 = arith.constant 0 : index
    %4 = vector.load %arg8[%c0_3, %c0_4, %c0_5] : memref<1x8x64xf32, #tpu.memory_space<vmem>>, vector<1x8x64xf32>
    %5 = vector.shape_cast %4 : vector<1x8x64xf32> to vector<8x64xf32>
    %6 = vector.extract_strided_slice %5 {offsets = [0, 0], sizes = [1, 32], strides = [1, 1]} : vector<8x64xf32> to vector<1x32xf32>
    %7 = vector.extract_strided_slice %5 {offsets = [1, 0], sizes = [1, 32], strides = [1, 1]} : vector<8x64xf32> to vector<1x32xf32>
    %8 = vector.extract_strided_slice %5 {offsets = [2, 0], sizes = [1, 64], strides = [1, 1]} : vector<8x64xf32> to vector<1x64xf32>
    %9 = vector.extract_strided_slice %5 {offsets = [3, 0], sizes = [1, 64], strides = [1, 1]} : vector<8x64xf32> to vector<1x64xf32>
    %10 = vector.extract_strided_slice %5 {offsets = [4, 0], sizes = [1, 64], strides = [1, 1]} : vector<8x64xf32> to vector<1x64xf32>
    %11 = vector.shape_cast %3 : vector<2x8x32xf32> to vector<16x32xf32>
    %cst = arith.constant dense<0.000000e+00> : vector<16xf32>
    %12 = vector.multi_reduction <add>, %11, %cst [1] : vector<16x32xf32> to vector<16xf32>
    %13 = vector.shape_cast %12 : vector<16xf32> to vector<16x1xf32>
    %cst_6 = arith.constant 3.200000e+01 : f32
    %14 = vector.broadcast %cst_6 : f32 to vector<16x1xf32>
    %15 = arith.divf %13, %14 : vector<16x1xf32>
    %16 = vector.broadcast %15 : vector<16x1xf32> to vector<16x32xf32>
    %17 = arith.subf %11, %16 : vector<16x32xf32>
    %18 = arith.mulf %17, %17 : vector<16x32xf32>
    %cst_7 = arith.constant dense<0.000000e+00> : vector<16xf32>
    %19 = vector.multi_reduction <add>, %18, %cst_7 [1] : vector<16x32xf32> to vector<16xf32>
    %20 = vector.shape_cast %19 : vector<16xf32> to vector<16x1xf32>
    %cst_8 = arith.constant 3.200000e+01 : f32
    %21 = vector.broadcast %cst_8 : f32 to vector<16x1xf32>
    %22 = arith.divf %20, %21 : vector<16x1xf32>
    %cst_9 = arith.constant 9.99999974E-6 : f32
    %23 = vector.broadcast %cst_9 : f32 to vector<16x1xf32>
    %24 = arith.addf %22, %23 : vector<16x1xf32>
    %25 = math.rsqrt %24 : vector<16x1xf32>
    %26 = vector.broadcast %25 : vector<16x1xf32> to vector<16x32xf32>
    %27 = arith.mulf %17, %26 : vector<16x32xf32>
    %28 = vector.broadcast %6 : vector<1x32xf32> to vector<16x32xf32>
    %29 = arith.mulf %27, %28 : vector<16x32xf32>
    %30 = vector.broadcast %7 : vector<1x32xf32> to vector<16x32xf32>
    %31 = arith.addf %29, %30 : vector<16x32xf32>
    %32 = arith.truncf %31 : vector<16x32xf32> to vector<16x32xbf16>
    %c0_10 = arith.constant 0 : index
    %c0_11 = arith.constant 0 : index
    %c0_12 = arith.constant 0 : index
    %33 = vector.load %arg3[%c0_10, %c0_11, %c0_12] : memref<1x32x128xbf16, #tpu.memory_space<vmem>>, vector<1x32x128xbf16>
    %34 = vector.shape_cast %33 : vector<1x32x128xbf16> to vector<32x128xbf16>
    %cst_13 = arith.constant dense<0.000000e+00> : vector<16x128xf32>
    %35 = tpu.matmul %32, %34, %cst_13 {dimension_numbers = #tpu.dot_dimension_numbers<[1], [0], [0], [1], [0, 0, 1, 1], [], []>} : vector<16x32xbf16>, vector<32x128xbf16>, vector<16x128xf32> -> vector<16x128xf32>
    %36 = vector.extract_strided_slice %35 {offsets = [0, 0], sizes = [16, 64], strides = [1, 1]} : vector<16x128xf32> to vector<16x64xf32>
    %37 = vector.shape_cast %36 : vector<16x64xf32> to vector<2x8x64xf32>
    %38 = vector.extract_strided_slice %35 {offsets = [0, 64], sizes = [16, 64], strides = [1, 1]} : vector<16x128xf32> to vector<16x64xf32>
    %c0_14 = arith.constant 0 : index
    %c0_15 = arith.constant 0 : index
    %c0_16 = arith.constant 0 : index
    %39 = vector.load %arg4[%c0_14, %c0_15, %c0_16] : memref<1x4x64xf32, #tpu.memory_space<vmem>>, vector<1x4x64xf32>
    %40 = vector.shape_cast %39 : vector<1x4x64xf32> to vector<4x64xf32>
    %cst_17 = arith.constant 0.000000e+00 : f32
    %41 = vector.broadcast %cst_17 : f32 to vector<2x8x64xf32>
    %c0_18 = arith.constant 0 : index
    %c0_19 = arith.constant 0 : index
    %c0_20 = arith.constant 0 : index
    %42 = vector.load %arg10[%c0_18, %c0_19, %c0_20] : memref<2x16x64xf32, #tpu.memory_space<vmem>>, vector<2x8x64xf32>
    tpu.vector_store %arg10[%c0_18, %c0_19, %c0_20], %41 {strides = array<i32>} : memref<2x16x64xf32, #tpu.memory_space<vmem>>, vector<2x8x64xf32>,
    %c0_21 = arith.constant 0 : index
    %c8 = arith.constant 8 : index
    %c0_22 = arith.constant 0 : index
    %43 = vector.load %arg10[%c0_21, %c8, %c0_22] : memref<2x16x64xf32, #tpu.memory_space<vmem>>, vector<2x8x64xf32>
    tpu.vector_store %arg10[%c0_21, %c8, %c0_22], %37 {strides = array<i32>} : memref<2x16x64xf32, #tpu.memory_space<vmem>>, vector<2x8x64xf32>,
    %44 = vector.extract_strided_slice %40 {offsets = [3, 0], sizes = [1, 64], strides = [1, 1]} : vector<4x64xf32> to vector<1x64xf32>
    %45 = vector.shape_cast %44 : vector<1x64xf32> to vector<1x1x64xf32>
    %46 = vector.broadcast %45 : vector<1x1x64xf32> to vector<2x8x64xf32>
    %47 = arith.mulf %37, %46 : vector<2x8x64xf32>
    %c0_23 = arith.constant 0 : index
    %c5 = arith.constant 5 : index
    %c0_24 = arith.constant 0 : index
    %48 = vector.load %arg10[%c0_23, %c5, %c0_24] : memref<2x16x64xf32, #tpu.memory_space<vmem>>, vector<2x8x64xf32>
    %49 = vector.extract_strided_slice %40 {offsets = [0, 0], sizes = [1, 64], strides = [1, 1]} : vector<4x64xf32> to vector<1x64xf32>
    %50 = vector.shape_cast %49 : vector<1x64xf32> to vector<1x1x64xf32>
    %51 = vector.broadcast %50 : vector<1x1x64xf32> to vector<2x8x64xf32>
    %52 = arith.mulf %48, %51 : vector<2x8x64xf32>
    %53 = arith.addf %47, %52 : vector<2x8x64xf32>
    %c0_25 = arith.constant 0 : index
    %c6 = arith.constant 6 : index
    %c0_26 = arith.constant 0 : index
    %54 = vector.load %arg10[%c0_25, %c6, %c0_26] : memref<2x16x64xf32, #tpu.memory_space<vmem>>, vector<2x8x64xf32>
    %55 = vector.extract_strided_slice %40 {offsets = [1, 0], sizes = [1, 64], strides = [1, 1]} : vector<4x64xf32> to vector<1x64xf32>
    %56 = vector.shape_cast %55 : vector<1x64xf32> to vector<1x1x64xf32>
    %57 = vector.broadcast %56 : vector<1x1x64xf32> to vector<2x8x64xf32>
    %58 = arith.mulf %54, %57 : vector<2x8x64xf32>
    %59 = arith.addf %53, %58 : vector<2x8x64xf32>
    %c0_27 = arith.constant 0 : index
    %c7 = arith.constant 7 : index
    %c0_28 = arith.constant 0 : index
    %60 = vector.load %arg10[%c0_27, %c7, %c0_28] : memref<2x16x64xf32, #tpu.memory_space<vmem>>, vector<2x8x64xf32>
    %61 = vector.extract_strided_slice %40 {offsets = [2, 0], sizes = [1, 64], strides = [1, 1]} : vector<4x64xf32> to vector<1x64xf32>
    %62 = vector.shape_cast %61 : vector<1x64xf32> to vector<1x1x64xf32>
    %63 = vector.broadcast %62 : vector<1x1x64xf32> to vector<2x8x64xf32>
    %64 = arith.mulf %60, %63 : vector<2x8x64xf32>
    %65 = arith.addf %59, %64 : vector<2x8x64xf32>
    %66 = vector.shape_cast %8 : vector<1x64xf32> to vector<1x1x64xf32>
    %67 = vector.broadcast %66 : vector<1x1x64xf32> to vector<2x8x64xf32>
    %68 = arith.addf %65, %67 : vector<2x8x64xf32>
    %cst_29 = arith.constant 5.000000e-01 : f32
    %69 = vector.broadcast %cst_29 : f32 to vector<2x8x64xf32>
    %70 = arith.mulf %69, %68 : vector<2x8x64xf32>
    %71 = math.tanh %70 : vector<2x8x64xf32>
    %cst_30 = arith.constant 5.000000e-01 : f32
    %72 = vector.broadcast %cst_30 : f32 to vector<2x8x64xf32>
    %73 = arith.mulf %72, %71 : vector<2x8x64xf32>
    %cst_31 = arith.constant 5.000000e-01 : f32
    %74 = vector.broadcast %cst_31 : f32 to vector<2x8x64xf32>
    %75 = arith.addf %73, %74 : vector<2x8x64xf32>
    %76 = arith.mulf %68, %75 : vector<2x8x64xf32>
    %77 = vector.shape_cast %76 : vector<2x8x64xf32> to vector<16x64xf32>
    %78 = arith.truncf %77 : vector<16x64xf32> to vector<16x64xbf16>
    %c0_32 = arith.constant 0 : index
    %c0_33 = arith.constant 0 : index
    %c0_34 = arith.constant 0 : index
    %79 = vector.load %arg5[%c0_32, %c0_33, %c0_34] : memref<1x64x256xbf16, #tpu.memory_space<vmem>>, vector<1x64x256xbf16>
    %80 = vector.shape_cast %79 : vector<1x64x256xbf16> to vector<64x256xbf16>
    %cst_35 = arith.constant dense<0.000000e+00> : vector<16x256xf32>
    %81 = tpu.matmul %78, %80, %cst_35 {dimension_numbers = #tpu.dot_dimension_numbers<[1], [0], [0], [1], [0, 0, 1, 1], [], []>} : vector<16x64xbf16>, vector<64x256xbf16>, vector<16x256xf32> -> vector<16x256xf32>
    %82 = vector.extract_strided_slice %81 {offsets = [0, 0], sizes = [16, 64], strides = [1, 1]} : vector<16x256xf32> to vector<16x64xf32>
    %83 = vector.shape_cast %82 : vector<16x64xf32> to vector<2x8x64xf32>
    %c0_36 = arith.constant 0 : index
    %c0_37 = arith.constant 0 : index
    %c0_38 = arith.constant 0 : index
    %84 = vector.load %arg13[%c0_36, %c0_37, %c0_38] : memref<2x8x64xf32, #tpu.memory_space<vmem>>, vector<2x8x64xf32>
    tpu.vector_store %arg13[%c0_36, %c0_37, %c0_38], %83 {strides = array<i32>} : memref<2x8x64xf32, #tpu.memory_space<vmem>>, vector<2x8x64xf32>,
    %85 = vector.extract_strided_slice %81 {offsets = [0, 64], sizes = [16, 64], strides = [1, 1]} : vector<16x256xf32> to vector<16x64xf32>
    %86 = vector.shape_cast %85 : vector<16x64xf32> to vector<2x8x64xf32>
    %c0_39 = arith.constant 0 : index
    %c0_40 = arith.constant 0 : index
    %c0_41 = arith.constant 0 : index
    %87 = vector.load %arg14[%c0_39, %c0_40, %c0_41] : memref<2x8x64xf32, #tpu.memory_space<vmem>>, vector<2x8x64xf32>
    tpu.vector_store %arg14[%c0_39, %c0_40, %c0_41], %86 {strides = array<i32>} : memref<2x8x64xf32, #tpu.memory_space<vmem>>, vector<2x8x64xf32>,
    %88 = vector.extract_strided_slice %81 {offsets = [0, 128], sizes = [16, 64], strides = [1, 1]} : vector<16x256xf32> to vector<16x64xf32>
    %89 = vector.broadcast %9 : vector<1x64xf32> to vector<16x64xf32>
    %90 = arith.addf %88, %89 : vector<16x64xf32>
    %cst_42 = arith.constant 2.000000e+01 : f32
    %91 = vector.broadcast %cst_42 : f32 to vector<16x64xf32>
    %92 = arith.minimumf %90, %91 : vector<16x64xf32>
    %cst_43 = arith.constant 2.000000e+01 : f32
    %93 = vector.broadcast %cst_43 : f32 to vector<16x64xf32>
    %94 = arith.cmpf ogt, %90, %93 : vector<16x64xf32>
    %95 = math.exp %92 : vector<16x64xf32>
    %96 = math.log1p %95 : vector<16x64xf32>
    %97 = arith.select %94, %90, %96 : vector<16x64xi1>, vector<16x64xf32>
    %98 = vector.shape_cast %97 : vector<16x64xf32> to vector<2x8x64xf32>
    %c0_44 = arith.constant 0 : index
    %c0_45 = arith.constant 0 : index
    %c0_46 = arith.constant 0 : index
    %99 = vector.load %arg11[%c0_44, %c0_45, %c0_46] : memref<2x8x64xf32, #tpu.memory_space<vmem>>, vector<2x8x64xf32>
    tpu.vector_store %arg11[%c0_44, %c0_45, %c0_46], %98 {strides = array<i32>} : memref<2x8x64xf32, #tpu.memory_space<vmem>>, vector<2x8x64xf32>,
    %100 = arith.mulf %98, %76 : vector<2x8x64xf32>
    %c0_47 = arith.constant 0 : index
    %c0_48 = arith.constant 0 : index
    %c0_49 = arith.constant 0 : index
    %101 = vector.load %arg12[%c0_47, %c0_48, %c0_49] : memref<2x8x64xf32, #tpu.memory_space<vmem>>, vector<2x8x64xf32>
    tpu.vector_store %arg12[%c0_47, %c0_48, %c0_49], %100 {strides = array<i32>} : memref<2x8x64xf32, #tpu.memory_space<vmem>>, vector<2x8x64xf32>,
    %c0_50 = arith.constant 0 : index
    %c0_51 = arith.constant 0 : index
    %c0_52 = arith.constant 0 : index
    %102 = vector.load %arg6[%c0_50, %c0_51, %c0_52] : memref<1x64x64xf32, #tpu.memory_space<vmem>>, vector<1x64x64xf32>
    %103 = vector.shape_cast %102 : vector<1x64x64xf32> to vector<64x64xf32>
    %104 = math.exp %103 : vector<64x64xf32>
    %cst_53 = arith.constant 0.000000e+00 : f32
    %105 = vector.broadcast %cst_53 : f32 to vector<64x64xf32>
    %106 = arith.subf %105, %104 : vector<64x64xf32>
    %c0_i32_54 = arith.constant 0 : i32
    %c8_i32 = arith.constant 8 : i32
    %107 = arith.muli %c0_i32_54, %c8_i32 : i32
    %c8_i32_55 = arith.constant 8 : i32
    %108 = arith.muli %c0_i32_54, %c8_i32_55 : i32
    %109 = tpu.assume_multiple %107, 8 : i32
    %110 = tpu.assume_multiple %108, 8 : i32
    %c0_56 = arith.constant 0 : index
    %111 = arith.index_cast %109 : i32 to index
    %c0_57 = arith.constant 0 : index
    %112 = vector.load %arg11[%c0_56, %111, %c0_57] : memref<2x8x64xf32, #tpu.memory_space<vmem>>, vector<2x8x64xf32>
    %c0_58 = arith.constant 0 : index
    %113 = arith.index_cast %109 : i32 to index
    %c0_59 = arith.constant 0 : index
    %114 = vector.load %arg12[%c0_58, %113, %c0_59] : memref<2x8x64xf32, #tpu.memory_space<vmem>>, vector<2x8x64xf32>
    %c0_60 = arith.constant 0 : index
    %115 = arith.index_cast %109 : i32 to index
    %c0_61 = arith.constant 0 : index
    %116 = vector.load %arg13[%c0_60, %115, %c0_61] : memref<2x8x64xf32, #tpu.memory_space<vmem>>, vector<2x8x64xf32>
    %117 = vector.shape_cast %112 : vector<2x8x64xf32> to vector<2x8x1x64xf32>
    %118 = vector.shape_cast %106 : vector<64x64xf32> to vector<1x1x64x64xf32>
    %119 = vector.broadcast %117 : vector<2x8x1x64xf32> to vector<2x8x64x64xf32>
    %120 = vector.broadcast %118 : vector<1x1x64x64xf32> to vector<2x8x64x64xf32>
    %121 = arith.mulf %119, %120 : vector<2x8x64x64xf32>
    %122 = math.exp %121 : vector<2x8x64x64xf32>
    %c0_62 = arith.constant 0 : index
    %123 = arith.index_cast %110 : i32 to index
    %c0_63 = arith.constant 0 : index
    %c0_64 = arith.constant 0 : index
    %124 = vector.load %arg16[%c0_62, %123, %c0_63, %c0_64] : memref<2x8x64x64xf32, #tpu.memory_space<vmem>>, vector<2x8x64x64xf32>
    tpu.vector_store %arg16[%c0_62, %123, %c0_63, %c0_64], %122 {strides = array<i32>} : memref<2x8x64x64xf32, #tpu.memory_space<vmem>>, vector<2x8x64x64xf32>,
    %125 = vector.shape_cast %114 : vector<2x8x64xf32> to vector<2x8x1x64xf32>
    %126 = vector.shape_cast %116 : vector<2x8x64xf32> to vector<2x8x64x1xf32>
    %127 = vector.broadcast %125 : vector<2x8x1x64xf32> to vector<2x8x64x64xf32>
    %128 = vector.broadcast %126 : vector<2x8x64x1xf32> to vector<2x8x64x64xf32>
    %129 = arith.mulf %127, %128 : vector<2x8x64x64xf32>
    %c0_65 = arith.constant 0 : index
    %130 = arith.index_cast %110 : i32 to index
    %c0_66 = arith.constant 0 : index
    %c0_67 = arith.constant 0 : index
    %131 = vector.load %arg17[%c0_65, %130, %c0_66, %c0_67] : memref<2x8x64x64xf32, #tpu.memory_space<vmem>>, vector<2x8x64x64xf32>
    tpu.vector_store %arg17[%c0_65, %130, %c0_66, %c0_67], %129 {strides = array<i32>} : memref<2x8x64x64xf32, #tpu.memory_space<vmem>>, vector<2x8x64x64xf32>,
    %c1_i32 = arith.constant 1 : i32
    %cst_68 = arith.constant 0.000000e+00 : f32
    %132 = vector.broadcast %cst_68 : f32 to vector<2x64x64xf32>
    %c0_i32_69 = arith.constant 0 : i32
    %c8_i32_70 = arith.constant 8 : i32
    %133 = arith.muli %c0_i32_69, %c8_i32_70 : i32
    %c0_i32_71 = arith.constant 0 : i32
    %c8_i32_72 = arith.constant 8 : i32
    %134 = arith.muli %c0_i32_71, %c8_i32_72 : i32
    %135 = arith.addi %133, %134 : i32
    %136 = tpu.assume_multiple %135, 8 : i32
    %c0_73 = arith.constant 0 : index
    %137 = arith.index_cast %136 : i32 to index
    %c0_74 = arith.constant 0 : index
    %138 = vector.load %arg14[%c0_73, %137, %c0_74] : memref<2x8x64xf32, #tpu.memory_space<vmem>>, vector<2x8x64xf32>
    %c0_i32_75 = arith.constant 0 : i32
    %139 = arith.addi %c0_i32_75, %134 : i32
    %c0_i32_76 = arith.constant 0 : i32
    %140 = arith.addi %139, %c0_i32_76 : i32
    %c0_77 = arith.constant 0 : index
    %141 = arith.index_cast %140 : i32 to index
    %c0_78 = arith.constant 0 : index
    %c0_79 = arith.constant 0 : index
    %142 = vector.load %arg16[%c0_77, %141, %c0_78, %c0_79] : memref<2x8x64x64xf32, #tpu.memory_space<vmem>>, vector<2x1x64x64xf32>
    %143 = vector.shape_cast %142 : vector<2x1x64x64xf32> to vector<2x64x64xf32>
    %c0_i32_80 = arith.constant 0 : i32
    %144 = arith.addi %c0_i32_80, %134 : i32
    %c0_i32_81 = arith.constant 0 : i32
    %145 = arith.addi %144, %c0_i32_81 : i32
    %c0_82 = arith.constant 0 : index
    %146 = arith.index_cast %145 : i32 to index
    %c0_83 = arith.constant 0 : index
    %c0_84 = arith.constant 0 : index
    %147 = vector.load %arg17[%c0_82, %146, %c0_83, %c0_84] : memref<2x8x64x64xf32, #tpu.memory_space<vmem>>, vector<2x1x64x64xf32>
    %148 = vector.shape_cast %147 : vector<2x1x64x64xf32> to vector<2x64x64xf32>
    %149 = arith.mulf %143, %132 : vector<2x64x64xf32>
    %150 = arith.addf %149, %148 : vector<2x64x64xf32>
    %151 = vector.extract_strided_slice %138 {offsets = [0, 0, 0], sizes = [2, 1, 64], strides = [1, 1, 1]} : vector<2x8x64xf32> to vector<2x1x64xf32>
    %152 = vector.shape_cast %151 : vector<2x1x64xf32> to vector<2x64xf32>
    %153 = vector.shape_cast %152 : vector<2x64xf32> to vector<2x64x1xf32>
    %154 = vector.broadcast %153 : vector<2x64x1xf32> to vector<2x64x64xf32>
    %155 = arith.mulf %150, %154 : vector<2x64x64xf32>
    %cst_85 = arith.constant dense<0.000000e+00> : vector<2x64xf32>
    %156 = vector.multi_reduction <add>, %155, %cst_85 [1] : vector<2x64x64xf32> to vector<2x64xf32>
    %c0_i32_86 = arith.constant 0 : i32
    %157 = arith.addi %c0_i32_86, %134 : i32
    %c1_i32_87 = arith.constant 1 : i32
    %158 = arith.addi %157, %c1_i32_87 : i32
    %c0_88 = arith.constant 0 : index
    %159 = arith.index_cast %158 : i32 to index
    %c0_89 = arith.constant 0 : index
    %c0_90 = arith.constant 0 : index
    %160 = vector.load %arg16[%c0_88, %159, %c0_89, %c0_90] : memref<2x8x64x64xf32, #tpu.memory_space<vmem>>, vector<2x1x64x64xf32>
    %161 = vector.shape_cast %160 : vector<2x1x64x64xf32> to vector<2x64x64xf32>
    %c0_i32_91 = arith.constant 0 : i32
    %162 = arith.addi %c0_i32_91, %134 : i32
    %c1_i32_92 = arith.constant 1 : i32
    %163 = arith.addi %162, %c1_i32_92 : i32
    %c0_93 = arith.constant 0 : index
    %164 = arith.index_cast %163 : i32 to index
    %c0_94 = arith.constant 0 : index
    %c0_95 = arith.constant 0 : index
    %165 = vector.load %arg17[%c0_93, %164, %c0_94, %c0_95] : memref<2x8x64x64xf32, #tpu.memory_space<vmem>>, vector<2x1x64x64xf32>
    %166 = vector.shape_cast %165 : vector<2x1x64x64xf32> to vector<2x64x64xf32>
    %167 = arith.mulf %161, %150 : vector<2x64x64xf32>
    %168 = arith.addf %167, %166 : vector<2x64x64xf32>
    %169 = vector.extract_strided_slice %138 {offsets = [0, 1, 0], sizes = [2, 1, 64], strides = [1, 1, 1]} : vector<2x8x64xf32> to vector<2x1x64xf32>
    %170 = vector.shape_cast %169 : vector<2x1x64xf32> to vector<2x64xf32>
    %171 = vector.shape_cast %170 : vector<2x64xf32> to vector<2x64x1xf32>
    %172 = vector.broadcast %171 : vector<2x64x1xf32> to vector<2x64x64xf32>
    %173 = arith.mulf %168, %172 : vector<2x64x64xf32>
    %cst_96 = arith.constant dense<0.000000e+00> : vector<2x64xf32>
    %174 = vector.multi_reduction <add>, %173, %cst_96 [1] : vector<2x64x64xf32> to vector<2x64xf32>
    %c0_i32_97 = arith.constant 0 : i32
    %175 = arith.addi %c0_i32_97, %134 : i32
    %c2_i32 = arith.constant 2 : i32
    %176 = arith.addi %175, %c2_i32 : i32
    %c0_98 = arith.constant 0 : index
    %177 = arith.index_cast %176 : i32 to index
    %c0_99 = arith.constant 0 : index
    %c0_100 = arith.constant 0 : index
    %178 = vector.load %arg16[%c0_98, %177, %c0_99, %c0_100] : memref<2x8x64x64xf32, #tpu.memory_space<vmem>>, vector<2x1x64x64xf32>
    %179 = vector.shape_cast %178 : vector<2x1x64x64xf32> to vector<2x64x64xf32>
    %c0_i32_101 = arith.constant 0 : i32
    %180 = arith.addi %c0_i32_101, %134 : i32
    %c2_i32_102 = arith.constant 2 : i32
    %181 = arith.addi %180, %c2_i32_102 : i32
    %c0_103 = arith.constant 0 : index
    %182 = arith.index_cast %181 : i32 to index
    %c0_104 = arith.constant 0 : index
    %c0_105 = arith.constant 0 : index
    %183 = vector.load %arg17[%c0_103, %182, %c0_104, %c0_105] : memref<2x8x64x64xf32, #tpu.memory_space<vmem>>, vector<2x1x64x64xf32>
    %184 = vector.shape_cast %183 : vector<2x1x64x64xf32> to vector<2x64x64xf32>
    %185 = arith.mulf %179, %168 : vector<2x64x64xf32>
    %186 = arith.addf %185, %184 : vector<2x64x64xf32>
    %187 = vector.extract_strided_slice %138 {offsets = [0, 2, 0], sizes = [2, 1, 64], strides = [1, 1, 1]} : vector<2x8x64xf32> to vector<2x1x64xf32>
    %188 = vector.shape_cast %187 : vector<2x1x64xf32> to vector<2x64xf32>
    %189 = vector.shape_cast %188 : vector<2x64xf32> to vector<2x64x1xf32>
    %190 = vector.broadcast %189 : vector<2x64x1xf32> to vector<2x64x64xf32>
    %191 = arith.mulf %186, %190 : vector<2x64x64xf32>
    %cst_106 = arith.constant dense<0.000000e+00> : vector<2x64xf32>
    %192 = vector.multi_reduction <add>, %191, %cst_106 [1] : vector<2x64x64xf32> to vector<2x64xf32>
    %c0_i32_107 = arith.constant 0 : i32
    %193 = arith.addi %c0_i32_107, %134 : i32
    %c3_i32 = arith.constant 3 : i32
    %194 = arith.addi %193, %c3_i32 : i32
    %c0_108 = arith.constant 0 : index
    %195 = arith.index_cast %194 : i32 to index
    %c0_109 = arith.constant 0 : index
    %c0_110 = arith.constant 0 : index
    %196 = vector.load %arg16[%c0_108, %195, %c0_109, %c0_110] : memref<2x8x64x64xf32, #tpu.memory_space<vmem>>, vector<2x1x64x64xf32>
    %197 = vector.shape_cast %196 : vector<2x1x64x64xf32> to vector<2x64x64xf32>
    %c0_i32_111 = arith.constant 0 : i32
    %198 = arith.addi %c0_i32_111, %134 : i32
    %c3_i32_112 = arith.constant 3 : i32
    %199 = arith.addi %198, %c3_i32_112 : i32
    %c0_113 = arith.constant 0 : index
    %200 = arith.index_cast %199 : i32 to index
    %c0_114 = arith.constant 0 : index
    %c0_115 = arith.constant 0 : index
    %201 = vector.load %arg17[%c0_113, %200, %c0_114, %c0_115] : memref<2x8x64x64xf32, #tpu.memory_space<vmem>>, vector<2x1x64x64xf32>
    %202 = vector.shape_cast %201 : vector<2x1x64x64xf32> to vector<2x64x64xf32>
    %203 = arith.mulf %197, %186 : vector<2x64x64xf32>
    %204 = arith.addf %203, %202 : vector<2x64x64xf32>
    %205 = vector.extract_strided_slice %138 {offsets = [0, 3, 0], sizes = [2, 1, 64], strides = [1, 1, 1]} : vector<2x8x64xf32> to vector<2x1x64xf32>
    %206 = vector.shape_cast %205 : vector<2x1x64xf32> to vector<2x64xf32>
    %207 = vector.shape_cast %206 : vector<2x64xf32> to vector<2x64x1xf32>
    %208 = vector.broadcast %207 : vector<2x64x1xf32> to vector<2x64x64xf32>
    %209 = arith.mulf %204, %208 : vector<2x64x64xf32>
    %cst_116 = arith.constant dense<0.000000e+00> : vector<2x64xf32>
    %210 = vector.multi_reduction <add>, %209, %cst_116 [1] : vector<2x64x64xf32> to vector<2x64xf32>
    %c0_i32_117 = arith.constant 0 : i32
    %211 = arith.addi %c0_i32_117, %134 : i32
    %c4_i32 = arith.constant 4 : i32
    %212 = arith.addi %211, %c4_i32 : i32
    %c0_118 = arith.constant 0 : index
    %213 = arith.index_cast %212 : i32 to index
    %c0_119 = arith.constant 0 : index
    %c0_120 = arith.constant 0 : index
    %214 = vector.load %arg16[%c0_118, %213, %c0_119, %c0_120] : memref<2x8x64x64xf32, #tpu.memory_space<vmem>>, vector<2x1x64x64xf32>
    %215 = vector.shape_cast %214 : vector<2x1x64x64xf32> to vector<2x64x64xf32>
    %c0_i32_121 = arith.constant 0 : i32
    %216 = arith.addi %c0_i32_121, %134 : i32
    %c4_i32_122 = arith.constant 4 : i32
    %217 = arith.addi %216, %c4_i32_122 : i32
    %c0_123 = arith.constant 0 : index
    %218 = arith.index_cast %217 : i32 to index
    %c0_124 = arith.constant 0 : index
    %c0_125 = arith.constant 0 : index
    %219 = vector.load %arg17[%c0_123, %218, %c0_124, %c0_125] : memref<2x8x64x64xf32, #tpu.memory_space<vmem>>, vector<2x1x64x64xf32>
    %220 = vector.shape_cast %219 : vector<2x1x64x64xf32> to vector<2x64x64xf32>
    %221 = arith.mulf %215, %204 : vector<2x64x64xf32>
    %222 = arith.addf %221, %220 : vector<2x64x64xf32>
    %223 = vector.extract_strided_slice %138 {offsets = [0, 4, 0], sizes = [2, 1, 64], strides = [1, 1, 1]} : vector<2x8x64xf32> to vector<2x1x64xf32>
    %224 = vector.shape_cast %223 : vector<2x1x64xf32> to vector<2x64xf32>
    %225 = vector.shape_cast %224 : vector<2x64xf32> to vector<2x64x1xf32>
    %226 = vector.broadcast %225 : vector<2x64x1xf32> to vector<2x64x64xf32>
    %227 = arith.mulf %222, %226 : vector<2x64x64xf32>
    %cst_126 = arith.constant dense<0.000000e+00> : vector<2x64xf32>
    %228 = vector.multi_reduction <add>, %227, %cst_126 [1] : vector<2x64x64xf32> to vector<2x64xf32>
    %c0_i32_127 = arith.constant 0 : i32
    %229 = arith.addi %c0_i32_127, %134 : i32
    %c5_i32 = arith.constant 5 : i32
    %230 = arith.addi %229, %c5_i32 : i32
    %c0_128 = arith.constant 0 : index
    %231 = arith.index_cast %230 : i32 to index
    %c0_129 = arith.constant 0 : index
    %c0_130 = arith.constant 0 : index
    %232 = vector.load %arg16[%c0_128, %231, %c0_129, %c0_130] : memref<2x8x64x64xf32, #tpu.memory_space<vmem>>, vector<2x1x64x64xf32>
    %233 = vector.shape_cast %232 : vector<2x1x64x64xf32> to vector<2x64x64xf32>
    %c0_i32_131 = arith.constant 0 : i32
    %234 = arith.addi %c0_i32_131, %134 : i32
    %c5_i32_132 = arith.constant 5 : i32
    %235 = arith.addi %234, %c5_i32_132 : i32
    %c0_133 = arith.constant 0 : index
    %236 = arith.index_cast %235 : i32 to index
    %c0_134 = arith.constant 0 : index
    %c0_135 = arith.constant 0 : index
    %237 = vector.load %arg17[%c0_133, %236, %c0_134, %c0_135] : memref<2x8x64x64xf32, #tpu.memory_space<vmem>>, vector<2x1x64x64xf32>
    %238 = vector.shape_cast %237 : vector<2x1x64x64xf32> to vector<2x64x64xf32>
    %239 = arith.mulf %233, %222 : vector<2x64x64xf32>
    %240 = arith.addf %239, %238 : vector<2x64x64xf32>
    %241 = vector.extract_strided_slice %138 {offsets = [0, 5, 0], sizes = [2, 1, 64], strides = [1, 1, 1]} : vector<2x8x64xf32> to vector<2x1x64xf32>
    %242 = vector.shape_cast %241 : vector<2x1x64xf32> to vector<2x64xf32>
    %243 = vector.shape_cast %242 : vector<2x64xf32> to vector<2x64x1xf32>
    %244 = vector.broadcast %243 : vector<2x64x1xf32> to vector<2x64x64xf32>
    %245 = arith.mulf %240, %244 : vector<2x64x64xf32>
    %cst_136 = arith.constant dense<0.000000e+00> : vector<2x64xf32>
    %246 = vector.multi_reduction <add>, %245, %cst_136 [1] : vector<2x64x64xf32> to vector<2x64xf32>
    %c0_i32_137 = arith.constant 0 : i32
    %247 = arith.addi %c0_i32_137, %134 : i32
    %c6_i32 = arith.constant 6 : i32
    %248 = arith.addi %247, %c6_i32 : i32
    %c0_138 = arith.constant 0 : index
    %249 = arith.index_cast %248 : i32 to index
    %c0_139 = arith.constant 0 : index
    %c0_140 = arith.constant 0 : index
    %250 = vector.load %arg16[%c0_138, %249, %c0_139, %c0_140] : memref<2x8x64x64xf32, #tpu.memory_space<vmem>>, vector<2x1x64x64xf32>
    %251 = vector.shape_cast %250 : vector<2x1x64x64xf32> to vector<2x64x64xf32>
    %c0_i32_141 = arith.constant 0 : i32
    %252 = arith.addi %c0_i32_141, %134 : i32
    %c6_i32_142 = arith.constant 6 : i32
    %253 = arith.addi %252, %c6_i32_142 : i32
    %c0_143 = arith.constant 0 : index
    %254 = arith.index_cast %253 : i32 to index
    %c0_144 = arith.constant 0 : index
    %c0_145 = arith.constant 0 : index
    %255 = vector.load %arg17[%c0_143, %254, %c0_144, %c0_145] : memref<2x8x64x64xf32, #tpu.memory_space<vmem>>, vector<2x1x64x64xf32>
    %256 = vector.shape_cast %255 : vector<2x1x64x64xf32> to vector<2x64x64xf32>
    %257 = arith.mulf %251, %240 : vector<2x64x64xf32>
    %258 = arith.addf %257, %256 : vector<2x64x64xf32>
    %259 = vector.extract_strided_slice %138 {offsets = [0, 6, 0], sizes = [2, 1, 64], strides = [1, 1, 1]} : vector<2x8x64xf32> to vector<2x1x64xf32>
    %260 = vector.shape_cast %259 : vector<2x1x64xf32> to vector<2x64xf32>
    %261 = vector.shape_cast %260 : vector<2x64xf32> to vector<2x64x1xf32>
    %262 = vector.broadcast %261 : vector<2x64x1xf32> to vector<2x64x64xf32>
    %263 = arith.mulf %258, %262 : vector<2x64x64xf32>
    %cst_146 = arith.constant dense<0.000000e+00> : vector<2x64xf32>
    %264 = vector.multi_reduction <add>, %263, %cst_146 [1] : vector<2x64x64xf32> to vector<2x64xf32>
    %c0_i32_147 = arith.constant 0 : i32
    %265 = arith.addi %c0_i32_147, %134 : i32
    %c7_i32 = arith.constant 7 : i32
    %266 = arith.addi %265, %c7_i32 : i32
    %c0_148 = arith.constant 0 : index
    %267 = arith.index_cast %266 : i32 to index
    %c0_149 = arith.constant 0 : index
    %c0_150 = arith.constant 0 : index
    %268 = vector.load %arg16[%c0_148, %267, %c0_149, %c0_150] : memref<2x8x64x64xf32, #tpu.memory_space<vmem>>, vector<2x1x64x64xf32>
    %269 = vector.shape_cast %268 : vector<2x1x64x64xf32> to vector<2x64x64xf32>
    %c0_i32_151 = arith.constant 0 : i32
    %270 = arith.addi %c0_i32_151, %134 : i32
    %c7_i32_152 = arith.constant 7 : i32
    %271 = arith.addi %270, %c7_i32_152 : i32
    %c0_153 = arith.constant 0 : index
    %272 = arith.index_cast %271 : i32 to index
    %c0_154 = arith.constant 0 : index
    %c0_155 = arith.constant 0 : index
    %273 = vector.load %arg17[%c0_153, %272, %c0_154, %c0_155] : memref<2x8x64x64xf32, #tpu.memory_space<vmem>>, vector<2x1x64x64xf32>
    %274 = vector.shape_cast %273 : vector<2x1x64x64xf32> to vector<2x64x64xf32>
    %275 = arith.mulf %269, %258 : vector<2x64x64xf32>
    %276 = arith.addf %275, %274 : vector<2x64x64xf32>
    %277 = vector.extract_strided_slice %138 {offsets = [0, 7, 0], sizes = [2, 1, 64], strides = [1, 1, 1]} : vector<2x8x64xf32> to vector<2x1x64xf32>
    %278 = vector.shape_cast %277 : vector<2x1x64xf32> to vector<2x64xf32>
    %279 = vector.shape_cast %278 : vector<2x64xf32> to vector<2x64x1xf32>
    %280 = vector.broadcast %279 : vector<2x64x1xf32> to vector<2x64x64xf32>
    %281 = arith.mulf %276, %280 : vector<2x64x64xf32>
    %cst_156 = arith.constant dense<0.000000e+00> : vector<2x64xf32>
    %282 = vector.multi_reduction <add>, %281, %cst_156 [1] : vector<2x64x64xf32> to vector<2x64xf32>
    %283 = vector.shape_cast %156 : vector<2x64xf32> to vector<2x1x64xf32>
    %284 = vector.shape_cast %174 : vector<2x64xf32> to vector<2x1x64xf32>
    %285 = vector.shape_cast %192 : vector<2x64xf32> to vector<2x1x64xf32>
    %286 = vector.shape_cast %210 : vector<2x64xf32> to vector<2x1x64xf32>
    %287 = vector.shape_cast %228 : vector<2x64xf32> to vector<2x1x64xf32>
    %288 = vector.shape_cast %246 : vector<2x64xf32> to vector<2x1x64xf32>
    %289 = vector.shape_cast %264 : vector<2x64xf32> to vector<2x1x64xf32>
    %290 = vector.shape_cast %282 : vector<2x64xf32> to vector<2x1x64xf32>
    %291 = tpu.concatenate %283, %284, %285, %286, %287, %288, %289, %290 in 1 : vector<2x1x64xf32>, vector<2x1x64xf32>, vector<2x1x64xf32>, vector<2x1x64xf32>, vector<2x1x64xf32>, vector<2x1x64xf32>, vector<2x1x64xf32>, vector<2x1x64xf32> -> vector<2x8x64xf32>
    %c0_157 = arith.constant 0 : index
    %292 = arith.index_cast %136 : i32 to index
    %c0_158 = arith.constant 0 : index
    %293 = vector.load %arg15[%c0_157, %292, %c0_158] : memref<2x8x64xf32, #tpu.memory_space<vmem>>, vector<2x8x64xf32>
    tpu.vector_store %arg15[%c0_157, %292, %c0_158], %291 {strides = array<i32>} : memref<2x8x64xf32, #tpu.memory_space<vmem>>, vector<2x8x64xf32>,
    %c1_i32_159 = arith.constant 1 : i32
    %c1_i32_160 = arith.constant 1 : i32
    %c0_161 = arith.constant 0 : index
    %c0_162 = arith.constant 0 : index
    %c0_163 = arith.constant 0 : index
    %294 = vector.load %arg15[%c0_161, %c0_162, %c0_163] : memref<2x8x64xf32, #tpu.memory_space<vmem>>, vector<2x8x64xf32>
    %295 = vector.shape_cast %294 : vector<2x8x64xf32> to vector<16x64xf32>
    %296 = vector.broadcast %10 : vector<1x64xf32> to vector<16x64xf32>
    %297 = arith.mulf %296, %77 : vector<16x64xf32>
    %298 = arith.addf %295, %297 : vector<16x64xf32>
    %cst_164 = arith.constant 5.000000e-01 : f32
    %299 = vector.broadcast %cst_164 : f32 to vector<16x64xf32>
    %300 = arith.mulf %299, %38 : vector<16x64xf32>
    %301 = math.tanh %300 : vector<16x64xf32>
    %cst_165 = arith.constant 5.000000e-01 : f32
    %302 = vector.broadcast %cst_165 : f32 to vector<16x64xf32>
    %303 = arith.mulf %302, %301 : vector<16x64xf32>
    %cst_166 = arith.constant 5.000000e-01 : f32
    %304 = vector.broadcast %cst_166 : f32 to vector<16x64xf32>
    %305 = arith.addf %303, %304 : vector<16x64xf32>
    %306 = arith.mulf %38, %305 : vector<16x64xf32>
    %307 = arith.mulf %298, %306 : vector<16x64xf32>
    %308 = arith.truncf %307 : vector<16x64xf32> to vector<16x64xbf16>
    %c0_167 = arith.constant 0 : index
    %c0_168 = arith.constant 0 : index
    %c0_169 = arith.constant 0 : index
    %309 = vector.load %arg7[%c0_167, %c0_168, %c0_169] : memref<1x64x32xbf16, #tpu.memory_space<vmem>>, vector<1x64x32xbf16>
    %310 = vector.shape_cast %309 : vector<1x64x32xbf16> to vector<64x32xbf16>
    %cst_170 = arith.constant dense<0.000000e+00> : vector<16x32xf32>
    %311 = tpu.matmul %308, %310, %cst_170 {dimension_numbers = #tpu.dot_dimension_numbers<[1], [0], [0], [1], [0, 0, 1, 1], [], []>} : vector<16x64xbf16>, vector<64x32xbf16>, vector<16x32xf32> -> vector<16x32xf32>
    %312 = vector.shape_cast %311 : vector<16x32xf32> to vector<2x8x32xf32>
    %313 = arith.addf %3, %312 : vector<2x8x32xf32>
    %c0_171 = arith.constant 0 : index
    %c0_172 = arith.constant 0 : index
    %c0_173 = arith.constant 0 : index
    %314 = vector.load %arg9[%c0_171, %c0_172, %c0_173] : memref<2x8x32xf32, #tpu.memory_space<vmem>>, vector<2x8x32xf32>
    tpu.vector_store %arg9[%c0_171, %c0_172, %c0_173], %313 {strides = array<i32>} : memref<2x8x32xf32, #tpu.memory_space<vmem>>, vector<2x8x32xf32>,
    return
  }
  func.func @transform_0(%arg0: i32, %arg1: i32) -> (i32, i32, i32) {
    %c0_i32 = arith.constant 0 : i32
    %c0_i32_0 = arith.constant 0 : i32
    %c0_i32_1 = arith.constant 0 : i32
    return %arg0, %c0_i32, %c0_i32_0 : i32, i32, i32
  }
  func.func @transform_1(%arg0: i32, %arg1: i32) -> (i32, i32, i32) {
    %c0_i32 = arith.constant 0 : i32
    %c0_i32_0 = arith.constant 0 : i32
    %c0_i32_1 = arith.constant 0 : i32
    return %arg1, %c0_i32, %c0_i32_0 : i32, i32, i32
  }
  func.func @transform_2(%arg0: i32, %arg1: i32) -> (i32, i32, i32) {
    %c0_i32 = arith.constant 0 : i32
    %c0_i32_0 = arith.constant 0 : i32
    %c0_i32_1 = arith.constant 0 : i32
    return %arg1, %c0_i32, %c0_i32_0 : i32, i32, i32
  }
  func.func @transform_3(%arg0: i32, %arg1: i32) -> (i32, i32, i32) {
    %c0_i32 = arith.constant 0 : i32
    %c0_i32_0 = arith.constant 0 : i32
    %c0_i32_1 = arith.constant 0 : i32
    return %arg1, %c0_i32, %c0_i32_0 : i32, i32, i32
  }
  func.func @transform_4(%arg0: i32, %arg1: i32) -> (i32, i32, i32) {
    %c0_i32 = arith.constant 0 : i32
    %c0_i32_0 = arith.constant 0 : i32
    %c0_i32_1 = arith.constant 0 : i32
    return %arg1, %c0_i32, %c0_i32_0 : i32, i32, i32
  }
  func.func @transform_5(%arg0: i32, %arg1: i32) -> (i32, i32, i32) {
    %c0_i32 = arith.constant 0 : i32
    %c0_i32_0 = arith.constant 0 : i32
    %c0_i32_1 = arith.constant 0 : i32
    return %arg1, %c0_i32, %c0_i32_0 : i32, i32, i32
  }
  func.func @transform_6(%arg0: i32, %arg1: i32) -> (i32, i32, i32) {
    %c0_i32 = arith.constant 0 : i32
    %c0_i32_0 = arith.constant 0 : i32
    %c0_i32_1 = arith.constant 0 : i32
    return %arg1, %c0_i32, %c0_i32_0 : i32, i32, i32
  }
  func.func @transform_7(%arg0: i32, %arg1: i32) -> (i32, i32, i32) {
    %c0_i32 = arith.constant 0 : i32
    %c0_i32_0 = arith.constant 0 : i32
    %c0_i32_1 = arith.constant 0 : i32
    return %arg0, %c0_i32, %c0_i32_0 : i32, i32, i32
  }
}

</mosaic_0001>

<llo_original>
// kernel: tpu_custom_call.1
$region0: #{tpu_custom_call.1}
  #allocation0 [shape = 'u32[]', space=smem, size = 0x4, offset = 0x4, fixed_abs, tag = 'smem constant byte address 0x4 - core index']
  #allocation1 [shape = 'u32[72,128]{1,0:T(1,128)}', space=vmem, size = 0x9000, scoped, tag = 'internal scratch']
  #allocation2 [shape = 'f32[2,16,64]{2,1,0:T(8,128)}', space=vmem, size = 0x4000, scoped, tag = 'scratch operand']
  #allocation3 [shape = 'f32[2,8,64]{2,1,0:T(8,128)}', space=vmem, size = 0x2000, scoped, tag = 'scratch operand']
  #allocation4 [shape = 'f32[2,8,64]{2,1,0:T(8,128)}', space=vmem, size = 0x2000, scoped, tag = 'scratch operand']
  #allocation5 [shape = 'f32[2,8,64]{2,1,0:T(8,128)}', space=vmem, size = 0x2000, scoped, tag = 'scratch operand']
  #allocation6 [shape = 'f32[2,8,64]{2,1,0:T(8,128)}', space=vmem, size = 0x2000, scoped, tag = 'scratch operand']
  #allocation7 [shape = 'f32[2,8,64]{2,1,0:T(8,128)}', space=vmem, size = 0x2000, scoped, tag = 'scratch operand']
  #allocation8 [shape = 'f32[2,8,64,64]{3,2,1,0:T(8,128)}', space=vmem, size = 0x80000, scoped, tag = 'scratch operand']
  #allocation9 [shape = 'f32[2,8,64,64]{3,2,1,0:T(8,128)}', space=vmem, size = 0x80000, scoped, tag = 'scratch operand']
  %s0 = inlined_call_operand.vmem [shape: f32[2,8,32], index: 0, kind: input, shape index: {}]
  %s1 = inlined_call_operand.vmem [shape: bf16[2,32,128], index: 1, kind: input, shape index: {}]
  %s2 = inlined_call_operand.vmem [shape: f32[2,4,64], index: 2, kind: input, shape index: {}]
  %s3 = inlined_call_operand.hbm [shape: bf16[2,64,256], index: 3, kind: input, shape index: {}]
  %s4 = inlined_call_operand.hbm [shape: f32[2,64,64], index: 4, kind: input, shape index: {}]
  %s5 = inlined_call_operand.vmem [shape: bf16[2,64,32], index: 5, kind: input, shape index: {}]
  %s6 = inlined_call_operand.vmem [shape: f32[2,8,64], index: 6, kind: input, shape index: {}]
  %s7 = inlined_call_operand.hbm [shape: f32[2,8,32], index: 7, kind: output, shape index: {}]
  %s8 = sld [smem:[#allocation0]]
  $region73: #{tpu_custom_call.1} parent=0
    _
  %s10 = ssub.s32 1, %s8
  %s11 = scalar_select 0, %s10, %s8
  $region1: #{tpu_custom_call.1} parent=0
    #allocation10 [shape = 'u8[65536]{0}', space=vmem, size = 0x10000, scoped, tag = 'input window, operand 3']
    #allocation11 [shape = 's32[2]{0}', space=sflag, size = 0x8, scoped, tag = 'scoped memory for tpu_custom_call.1']
    #allocation12 [shape = 's32[2]{0}', space=sflag, size = 0x8, scoped, tag = 'scoped memory for tpu_custom_call.1']
    #allocation13 [shape = 'u8[65536]{0}', space=vmem, size = 0x10000, scoped, tag = 'input window, operand 4']
    #allocation14 [shape = 's32[2]{0}', space=sflag, size = 0x8, scoped, tag = 'scoped memory for tpu_custom_call.1']
    #allocation15 [shape = 'u8[8192]{0}', space=vmem, size = 0x2000, scoped, tag = 'output window, operand 0, single buffered']
    %12 = vsyncpa [#allocation11], 0
    %s13 = scalar_lea.sflag [#allocation11], 1
    %14 = vsyncpa %s13, 0
    %15 = vsyncpa [#allocation14], 0
    %s16 = scalar_lea.sflag [#allocation14], 1
    %17 = vsyncpa %s16, 0
    %18 = vsyncpa [#allocation12], 0
    loop: start=0, step=1, limit=4
    $region2: #{tpu_custom_call.1} parent=1 // loop_pre_header
      _
    $region3: #{tpu_custom_call.1} parent=1 // loop_header
      %s20 = sphi 0, %s24
      %p21 = scmp.ge.s32.totalorder %s20, 4
      %s27 = sphi 0, %s39
      %s28 = sphi 0, %s35
      %s29 = sphi 0, %s27
      %s30 = sphi 0, %s28
      %s31 = sphi 0, %s29
      %s32 = sphi 0, %s30
      %s42 = sphi 0, %s44
      %s45 = sphi 0, %s42
      %s46 = sphi 0, %s45
      %s62 = sphi 0, %s46
      %s68 = sphi 0, %s70
      %s71 = sphi 0, %s68
      %s72 = sphi 0, %s71
      %s88 = sphi 0, %s72
      %s94 = sphi 0, %s96
      %s97 = sphi 0, %s94
      %s98 = sphi 0, %s97
      %s114 = sphi 0, %s98
      %s120 = sphi 0, %s122
      %s123 = sphi 0, %s120
      %s124 = sphi 0, %s123
      %s140 = sphi 0, %s124
      %s146 = sphi 0, %s148
      %s149 = sphi 0, %s146
      %s150 = sphi 0, %s149
      %s166 = sphi 0, %s150
      %s172 = sphi 0, %s174
      %s175 = sphi 0, %s172
      %s176 = sphi 0, %s175
      %s192 = sphi 0, %s176
      %s198 = sphi 0, %s200
      %s201 = sphi 0, %s198
      %s202 = sphi 0, %s201
      %s218 = sphi 0, %s202
      %s224 = sphi 0, %s226
      %s227 = sphi 0, %s224
      %s228 = sphi 0, %s227
      %s244 = sphi 0, %s228
    $region4: #{tpu_custom_call.1} parent=1 // loop_header_branch
      %23 = sbr.rel (%p21) target = $region8
    $region5: #{tpu_custom_call.1} parent=1 // loop_body
      %s25 = ssub.s32 %s20, 1
      %s26 = ssub.s32 %s20, 2
      %s33 = sadd.s32 1, %s28
      %p34 = scmp.ge.s32.totalorder %s33, 2
      %s35 = scalar_select %p34, 0, %s33
      %s36 = sadd.s32 1, %s27
      %s37 = scalar_select %p34, %s36, %s27
      %p38 = scmp.ge.s32.totalorder %s37, 1
      %s39 = scalar_select %p38, 0, %s37
      %s40 = ssub.s32 %s27, %s39
      %p41 = scmp.eq.s32.totalorder %s40, 0
      %s43 = sadd.s32 %s42, 1
      %s44 = scalar_select %p41, %s42, %s43
      %p47 = pneg %p41
      %p48 = scmp.eq.s32.totalorder %s20, 1
      %p49 = por %p47, %p48
      %p50 = scmp.ne.s32.totalorder %s42, %s45
      %p51 = scmp.eq.s32.totalorder %s20, 0
      %p52 = por %p50, %p51
      %p53 = scmp.ne.s32.totalorder %s42, %s45
      %p54 = scmp.eq.s32.totalorder %s25, 1
      %p55 = por %p53, %p54
      %p56 = scmp.ne.s32.totalorder %s45, %s46
      %p57 = scmp.eq.s32.totalorder %s25, 0
      %p58 = por %p56, %p57
      %p59 = scmp.ne.s32.totalorder %s45, %s46
      %p60 = scmp.eq.s32.totalorder %s26, 1
      %p61 = por %p59, %p60
      %p63 = scmp.ne.s32.totalorder %s46, %s62
      %p64 = scmp.eq.s32.totalorder %s26, 0
      %p65 = por %p63, %p64
      %s66 = ssub.s32 %s28, %s35
      %p67 = scmp.eq.s32.totalorder %s66, 0
      %s69 = sadd.s32 %s68, 1
      %s70 = scalar_select %p67, %s68, %s69
      %p73 = pneg %p67
      %p74 = scmp.eq.s32.totalorder %s20, 1
      %p75 = por %p73, %p74
      %p76 = scmp.ne.s32.totalorder %s68, %s71
      %p77 = scmp.eq.s32.totalorder %s20, 0
      %p78 = por %p76, %p77
      %p79 = scmp.ne.s32.totalorder %s68, %s71
      %p80 = scmp.eq.s32.totalorder %s25, 1
      %p81 = por %p79, %p80
      %p82 = scmp.ne.s32.totalorder %s71, %s72
      %p83 = scmp.eq.s32.totalorder %s25, 0
      %p84 = por %p82, %p83
      %p85 = scmp.ne.s32.totalorder %s71, %s72
      %p86 = scmp.eq.s32.totalorder %s26, 1
      %p87 = por %p85, %p86
      %p89 = scmp.ne.s32.totalorder %s72, %s88
      %p90 = scmp.eq.s32.totalorder %s26, 0
      %p91 = por %p89, %p90
      %s92 = ssub.s32 %s28, %s35
      %p93 = scmp.eq.s32.totalorder %s92, 0
      %s95 = sadd.s32 %s94, 1
      %s96 = scalar_select %p93, %s94, %s95
      %p99 = pneg %p93
      %p100 = scmp.eq.s32.totalorder %s20, 1
      %p101 = por %p99, %p100
      %p102 = scmp.ne.s32.totalorder %s94, %s97
      %p103 = scmp.eq.s32.totalorder %s20, 0
      %p104 = por %p102, %p103
      %p105 = scmp.ne.s32.totalorder %s94, %s97
      %p106 = scmp.eq.s32.totalorder %s25, 1
      %p107 = por %p105, %p106
      %p108 = scmp.ne.s32.totalorder %s97, %s98
      %p109 = scmp.eq.s32.totalorder %s25, 0
      %p110 = por %p108, %p109
      %p111 = scmp.ne.s32.totalorder %s97, %s98
      %p112 = scmp.eq.s32.totalorder %s26, 1
      %p113 = por %p111, %p112
      %p115 = scmp.ne.s32.totalorder %s98, %s114
      %p116 = scmp.eq.s32.totalorder %s26, 0
      %p117 = por %p115, %p116
      %s118 = ssub.s32 %s28, %s35
      %p119 = scmp.eq.s32.totalorder %s118, 0
      %s121 = sadd.s32 %s120, 1
      %s122 = scalar_select %p119, %s120, %s121
      %p125 = pneg %p119
      %p126 = scmp.eq.s32.totalorder %s20, 1
      %p127 = por %p125, %p126
      %p128 = scmp.ne.s32.totalorder %s120, %s123
      %p129 = scmp.eq.s32.totalorder %s20, 0
      %p130 = por %p128, %p129
      %p131 = scmp.ne.s32.totalorder %s120, %s123
      %p132 = scmp.eq.s32.totalorder %s25, 1
      %p133 = por %p131, %p132
      %p134 = scmp.ne.s32.totalorder %s123, %s124
      %p135 = scmp.eq.s32.totalorder %s25, 0
      %p136 = por %p134, %p135
      %p137 = scmp.ne.s32.totalorder %s123, %s124
      %p138 = scmp.eq.s32.totalorder %s26, 1
      %p139 = por %p137, %p138
      %p141 = scmp.ne.s32.totalorder %s124, %s140
      %p142 = scmp.eq.s32.totalorder %s26, 0
      %p143 = por %p141, %p142
      %s144 = ssub.s32 %s28, %s35
      %p145 = scmp.eq.s32.totalorder %s144, 0
      %s147 = sadd.s32 %s146, 1
      %s148 = scalar_select %p145, %s146, %s147
      %p151 = pneg %p145
      %p152 = scmp.eq.s32.totalorder %s20, 1
      %p153 = por %p151, %p152
      %p154 = scmp.ne.s32.totalorder %s146, %s149
      %p155 = scmp.eq.s32.totalorder %s20, 0
      %p156 = por %p154, %p155
      %p157 = scmp.ne.s32.totalorder %s146, %s149
      %p158 = scmp.eq.s32.totalorder %s25, 1
      %p159 = por %p157, %p158
      %p160 = scmp.ne.s32.totalorder %s149, %s150
      %p161 = scmp.eq.s32.totalorder %s25, 0
      %p162 = por %p160, %p161
      %p163 = scmp.ne.s32.totalorder %s149, %s150
      %p164 = scmp.eq.s32.totalorder %s26, 1
      %p165 = por %p163, %p164
      %p167 = scmp.ne.s32.totalorder %s150, %s166
      %p168 = scmp.eq.s32.totalorder %s26, 0
      %p169 = por %p167, %p168
      %s170 = ssub.s32 %s28, %s35
      %p171 = scmp.eq.s32.totalorder %s170, 0
      %s173 = sadd.s32 %s172, 1
      %s174 = scalar_select %p171, %s172, %s173
      %p177 = pneg %p171
      %p178 = scmp.eq.s32.totalorder %s20, 1
      %p179 = por %p177, %p178
      %p180 = scmp.ne.s32.totalorder %s172, %s175
      %p181 = scmp.eq.s32.totalorder %s20, 0
      %p182 = por %p180, %p181
      %p183 = scmp.ne.s32.totalorder %s172, %s175
      %p184 = scmp.eq.s32.totalorder %s25, 1
      %p185 = por %p183, %p184
      %p186 = scmp.ne.s32.totalorder %s175, %s176
      %p187 = scmp.eq.s32.totalorder %s25, 0
      %p188 = por %p186, %p187
      %p189 = scmp.ne.s32.totalorder %s175, %s176
      %p190 = scmp.eq.s32.totalorder %s26, 1
      %p191 = por %p189, %p190
      %p193 = scmp.ne.s32.totalorder %s176, %s192
      %p194 = scmp.eq.s32.totalorder %s26, 0
      %p195 = por %p193, %p194
      %s196 = ssub.s32 %s28, %s35
      %p197 = scmp.eq.s32.totalorder %s196, 0
      %s199 = sadd.s32 %s198, 1
      %s200 = scalar_select %p197, %s198, %s199
      %p203 = pneg %p197
      %p204 = scmp.eq.s32.totalorder %s20, 1
      %p205 = por %p203, %p204
      %p206 = scmp.ne.s32.totalorder %s198, %s201
      %p207 = scmp.eq.s32.totalorder %s20, 0
      %p208 = por %p206, %p207
      %p209 = scmp.ne.s32.totalorder %s198, %s201
      %p210 = scmp.eq.s32.totalorder %s25, 1
      %p211 = por %p209, %p210
      %p212 = scmp.ne.s32.totalorder %s201, %s202
      %p213 = scmp.eq.s32.totalorder %s25, 0
      %p214 = por %p212, %p213
      %p215 = scmp.ne.s32.totalorder %s201, %s202
      %p216 = scmp.eq.s32.totalorder %s26, 1
      %p217 = por %p215, %p216
      %p219 = scmp.ne.s32.totalorder %s202, %s218
      %p220 = scmp.eq.s32.totalorder %s26, 0
      %p221 = por %p219, %p220
      %s222 = ssub.s32 %s27, %s39
      %p223 = scmp.eq.s32.totalorder %s222, 0
      %s225 = sadd.s32 %s224, 1
      %s226 = scalar_select %p223, %s224, %s225
      %p229 = pneg %p223
      %p230 = scmp.eq.s32.totalorder %s20, 1
      %p231 = por %p229, %p230
      %p232 = scmp.ne.s32.totalorder %s224, %s227
      %p233 = scmp.eq.s32.totalorder %s20, 0
      %p234 = por %p232, %p233
      %p235 = scmp.ne.s32.totalorder %s224, %s227
      %p236 = scmp.eq.s32.totalorder %s25, 1
      %p237 = por %p235, %p236
      %p238 = scmp.ne.s32.totalorder %s227, %s228
      %p239 = scmp.eq.s32.totalorder %s25, 0
      %p240 = por %p238, %p239
      %p241 = scmp.ne.s32.totalorder %s227, %s228
      %p242 = scmp.eq.s32.totalorder %s26, 1
      %p243 = por %p241, %p242
      %p245 = scmp.ne.s32.totalorder %s228, %s244
      %p246 = scmp.eq.s32.totalorder %s26, 0
      %p247 = por %p245, %p246
      %p248 = scmp.le.s32.totalorder 1, %s20
      %p249 = scmp.lt.s32.totalorder %s20, 3
      %p250 = pnand %p248, %p249
      %p251 = pneg %p250
      // Predicated region
      $region9: #{tpu_custom_call.1} parent=5 // pred_check
        _
      $region10: #{tpu_custom_call.1} parent=5 // pred_check_branch
        %253 = sbr.rel (%p250) target = $region12
      $region11: #{tpu_custom_call.1} parent=5 // pred_region
        %s254 = ssub.s32 %s20, 1
        // Predicated region
        $region13: #{tpu_custom_call.1} parent=11 // pred_check
          %p255 = pneg %p58
        $region14: #{tpu_custom_call.1} parent=11 // pred_check_branch
          %257 = sbr.rel (%p255) target = $region16
        $region15: #{tpu_custom_call.1} parent=11 // pred_region
          %s258 = smul.u32 2, %s29
          %p259 = scmp.lt.s32.totalorder %s258, 1
          %s260 = scalar_select %p259, %s258, 1
          %s261 = smul.addr %s260, 8
          %s262 = scalar_lea.vmem %s0, %s261
          %s263 = smul.u32 2, %s29
        $region16: #{tpu_custom_call.1} parent=11 // pred_fallthru
          _
      $region12: #{tpu_custom_call.1} parent=5 // pred_fallthru
        _
      %p264 = scmp.lt.s32.totalorder %s20, 2
      // Predicated region
      $region17: #{tpu_custom_call.1} parent=5 // pred_check
        %p265 = pneg %p264
      $region18: #{tpu_custom_call.1} parent=5 // pred_check_branch
        %267 = sbr.rel (%p265) target = $region20
      $region19: #{tpu_custom_call.1} parent=5 // pred_region
        // Predicated region
        $region21: #{tpu_custom_call.1} parent=19 // pred_check
          %p268 = pneg %p78
        $region22: #{tpu_custom_call.1} parent=19 // pred_check_branch
          %270 = sbr.rel (%p268) target = $region24
        $region23: #{tpu_custom_call.1} parent=19 // pred_region
          %p271 = scmp.lt.s32.totalorder %s28, 1
          %s272 = scalar_select %p271, %s28, 1
          %s273 = smul.addr %s272, 4
          %s274 = smul.addr %s273, 4
          %s275 = scalar_lea.vmem %s1, %s274
        $region24: #{tpu_custom_call.1} parent=19 // pred_fallthru
          _
        // Predicated region
        $region25: #{tpu_custom_call.1} parent=19 // pred_check
          %p276 = pneg %p104
        $region26: #{tpu_custom_call.1} parent=19 // pred_check_branch
          %278 = sbr.rel (%p276) target = $region28
        $region27: #{tpu_custom_call.1} parent=19 // pred_region
          %p279 = scmp.lt.s32.totalorder %s28, 1
          %s280 = scalar_select %p279, %s28, 1
          %s281 = smul.addr %s280, 4
          %s282 = scalar_lea.vmem %s2, %s281
        $region28: #{tpu_custom_call.1} parent=19 // pred_fallthru
          _
        // Predicated region
        $region29: #{tpu_custom_call.1} parent=19 // pred_check
          %p283 = pneg %p130
        $region30: #{tpu_custom_call.1} parent=19 // pred_check_branch
          %285 = sbr.rel (%p283) target = $region32
        $region31: #{tpu_custom_call.1} parent=19 // pred_region
          %s286 = sand.u32 %s120, 1
          %s287 = scalar_lea.sflag [#allocation11], %s286
          %s288 = sand.u32 %s120, 1
          %s289 = smul.addr %s288, 64
          %s290 = scalar_lea.vmem [#allocation10], %s289
          %292 = vsyncadd %s287, 0
          %s293 = smul.addr %s28, 16
          %s294 = smul.addr %s293, 4
          %s295 = scalar_lea.hbm %s3, %s294
          %s296 = sshll.u32 %s295, 4
          %s297 = int_to_ptr.hbm [resolvable:$true] %s296
          %s298 = sshll.u32 %s290, 4
          %s299 = int_to_ptr.vmem [resolvable:$true] %s298
          %304 = dma.hbm_to_vmem [thread:$0]  %s297, 1024, %s299, %s287, 128, 128, 8
        $region32: #{tpu_custom_call.1} parent=19 // pred_fallthru
          _
        // Predicated region
        $region33: #{tpu_custom_call.1} parent=19 // pred_check
          %p305 = pneg %p156
        $region34: #{tpu_custom_call.1} parent=19 // pred_check_branch
          %307 = sbr.rel (%p305) target = $region36
        $region35: #{tpu_custom_call.1} parent=19 // pred_region
          %s308 = sand.u32 %s146, 1
          %s309 = scalar_lea.sflag [#allocation14], %s308
          %s310 = sand.u32 %s146, 1
          %s311 = smul.addr %s310, 64
          %s312 = scalar_lea.vmem [#allocation13], %s311
          %314 = vsyncadd %s309, 0
          %s315 = smul.addr %s28, 8
          %s316 = smul.addr %s315, 8
          %s317 = scalar_lea.hbm %s4, %s316
          %s318 = sshll.u32 %s317, 4
          %s319 = int_to_ptr.hbm [resolvable:$true] %s318
          %s320 = sshll.u32 %s312, 4
          %s321 = int_to_ptr.vmem [resolvable:$true] %s320
          %326 = dma.hbm_to_vmem [thread:$0]  %s319, 1024, %s321, %s309, 128, 128, 8
        $region36: #{tpu_custom_call.1} parent=19 // pred_fallthru
          _
        // Predicated region
        $region37: #{tpu_custom_call.1} parent=19 // pred_check
          %p327 = pneg %p182
        $region38: #{tpu_custom_call.1} parent=19 // pred_check_branch
          %329 = sbr.rel (%p327) target = $region40
        $region39: #{tpu_custom_call.1} parent=19 // pred_region
          %p330 = scmp.lt.s32.totalorder %s28, 1
          %s331 = scalar_select %p330, %s28, 1
          %s332 = smul.addr %s331, 8
          %s333 = smul.addr %s332, 4
          %s334 = scalar_lea.vmem %s5, %s333
        $region40: #{tpu_custom_call.1} parent=19 // pred_fallthru
          _
        // Predicated region
        $region41: #{tpu_custom_call.1} parent=19 // pred_check
          %p335 = pneg %p208
        $region42: #{tpu_custom_call.1} parent=19 // pred_check_branch
          %337 = sbr.rel (%p335) target = $region44
        $region43: #{tpu_custom_call.1} parent=19 // pred_region
          %p338 = scmp.lt.s32.totalorder %s28, 1
          %s339 = scalar_select %p338, %s28, 1
          %s340 = smul.addr %s339, 8
          %s341 = scalar_lea.vmem %s6, %s340
        $region44: #{tpu_custom_call.1} parent=19 // pred_fallthru
          _
      $region20: #{tpu_custom_call.1} parent=5 // pred_fallthru
        _
      %p342 = scmp.le.s32.totalorder 1, %s20
      %p343 = scmp.lt.s32.totalorder %s20, 3
      %p344 = pnand %p342, %p343
      %p345 = pneg %p344
      // Predicated region
      $region45: #{tpu_custom_call.1} parent=5 // pred_check
        _
      $region46: #{tpu_custom_call.1} parent=5 // pred_check_branch
        %347 = sbr.rel (%p344) target = $region48
      $region47: #{tpu_custom_call.1} parent=5 // pred_region
        %s348 = ssub.s32 %s20, 1
        %s349 = sand.u32 %s123, 1
        %s350 = scalar_lea.sflag [#allocation11], %s349
        %s351 = sand.u32 %s123, 1
        %s352 = smul.addr %s351, 64
        %s353 = scalar_lea.vmem [#allocation10], %s352
        // Predicated region
        $region49: #{tpu_custom_call.1} parent=47 // pred_check
          %p354 = pneg %p136
        $region50: #{tpu_custom_call.1} parent=47 // pred_check_branch
          %356 = sbr.rel (%p354) target = $region52
        $region51: #{tpu_custom_call.1} parent=47 // pred_region
          %358 = dma.done %s350, 1024
        $region52: #{tpu_custom_call.1} parent=47 // pred_fallthru
          _
        %s359 = sand.u32 %s149, 1
        %s360 = scalar_lea.sflag [#allocation14], %s359
        %s361 = sand.u32 %s149, 1
        %s362 = smul.addr %s361, 64
        %s363 = scalar_lea.vmem [#allocation13], %s362
        // Predicated region
        $region53: #{tpu_custom_call.1} parent=47 // pred_check
          %p364 = pneg %p162
        $region54: #{tpu_custom_call.1} parent=47 // pred_check_branch
          %366 = sbr.rel (%p364) target = $region56
        $region55: #{tpu_custom_call.1} parent=47 // pred_region
          %368 = dma.done %s360, 1024
        $region56: #{tpu_custom_call.1} parent=47 // pred_fallthru
          _
        %s369 = smul.u32 2, %s29
        %p370 = scmp.lt.s32.totalorder %s369, 1
        %s371 = scalar_select %p370, %s369, 1
        %s372 = smul.addr %s371, 8
        %s373 = scalar_lea.vmem %s0, %s372
        %p374 = pneg %p58
        %p375 = pneg %p55
        %p376 = scmp.lt.s32.totalorder %s30, 1
        %s377 = scalar_select %p376, %s30, 1
        %s378 = smul.addr %s377, 4
        %s379 = smul.addr %s378, 4
        %s380 = scalar_lea.vmem %s1, %s379
        %p381 = pneg %p84
        %p382 = pneg %p81
        %p383 = scmp.lt.s32.totalorder %s30, 1
        %s384 = scalar_select %p383, %s30, 1
        %s385 = smul.addr %s384, 4
        %s386 = scalar_lea.vmem %s2, %s385
        %p387 = pneg %p110
        %p388 = pneg %p107
        %s389 = sand.u32 %s123, 1
        %s390 = scalar_lea.sflag [#allocation11], %s389
        %s391 = sand.u32 %s123, 1
        %s392 = smul.addr %s391, 64
        %s393 = scalar_lea.vmem [#allocation10], %s392
        %p394 = pneg %p136
        %p395 = pneg %p133
        %s396 = sand.u32 %s149, 1
        %s397 = scalar_lea.sflag [#allocation14], %s396
        %s398 = sand.u32 %s149, 1
        %s399 = smul.addr %s398, 64
        %s400 = scalar_lea.vmem [#allocation13], %s399
        %p401 = pneg %p162
        %p402 = pneg %p159
        %p403 = scmp.lt.s32.totalorder %s30, 1
        %s404 = scalar_select %p403, %s30, 1
        %s405 = smul.addr %s404, 8
        %s406 = smul.addr %s405, 4
        %s407 = scalar_lea.vmem %s5, %s406
        %p408 = pneg %p188
        %p409 = pneg %p185
        %p410 = scmp.lt.s32.totalorder %s30, 1
        %s411 = scalar_select %p410, %s30, 1
        %s412 = smul.addr %s411, 8
        %s413 = scalar_lea.vmem %s6, %s412
        %p414 = pneg %p214
        %p415 = pneg %p211
        %p416 = pneg %p240
        %p417 = pneg %p237
        %s418 = smul.u32 2, %s29
        %p419 = scmp.lt.s32.totalorder %s418, 1
        %s420 = scalar_select %p419, %s418, 1
        %s421 = smul.addr %s420, 8
        %s422 = scalar_lea.vmem %s0, %s421
        %s423 = smul.u32 2, %s29
        %p424 = scmp.lt.s32.totalorder %s30, 1
        %s425 = scalar_select %p424, %s30, 1
        %s426 = smul.addr %s425, 4
        %s427 = smul.addr %s426, 4
        %s428 = scalar_lea.vmem %s1, %s427
        %p429 = scmp.lt.s32.totalorder %s30, 1
        %s430 = scalar_select %p429, %s30, 1
        %s431 = smul.addr %s430, 4
        %s432 = scalar_lea.vmem %s2, %s431
        %p433 = scmp.lt.s32.totalorder %s30, 1
        %s434 = scalar_select %p433, %s30, 1
        %s435 = smul.addr %s434, 8
        %s436 = smul.addr %s435, 4
        %s437 = scalar_lea.vmem %s5, %s436
        %p438 = scmp.lt.s32.totalorder %s30, 1
        %s439 = scalar_select %p438, %s30, 1
        %s440 = smul.addr %s439, 8
        %s441 = scalar_lea.vmem %s6, %s440
        %s442 = smul.u32 2, %s29
        %p444 = scmp.eq.s32.totalorder %s30, 0
        // Predicated region
        $region57: #{tpu_custom_call.1} parent=47 // pred_check
          %p445 = pneg %p444
        $region58: #{tpu_custom_call.1} parent=47 // pred_check_branch
          %447 = sbr.rel (%p445) target = $region60
        $region59: #{tpu_custom_call.1} parent=47 // pred_region
          %v448 = vld [vmem:[%s422] sm:$0xff]
          %v449 = vld [vmem:[%s422 + $0x8] sm:$0xff]
          %vm450 = vcmask 261120
          %451 = vst.msk [vmem:[#allocation15] sm:$0xff] %vm450, %v448
          %452 = vst.msk [vmem:[#allocation15 + $0x8] sm:$0xff] %vm450, %v449
        $region60: #{tpu_custom_call.1} parent=47 // pred_fallthru
          _
        %v453 = vld [vmem:[#allocation15] sm:$0xff]
        %v454 = vld [vmem:[#allocation15 + $0x8] sm:$0xff]
        %v455 = vld [vmem:[%s441] sm:$0xff]
        %vm456 = vcmask 261120
        %v457 = vsel %vm456, %v453, 0.0
        %458 = vadd.xlane.f32.xlu0 %v457
        %v459 = vpop.xlane.xlu0 %458
        %v460 = vsel %vm456, %v454, 0.0
        %461 = vadd.xlane.f32.xlu0 %v460
        %v462 = vpop.xlane.xlu0 %461
        %v463 = vrcp.pop 32.0
        %v464 = vmul.f32 32.0, %v463
        %v465 = vsub.f32 1.0, %v464
        %v466 = vmul.f32 %v463, %v465
        %v467 = vadd.f32 %v463, %v466
        %vm468 = vweird.f32 %v463
        %v469 = vsel %vm468, %v463, %v467
        %v470 = vmul.f32 %v459, %v469
        %v471 = vmul.f32 %v462, %v469
        %v472 = vsub.f32 %v453, %v470
        %v473 = vsub.f32 %v454, %v471
        %v474 = vmul.f32 %v472, %v472
        %v475 = vmul.f32 %v473, %v473
        %v476 = vsel %vm456, %v474, 0.0
        %477 = vadd.xlane.f32.xlu0 %v476
        %v478 = vpop.xlane.xlu0 %477
        %v479 = vsel %vm456, %v475, 0.0
        %480 = vadd.xlane.f32.xlu0 %v479
        %v481 = vpop.xlane.xlu0 %480
        %v482 = vmul.f32 %v478, %v469
        %v483 = vmul.f32 %v481, %v469
        %v484 = vadd.f32 %v482, 1e-05
        %v485 = vadd.f32 %v483, 1e-05
        %v486 = vrsqrt.pop %v484
        %v487 = vmul.f32 %v486, %v484
        %v488 = vmul.f32 %v487, %v486
        %v489 = vmul.f32 0.5, %v488
        %v490 = vsub.f32 1.5, %v489
        %v491 = vmul.f32 %v486, %v490
        %vm492 = vweird.f32 %v484
        %vm493 = vweird.f32 %v486
        %vm494 = vmor %vm492, %vm493
        %v495 = vsel %vm494, %v486, %v491
        %v496 = vrsqrt.pop %v485
        %v497 = vmul.f32 %v496, %v485
        %v498 = vmul.f32 %v497, %v496
        %v499 = vmul.f32 0.5, %v498
        %v500 = vsub.f32 1.5, %v499
        %v501 = vmul.f32 %v496, %v500
        %vm502 = vweird.f32 %v485
        %vm503 = vweird.f32 %v496
        %vm504 = vmor %vm502, %vm503
        %v505 = vsel %vm504, %v496, %v501
        %v506 = vmul.f32 %v472, %v495
        %v507 = vmul.f32 %v473, %v505
        %v508 = vperm.slane %v455, 0
        %v509 = vmul.f32 %v506, %v508
        %v510 = vmul.f32 %v507, %v508
        %v511 = vperm.slane %v455, 1
        %v512 = vadd.f32 %v509, %v511
        %v513 = vadd.f32 %v510, %v511
        %v514 = vpack.c.bf16 %v513, %v512
        %v515 = vld [vmem:[%s428] sm:$0xf]
        %v516 = vld [vmem:[%s428 + $0x4] sm:$0xf]
        %v517 = vld [vmem:[%s428 + $0x8] sm:$0xf]
        %v518 = vld [vmem:[%s428 + $0xc] sm:$0xf]
        %v523 = vunpack.c.l.b16 %v515
        %v524 = vunpack.c.l.b16 %v516
        %v525 = vunpack.c.l.b16 %v517
        %v526 = vunpack.c.l.b16 %v518
        %v527 = vpack.c.b16 %v524, %v523
        %v528 = vpack.c.b16 %v526, %v525
        %v532 = vsel %vm456, %v514, 0
        %534 = vmatpush.bf16.msra.mxu0 0
        %535 = vmatpush.bf16.msra.mxu0 0
        %536 = vmatpush.bf16.msra.mxu0 0
        %537 = vmatpush.bf16.msra.mxu0 0
        %538 = vmatpush.bf16.msra.mxu0 0
        %539 = vmatpush.bf16.msra.mxu0 0
        %540 = vmatpush.bf16.msra.mxu0 %v528
        %541 = vmatpush.bf16.msra.mxu0 %v527
        %542 = vmatmul.bf16.gmra.mxu0 %v532
        %v543 = vpop.f32.mrf.mxu0
        %v544 = vadd.f32 0.0, %v543
        %v545 = vpop.f32.mrf.mxu0
        %v546 = vadd.f32 0.0, %v545
        %547 = vdwg.mxu0
        %v548 = vld [vmem:[%s432] sm:$0xf]
        %vm549 = vcmask 523264
        %550 = vst.msk [vmem:[#allocation2] sm:$0xff] %vm549, 0.0
        %551 = vst.msk [vmem:[#allocation2 + $0x10] sm:$0xff] %vm549, 0.0
        %552 = vst.msk [vmem:[#allocation2 + $0x8] sm:$0xff] %vm549, %v544
        %553 = vst.msk [vmem:[#allocation2 + $0x18] sm:$0xff] %vm549, %v546
        %v554 = vperm.slane %v548, 3
        %v555 = vmul.f32 %v544, %v554
        %v556 = vmul.f32 %v546, %v554
        %v557 = vld [vmem:[#allocation2 + $0x5] sm:$0xff]
        %v558 = vld [vmem:[#allocation2 + $0x15] sm:$0xff]
        %v559 = vperm.slane %v548, 0
        %v560 = vmul.f32 %v557, %v559
        %v561 = vmul.f32 %v558, %v559
        %v562 = vadd.f32 %v555, %v560
        %v563 = vadd.f32 %v556, %v561
        %v564 = vld [vmem:[#allocation2 + $0x6] sm:$0xff]
        %v565 = vld [vmem:[#allocation2 + $0x16] sm:$0xff]
        %v566 = vperm.slane %v548, 1
        %v567 = vmul.f32 %v564, %v566
        %v568 = vmul.f32 %v565, %v566
        %v569 = vadd.f32 %v562, %v567
        %v570 = vadd.f32 %v563, %v568
        %v571 = vld [vmem:[#allocation2 + $0x7] sm:$0xff]
        %v572 = vld [vmem:[#allocation2 + $0x17] sm:$0xff]
        %v573 = vperm.slane %v548, 2
        %v574 = vmul.f32 %v571, %v573
        %v575 = vmul.f32 %v572, %v573
        %v576 = vadd.f32 %v569, %v574
        %v577 = vadd.f32 %v570, %v575
        %v578 = vperm.slane %v455, 2
        %v579 = vadd.f32 %v576, %v578
        %v580 = vadd.f32 %v577, %v578
        %v581 = vmul.f32 %v579, 0.5
        %v582 = vmul.f32 %v580, 0.5
        %v583 = vtanh.pop %v581
        %v584 = vtanh.pop %v582
        %v585 = vmul.f32 %v583, 0.5
        %v586 = vmul.f32 %v584, 0.5
        %v587 = vadd.f32 %v585, 0.5
        %v588 = vadd.f32 %v586, 0.5
        %v589 = vmul.f32 %v579, %v587
        %v590 = vmul.f32 %v580, %v588
        %v591 = vpack.c.bf16 %v590, %v589
        %v592 = vld [vmem:[%s353] sm:$0xff]
        %v593 = vld [vmem:[%s353 + $0x8] sm:$0xff]
        %v594 = vld [vmem:[%s353 + $0x10] sm:$0xff]
        %v595 = vld [vmem:[%s353 + $0x18] sm:$0xff]
        %v596 = vld [vmem:[%s353 + $0x20] sm:$0xff]
        %v597 = vld [vmem:[%s353 + $0x28] sm:$0xff]
        %v598 = vld [vmem:[%s353 + $0x30] sm:$0xff]
        %v599 = vld [vmem:[%s353 + $0x38] sm:$0xff]
        %v608 = vunpack.c.l.b16 %v592
        %v609 = vunpack.c.h.b16 %v592
        %v610 = vunpack.c.l.b16 %v593
        %v611 = vunpack.c.h.b16 %v593
        %v612 = vunpack.c.l.b16 %v594
        %v613 = vunpack.c.h.b16 %v594
        %v614 = vunpack.c.l.b16 %v595
        %v615 = vunpack.c.h.b16 %v595
        %v616 = vunpack.c.l.b16 %v596
        %v617 = vunpack.c.h.b16 %v596
        %v618 = vunpack.c.l.b16 %v597
        %v619 = vunpack.c.h.b16 %v597
        %v620 = vunpack.c.l.b16 %v598
        %v621 = vunpack.c.h.b16 %v598
        %v622 = vunpack.c.l.b16 %v599
        %v623 = vunpack.c.h.b16 %v599
        %v624 = vpack.c.b16 %v610, %v608
        %v625 = vpack.c.b16 %v611, %v609
        %v626 = vpack.c.b16 %v614, %v612
        %v627 = vpack.c.b16 %v615, %v613
        %v628 = vpack.c.b16 %v618, %v616
        %v629 = vpack.c.b16 %v619, %v617
        %v630 = vpack.c.b16 %v622, %v620
        %v631 = vpack.c.b16 %v623, %v621
        %v641 = vsel %vm549, %v591, 0
        %643 = vmatpush.bf16.msra.mxu0 0
        %644 = vmatpush.bf16.msra.mxu0 0
        %645 = vmatpush.bf16.msra.mxu0 0
        %646 = vmatpush.bf16.msra.mxu0 0
        %647 = vmatpush.bf16.msra.mxu0 %v630
        %648 = vmatpush.bf16.msra.mxu0 %v628
        %649 = vmatpush.bf16.msra.mxu0 %v626
        %650 = vmatpush.bf16.msra.mxu0 %v624
        %651 = vmatmul.bf16.gmra.mxu0 %v641
        %v652 = vpop.f32.mrf.mxu0
        %v653 = vadd.f32 0.0, %v652
        %v654 = vpop.f32.mrf.mxu0
        %v655 = vadd.f32 0.0, %v654
        %656 = vdwg.mxu0
        %657 = vmatpush.bf16.msra.mxu0 0
        %658 = vmatpush.bf16.msra.mxu0 0
        %659 = vmatpush.bf16.msra.mxu0 0
        %660 = vmatpush.bf16.msra.mxu0 0
        %661 = vmatpush.bf16.msra.mxu0 %v631
        %662 = vmatpush.bf16.msra.mxu0 %v629
        %663 = vmatpush.bf16.msra.mxu0 %v627
        %664 = vmatpush.bf16.msra.mxu0 %v625
        %665 = vmatmul.bf16.gmra.mxu0 %v641
        %v666 = vpop.f32.mrf.mxu0
        %v667 = vadd.f32 0.0, %v666
        %v668 = vpop.f32.mrf.mxu0
        %v669 = vadd.f32 0.0, %v668
        %670 = vdwg.mxu0
        %671 = vst.msk [vmem:[#allocation5] sm:$0xff] %vm549, %v653
        %672 = vst.msk [vmem:[#allocation5 + $0x8] sm:$0xff] %vm549, %v655
        %675 = vrot.lane.b32.xlu0 %v653, 64
        %v676 = vpop.permute.xlu0 %675
        %677 = vrot.lane.b32.xlu0 %v655, 64
        %v678 = vpop.permute.xlu0 %677
        %681 = vst.msk [vmem:[#allocation6] sm:$0xff] %vm549, %v676
        %682 = vst.msk [vmem:[#allocation6 + $0x8] sm:$0xff] %vm549, %v678
        %v683 = vperm.slane %v455, 3
        %v684 = vadd.f32 %v667, %v683
        %v685 = vadd.f32 %v669, %v683
        %v686 = vmin.f32 %v684, 20.0
        %v687 = vmin.f32 %v685, 20.0
        %vm688 = vcmp.gt.f32.partialorder %v684, 20.0
        %vm689 = vcmp.gt.f32.partialorder %v685, 20.0
        %v690 = vmul.f32 %v686, 1.442695
        %v691 = vpow.pop %v690
        %v692 = vmul.f32 %v687, 1.442695
        %v693 = vpow.pop %v692
        %v694 = vadd.f32 %v691, 1.0
        %v695 = vlog2.pop %v694
        %v696 = vmul.f32 %v695, 0.6931472
        %v697 = vmul.f32 -0.5, %v691
        %v698 = vadd.f32 %v697, 1.0
        %v699 = vmul.f32 %v698, %v691
        %v700 = vand.u32 2147483647, %v691
        %vm701 = vcmp.lt.f32.partialorder %v700, 0.0004427343
        %v702 = vsel %vm701, %v699, %v696
        %v703 = vadd.f32 %v693, 1.0
        %v704 = vlog2.pop %v703
        %v705 = vmul.f32 %v704, 0.6931472
        %v706 = vmul.f32 -0.5, %v693
        %v707 = vadd.f32 %v706, 1.0
        %v708 = vmul.f32 %v707, %v693
        %v709 = vand.u32 2147483647, %v693
        %vm710 = vcmp.lt.f32.partialorder %v709, 0.0004427343
        %v711 = vsel %vm710, %v708, %v705
        %v712 = vsel %vm688, %v684, %v702
        %v713 = vsel %vm689, %v685, %v711
        %714 = vst.msk [vmem:[#allocation3] sm:$0xff] %vm549, %v712
        %715 = vst.msk [vmem:[#allocation3 + $0x8] sm:$0xff] %vm549, %v713
        %v716 = vmul.f32 %v712, %v589
        %v717 = vmul.f32 %v713, %v590
        %718 = vst.msk [vmem:[#allocation4] sm:$0xff] %vm549, %v716
        %719 = vst.msk [vmem:[#allocation4 + $0x8] sm:$0xff] %vm549, %v717
        %v720 = vld [vmem:[%s363] sm:$0xff]
        %v721 = vld [vmem:[%s363 + $0x8] sm:$0xff]
        %v722 = vld [vmem:[%s363 + $0x10] sm:$0xff]
        %v723 = vld [vmem:[%s363 + $0x18] sm:$0xff]
        %v724 = vld [vmem:[%s363 + $0x20] sm:$0xff]
        %v725 = vld [vmem:[%s363 + $0x28] sm:$0xff]
        %v726 = vld [vmem:[%s363 + $0x30] sm:$0xff]
        %v727 = vld [vmem:[%s363 + $0x38] sm:$0xff]
        %v728 = vmul.f32 %v720, 1.442695
        %v729 = vpow.pop %v728
        %v730 = vmul.f32 %v721, 1.442695
        %v731 = vpow.pop %v730
        %v732 = vmul.f32 %v722, 1.442695
        %v733 = vpow.pop %v732
        %v734 = vmul.f32 %v723, 1.442695
        %v735 = vpow.pop %v734
        %v736 = vmul.f32 %v724, 1.442695
        %v737 = vpow.pop %v736
        %v738 = vmul.f32 %v725, 1.442695
        %v739 = vpow.pop %v738
        %v740 = vmul.f32 %v726, 1.442695
        %v741 = vpow.pop %v740
        %v742 = vmul.f32 %v727, 1.442695
        %v743 = vpow.pop %v742
        %v744 = vsub.f32 0.0, %v729
        %v745 = vsub.f32 0.0, %v731
        %v746 = vsub.f32 0.0, %v733
        %v747 = vsub.f32 0.0, %v735
        %v748 = vsub.f32 0.0, %v737
        %v749 = vsub.f32 0.0, %v739
        %v750 = vsub.f32 0.0, %v741
        %v751 = vsub.f32 0.0, %v743
        %v752 = vld [vmem:[#allocation3] sm:$0xff]
        %v753 = vld [vmem:[#allocation3 + $0x8] sm:$0xff]
        %v754 = vld [vmem:[#allocation4] sm:$0xff]
        %v755 = vld [vmem:[#allocation4 + $0x8] sm:$0xff]
        %v756 = vld [vmem:[#allocation5] sm:$0xff]
        %v757 = vld [vmem:[#allocation5 + $0x8] sm:$0xff]
        %v760 = vrot.slane %v752, 1
        %v761 = vrot.slane %v752, 2
        %v762 = vrot.slane %v752, 3
        %v763 = vrot.slane %v752, 4
        %v764 = vrot.slane %v752, 5
        %v765 = vrot.slane %v752, 6
        %v766 = vrot.slane %v752, 7
        %v767 = vrot.slane %v753, 1
        %v768 = vrot.slane %v753, 2
        %v769 = vrot.slane %v753, 3
        %v770 = vrot.slane %v753, 4
        %v771 = vrot.slane %v753, 5
        %v772 = vrot.slane %v753, 6
        %v773 = vrot.slane %v753, 7
        %v774 = vperm.slane %v752, 0
        %v775 = vperm.slane %v760, 0
        %v776 = vperm.slane %v761, 0
        %v777 = vperm.slane %v762, 0
        %v778 = vperm.slane %v763, 0
        %v779 = vperm.slane %v764, 0
        %v780 = vperm.slane %v765, 0
        %v781 = vperm.slane %v766, 0
        %v782 = vperm.slane %v753, 0
        %v783 = vperm.slane %v767, 0
        %v784 = vperm.slane %v768, 0
        %v785 = vperm.slane %v769, 0
        %v786 = vperm.slane %v770, 0
        %v787 = vperm.slane %v771, 0
        %v788 = vperm.slane %v772, 0
        %v789 = vperm.slane %v773, 0
        %v806 = vmul.f32 %v774, %v744
        %v807 = vmul.f32 %v774, %v745
        %v808 = vmul.f32 %v774, %v746
        %v809 = vmul.f32 %v774, %v747
        %v810 = vmul.f32 %v774, %v748
        %v811 = vmul.f32 %v774, %v749
        %v812 = vmul.f32 %v774, %v750
        %v813 = vmul.f32 %v774, %v751
        %v814 = vmul.f32 %v775, %v744
        %v815 = vmul.f32 %v775, %v745
        %v816 = vmul.f32 %v775, %v746
        %v817 = vmul.f32 %v775, %v747
        %v818 = vmul.f32 %v775, %v748
        %v819 = vmul.f32 %v775, %v749
        %v820 = vmul.f32 %v775, %v750
        %v821 = vmul.f32 %v775, %v751
        %v822 = vmul.f32 %v776, %v744
        %v823 = vmul.f32 %v776, %v745
        %v824 = vmul.f32 %v776, %v746
        %v825 = vmul.f32 %v776, %v747
        %v826 = vmul.f32 %v776, %v748
        %v827 = vmul.f32 %v776, %v749
        %v828 = vmul.f32 %v776, %v750
        %v829 = vmul.f32 %v776, %v751
        %v830 = vmul.f32 %v777, %v744
        %v831 = vmul.f32 %v777, %v745
        %v832 = vmul.f32 %v777, %v746
        %v833 = vmul.f32 %v777, %v747
        %v834 = vmul.f32 %v777, %v748
        %v835 = vmul.f32 %v777, %v749
        %v836 = vmul.f32 %v777, %v750
        %v837 = vmul.f32 %v777, %v751
        %v838 = vmul.f32 %v778, %v744
        %v839 = vmul.f32 %v778, %v745
        %v840 = vmul.f32 %v778, %v746
        %v841 = vmul.f32 %v778, %v747
        %v842 = vmul.f32 %v778, %v748
        %v843 = vmul.f32 %v778, %v749
        %v844 = vmul.f32 %v778, %v750
        %v845 = vmul.f32 %v778, %v751
        %v846 = vmul.f32 %v779, %v744
        %v847 = vmul.f32 %v779, %v745
        %v848 = vmul.f32 %v779, %v746
        %v849 = vmul.f32 %v779, %v747
        %v850 = vmul.f32 %v779, %v748
        %v851 = vmul.f32 %v779, %v749
        %v852 = vmul.f32 %v779, %v750
        %v853 = vmul.f32 %v779, %v751
        %v854 = vmul.f32 %v780, %v744
        %v855 = vmul.f32 %v780, %v745
        %v856 = vmul.f32 %v780, %v746
        %v857 = vmul.f32 %v780, %v747
        %v858 = vmul.f32 %v780, %v748
        %v859 = vmul.f32 %v780, %v749
        %v860 = vmul.f32 %v780, %v750
        %v861 = vmul.f32 %v780, %v751
        %v862 = vmul.f32 %v781, %v744
        %v863 = vmul.f32 %v781, %v745
        %v864 = vmul.f32 %v781, %v746
        %v865 = vmul.f32 %v781, %v747
        %v866 = vmul.f32 %v781, %v748
        %v867 = vmul.f32 %v781, %v749
        %v868 = vmul.f32 %v781, %v750
        %v869 = vmul.f32 %v781, %v751
        %v870 = vmul.f32 %v782, %v744
        %v871 = vmul.f32 %v782, %v745
        %v872 = vmul.f32 %v782, %v746
        %v873 = vmul.f32 %v782, %v747
        %v874 = vmul.f32 %v782, %v748
        %v875 = vmul.f32 %v782, %v749
        %v876 = vmul.f32 %v782, %v750
        %v877 = vmul.f32 %v782, %v751
        %v878 = vmul.f32 %v783, %v744
        %v879 = vmul.f32 %v783, %v745
        %v880 = vmul.f32 %v783, %v746
        %v881 = vmul.f32 %v783, %v747
        %v882 = vmul.f32 %v783, %v748
        %v883 = vmul.f32 %v783, %v749
        %v884 = vmul.f32 %v783, %v750
        %v885 = vmul.f32 %v783, %v751
        %v886 = vmul.f32 %v784, %v744
        %v887 = vmul.f32 %v784, %v745
        %v888 = vmul.f32 %v784, %v746
        %v889 = vmul.f32 %v784, %v747
        %v890 = vmul.f32 %v784, %v748
        %v891 = vmul.f32 %v784, %v749
        %v892 = vmul.f32 %v784, %v750
        %v893 = vmul.f32 %v784, %v751
        %v894 = vmul.f32 %v785, %v744
        %v895 = vmul.f32 %v785, %v745
        %v896 = vmul.f32 %v785, %v746
        %v897 = vmul.f32 %v785, %v747
        %v898 = vmul.f32 %v785, %v748
        %v899 = vmul.f32 %v785, %v749
        %v900 = vmul.f32 %v785, %v750
        %v901 = vmul.f32 %v785, %v751
        %v902 = vmul.f32 %v786, %v744
        %v903 = vmul.f32 %v786, %v745
        %v904 = vmul.f32 %v786, %v746
        %v905 = vmul.f32 %v786, %v747
        %v906 = vmul.f32 %v786, %v748
        %v907 = vmul.f32 %v786, %v749
        %v908 = vmul.f32 %v786, %v750
        %v909 = vmul.f32 %v786, %v751
        %v910 = vmul.f32 %v787, %v744
        %v911 = vmul.f32 %v787, %v745
        %v912 = vmul.f32 %v787, %v746
        %v913 = vmul.f32 %v787, %v747
        %v914 = vmul.f32 %v787, %v748
        %v915 = vmul.f32 %v787, %v749
        %v916 = vmul.f32 %v787, %v750
        %v917 = vmul.f32 %v787, %v751
        %v918 = vmul.f32 %v788, %v744
        %v919 = vmul.f32 %v788, %v745
        %v920 = vmul.f32 %v788, %v746
        %v921 = vmul.f32 %v788, %v747
        %v922 = vmul.f32 %v788, %v748
        %v923 = vmul.f32 %v788, %v749
        %v924 = vmul.f32 %v788, %v750
        %v925 = vmul.f32 %v788, %v751
        %v926 = vmul.f32 %v789, %v744
        %v927 = vmul.f32 %v789, %v745
        %v928 = vmul.f32 %v789, %v746
        %v929 = vmul.f32 %v789, %v747
        %v930 = vmul.f32 %v789, %v748
        %v931 = vmul.f32 %v789, %v749
        %v932 = vmul.f32 %v789, %v750
        %v933 = vmul.f32 %v789, %v751
        %v934 = vmul.f32 %v806, 1.442695
        %v935 = vpow.pop %v934
        %v936 = vmul.f32 %v807, 1.442695
        %v937 = vpow.pop %v936
        %v938 = vmul.f32 %v808, 1.442695
        %v939 = vpow.pop %v938
        %v940 = vmul.f32 %v809, 1.442695
        %v941 = vpow.pop %v940
        %v942 = vmul.f32 %v810, 1.442695
        %v943 = vpow.pop %v942
        %v944 = vmul.f32 %v811, 1.442695
        %v945 = vpow.pop %v944
        %v946 = vmul.f32 %v812, 1.442695
        %v947 = vpow.pop %v946
        %v948 = vmul.f32 %v813, 1.442695
        %v949 = vpow.pop %v948
        %v950 = vmul.f32 %v814, 1.442695
        %v951 = vpow.pop %v950
        %v952 = vmul.f32 %v815, 1.442695
        %v953 = vpow.pop %v952
        %v954 = vmul.f32 %v816, 1.442695
        %v955 = vpow.pop %v954
        %v956 = vmul.f32 %v817, 1.442695
        %v957 = vpow.pop %v956
        %v958 = vmul.f32 %v818, 1.442695
        %v959 = vpow.pop %v958
        %v960 = vmul.f32 %v819, 1.442695
        %v961 = vpow.pop %v960
        %v962 = vmul.f32 %v820, 1.442695
        %v963 = vpow.pop %v962
        %v964 = vmul.f32 %v821, 1.442695
        %v965 = vpow.pop %v964
        %v966 = vmul.f32 %v822, 1.442695
        %v967 = vpow.pop %v966
        %v968 = vmul.f32 %v823, 1.442695
        %v969 = vpow.pop %v968
        %v970 = vmul.f32 %v824, 1.442695
        %v971 = vpow.pop %v970
        %v972 = vmul.f32 %v825, 1.442695
        %v973 = vpow.pop %v972
        %v974 = vmul.f32 %v826, 1.442695
        %v975 = vpow.pop %v974
        %v976 = vmul.f32 %v827, 1.442695
        %v977 = vpow.pop %v976
        %v978 = vmul.f32 %v828, 1.442695
        %v979 = vpow.pop %v978
        %v980 = vmul.f32 %v829, 1.442695
        %v981 = vpow.pop %v980
        %v982 = vmul.f32 %v830, 1.442695
        %v983 = vpow.pop %v982
        %v984 = vmul.f32 %v831, 1.442695
        %v985 = vpow.pop %v984
        %v986 = vmul.f32 %v832, 1.442695
        %v987 = vpow.pop %v986
        %v988 = vmul.f32 %v833, 1.442695
        %v989 = vpow.pop %v988
        %v990 = vmul.f32 %v834, 1.442695
        %v991 = vpow.pop %v990
        %v992 = vmul.f32 %v835, 1.442695
        %v993 = vpow.pop %v992
        %v994 = vmul.f32 %v836, 1.442695
        %v995 = vpow.pop %v994
        %v996 = vmul.f32 %v837, 1.442695
        %v997 = vpow.pop %v996
        %v998 = vmul.f32 %v838, 1.442695
        %v999 = vpow.pop %v998
        %v1000 = vmul.f32 %v839, 1.442695
        %v1001 = vpow.pop %v1000
        %v1002 = vmul.f32 %v840, 1.442695
        %v1003 = vpow.pop %v1002
        %v1004 = vmul.f32 %v841, 1.442695
        %v1005 = vpow.pop %v1004
        %v1006 = vmul.f32 %v842, 1.442695
        %v1007 = vpow.pop %v1006
        %v1008 = vmul.f32 %v843, 1.442695
        %v1009 = vpow.pop %v1008
        %v1010 = vmul.f32 %v844, 1.442695
        %v1011 = vpow.pop %v1010
        %v1012 = vmul.f32 %v845, 1.442695
        %v1013 = vpow.pop %v1012
        %v1014 = vmul.f32 %v846, 1.442695
        %v1015 = vpow.pop %v1014
        %v1016 = vmul.f32 %v847, 1.442695
        %v1017 = vpow.pop %v1016
        %v1018 = vmul.f32 %v848, 1.442695
        %v1019 = vpow.pop %v1018
        %v1020 = vmul.f32 %v849, 1.442695
        %v1021 = vpow.pop %v1020
        %v1022 = vmul.f32 %v850, 1.442695
        %v1023 = vpow.pop %v1022
        %v1024 = vmul.f32 %v851, 1.442695
        %v1025 = vpow.pop %v1024
        %v1026 = vmul.f32 %v852, 1.442695
        %v1027 = vpow.pop %v1026
        %v1028 = vmul.f32 %v853, 1.442695
        %v1029 = vpow.pop %v1028
        %v1030 = vmul.f32 %v854, 1.442695
        %v1031 = vpow.pop %v1030
        %v1032 = vmul.f32 %v855, 1.442695
        %v1033 = vpow.pop %v1032
        %v1034 = vmul.f32 %v856, 1.442695
        %v1035 = vpow.pop %v1034
        %v1036 = vmul.f32 %v857, 1.442695
        %v1037 = vpow.pop %v1036
        %v1038 = vmul.f32 %v858, 1.442695
        %v1039 = vpow.pop %v1038
        %v1040 = vmul.f32 %v859, 1.442695
        %v1041 = vpow.pop %v1040
        %v1042 = vmul.f32 %v860, 1.442695
        %v1043 = vpow.pop %v1042
        %v1044 = vmul.f32 %v861, 1.442695
        %v1045 = vpow.pop %v1044
        %v1046 = vmul.f32 %v862, 1.442695
        %v1047 = vpow.pop %v1046
        %v1048 = vmul.f32 %v863, 1.442695
        %v1049 = vpow.pop %v1048
        %v1050 = vmul.f32 %v864, 1.442695
        %v1051 = vpow.pop %v1050
        %v1052 = vmul.f32 %v865, 1.442695
        %v1053 = vpow.pop %v1052
        %v1054 = vmul.f32 %v866, 1.442695
        %v1055 = vpow.pop %v1054
        %v1056 = vmul.f32 %v867, 1.442695
        %v1057 = vpow.pop %v1056
        %v1058 = vmul.f32 %v868, 1.442695
        %v1059 = vpow.pop %v1058
        %v1060 = vmul.f32 %v869, 1.442695
        %v1061 = vpow.pop %v1060
        %v1062 = vmul.f32 %v870, 1.442695
        %v1063 = vpow.pop %v1062
        %v1064 = vmul.f32 %v871, 1.442695
        %v1065 = vpow.pop %v1064
        %v1066 = vmul.f32 %v872, 1.442695
        %v1067 = vpow.pop %v1066
        %v1068 = vmul.f32 %v873, 1.442695
        %v1069 = vpow.pop %v1068
        %v1070 = vmul.f32 %v874, 1.442695
        %v1071 = vpow.pop %v1070
        %v1072 = vmul.f32 %v875, 1.442695
        %v1073 = vpow.pop %v1072
        %v1074 = vmul.f32 %v876, 1.442695
        %v1075 = vpow.pop %v1074
        %v1076 = vmul.f32 %v877, 1.442695
        %v1077 = vpow.pop %v1076
        %v1078 = vmul.f32 %v878, 1.442695
        %v1079 = vpow.pop %v1078
        %v1080 = vmul.f32 %v879, 1.442695
        %v1081 = vpow.pop %v1080
        %v1082 = vmul.f32 %v880, 1.442695
        %v1083 = vpow.pop %v1082
        %v1084 = vmul.f32 %v881, 1.442695
        %v1085 = vpow.pop %v1084
        %v1086 = vmul.f32 %v882, 1.442695
        %v1087 = vpow.pop %v1086
        %v1088 = vmul.f32 %v883, 1.442695
        %v1089 = vpow.pop %v1088
        %v1090 = vmul.f32 %v884, 1.442695
        %v1091 = vpow.pop %v1090
        %v1092 = vmul.f32 %v885, 1.442695
        %v1093 = vpow.pop %v1092
        %v1094 = vmul.f32 %v886, 1.442695
        %v1095 = vpow.pop %v1094
        %v1096 = vmul.f32 %v887, 1.442695
        %v1097 = vpow.pop %v1096
        %v1098 = vmul.f32 %v888, 1.442695
        %v1099 = vpow.pop %v1098
        %v1100 = vmul.f32 %v889, 1.442695
        %v1101 = vpow.pop %v1100
        %v1102 = vmul.f32 %v890, 1.442695
        %v1103 = vpow.pop %v1102
        %v1104 = vmul.f32 %v891, 1.442695
        %v1105 = vpow.pop %v1104
        %v1106 = vmul.f32 %v892, 1.442695
        %v1107 = vpow.pop %v1106
        %v1108 = vmul.f32 %v893, 1.442695
        %v1109 = vpow.pop %v1108
        %v1110 = vmul.f32 %v894, 1.442695
        %v1111 = vpow.pop %v1110
        %v1112 = vmul.f32 %v895, 1.442695
        %v1113 = vpow.pop %v1112
        %v1114 = vmul.f32 %v896, 1.442695
        %v1115 = vpow.pop %v1114
        %v1116 = vmul.f32 %v897, 1.442695
        %v1117 = vpow.pop %v1116
        %v1118 = vmul.f32 %v898, 1.442695
        %v1119 = vpow.pop %v1118
        %v1120 = vmul.f32 %v899, 1.442695
        %v1121 = vpow.pop %v1120
        %v1122 = vmul.f32 %v900, 1.442695
        %v1123 = vpow.pop %v1122
        %v1124 = vmul.f32 %v901, 1.442695
        %v1125 = vpow.pop %v1124
        %v1126 = vmul.f32 %v902, 1.442695
        %v1127 = vpow.pop %v1126
        %v1128 = vmul.f32 %v903, 1.442695
        %v1129 = vpow.pop %v1128
        %v1130 = vmul.f32 %v904, 1.442695
        %v1131 = vpow.pop %v1130
        %v1132 = vmul.f32 %v905, 1.442695
        %v1133 = vpow.pop %v1132
        %v1134 = vmul.f32 %v906, 1.442695
        %v1135 = vpow.pop %v1134
        %v1136 = vmul.f32 %v907, 1.442695
        %v1137 = vpow.pop %v1136
        %v1138 = vmul.f32 %v908, 1.442695
        %v1139 = vpow.pop %v1138
        %v1140 = vmul.f32 %v909, 1.442695
        %v1141 = vpow.pop %v1140
        %v1142 = vmul.f32 %v910, 1.442695
        %v1143 = vpow.pop %v1142
        %v1144 = vmul.f32 %v911, 1.442695
        %v1145 = vpow.pop %v1144
        %v1146 = vmul.f32 %v912, 1.442695
        %v1147 = vpow.pop %v1146
        %v1148 = vmul.f32 %v913, 1.442695
        %v1149 = vpow.pop %v1148
        %v1150 = vmul.f32 %v914, 1.442695
        %v1151 = vpow.pop %v1150
        %v1152 = vmul.f32 %v915, 1.442695
        %v1153 = vpow.pop %v1152
        %v1154 = vmul.f32 %v916, 1.442695
        %v1155 = vpow.pop %v1154
        %v1156 = vmul.f32 %v917, 1.442695
        %v1157 = vpow.pop %v1156
        %v1158 = vmul.f32 %v918, 1.442695
        %v1159 = vpow.pop %v1158
        %v1160 = vmul.f32 %v919, 1.442695
        %v1161 = vpow.pop %v1160
        %v1162 = vmul.f32 %v920, 1.442695
        %v1163 = vpow.pop %v1162
        %v1164 = vmul.f32 %v921, 1.442695
        %v1165 = vpow.pop %v1164
        %v1166 = vmul.f32 %v922, 1.442695
        %v1167 = vpow.pop %v1166
        %v1168 = vmul.f32 %v923, 1.442695
        %v1169 = vpow.pop %v1168
        %v1170 = vmul.f32 %v924, 1.442695
        %v1171 = vpow.pop %v1170
        %v1172 = vmul.f32 %v925, 1.442695
        %v1173 = vpow.pop %v1172
        %v1174 = vmul.f32 %v926, 1.442695
        %v1175 = vpow.pop %v1174
        %v1176 = vmul.f32 %v927, 1.442695
        %v1177 = vpow.pop %v1176
        %v1178 = vmul.f32 %v928, 1.442695
        %v1179 = vpow.pop %v1178
        %v1180 = vmul.f32 %v929, 1.442695
        %v1181 = vpow.pop %v1180
        %v1182 = vmul.f32 %v930, 1.442695
        %v1183 = vpow.pop %v1182
        %v1184 = vmul.f32 %v931, 1.442695
        %v1185 = vpow.pop %v1184
        %v1186 = vmul.f32 %v932, 1.442695
        %v1187 = vpow.pop %v1186
        %v1188 = vmul.f32 %v933, 1.442695
        %v1189 = vpow.pop %v1188
        %s1190 = smul.u32 0, 64
        %s1191 = scalar_lea.vmem [#allocation8], %s1190
        %1192 = vst.msk [vmem:[%s1191] sm:$0xff] %vm549, %v935
        %1193 = vst.msk [vmem:[%s1191 + $0x8] sm:$0xff] %vm549, %v937
        %1194 = vst.msk [vmem:[%s1191 + $0x10] sm:$0xff] %vm549, %v939
        %1195 = vst.msk [vmem:[%s1191 + $0x18] sm:$0xff] %vm549, %v941
        %1196 = vst.msk [vmem:[%s1191 + $0x20] sm:$0xff] %vm549, %v943
        %1197 = vst.msk [vmem:[%s1191 + $0x28] sm:$0xff] %vm549, %v945
        %1198 = vst.msk [vmem:[%s1191 + $0x30] sm:$0xff] %vm549, %v947
        %1199 = vst.msk [vmem:[%s1191 + $0x38] sm:$0xff] %vm549, %v949
        %1200 = vst.msk [vmem:[%s1191 + $0x40] sm:$0xff] %vm549, %v951
        %1201 = vst.msk [vmem:[%s1191 + $0x48] sm:$0xff] %vm549, %v953
        %1202 = vst.msk [vmem:[%s1191 + $0x50] sm:$0xff] %vm549, %v955
        %1203 = vst.msk [vmem:[%s1191 + $0x58] sm:$0xff] %vm549, %v957
        %1204 = vst.msk [vmem:[%s1191 + $0x60] sm:$0xff] %vm549, %v959
        %1205 = vst.msk [vmem:[%s1191 + $0x68] sm:$0xff] %vm549, %v961
        %1206 = vst.msk [vmem:[%s1191 + $0x70] sm:$0xff] %vm549, %v963
        %1207 = vst.msk [vmem:[%s1191 + $0x78] sm:$0xff] %vm549, %v965
        %1208 = vst.msk [vmem:[%s1191 + $0x80] sm:$0xff] %vm549, %v967
        %1209 = vst.msk [vmem:[%s1191 + $0x88] sm:$0xff] %vm549, %v969
        %1210 = vst.msk [vmem:[%s1191 + $0x90] sm:$0xff] %vm549, %v971
        %1211 = vst.msk [vmem:[%s1191 + $0x98] sm:$0xff] %vm549, %v973
        %1212 = vst.msk [vmem:[%s1191 + $0xa0] sm:$0xff] %vm549, %v975
        %1213 = vst.msk [vmem:[%s1191 + $0xa8] sm:$0xff] %vm549, %v977
        %1214 = vst.msk [vmem:[%s1191 + $0xb0] sm:$0xff] %vm549, %v979
        %1215 = vst.msk [vmem:[%s1191 + $0xb8] sm:$0xff] %vm549, %v981
        %1216 = vst.msk [vmem:[%s1191 + $0xc0] sm:$0xff] %vm549, %v983
        %1217 = vst.msk [vmem:[%s1191 + $0xc8] sm:$0xff] %vm549, %v985
        %1218 = vst.msk [vmem:[%s1191 + $0xd0] sm:$0xff] %vm549, %v987
        %1219 = vst.msk [vmem:[%s1191 + $0xd8] sm:$0xff] %vm549, %v989
        %1220 = vst.msk [vmem:[%s1191 + $0xe0] sm:$0xff] %vm549, %v991
        %1221 = vst.msk [vmem:[%s1191 + $0xe8] sm:$0xff] %vm549, %v993
        %1222 = vst.msk [vmem:[%s1191 + $0xf0] sm:$0xff] %vm549, %v995
        %1223 = vst.msk [vmem:[%s1191 + $0xf8] sm:$0xff] %vm549, %v997
        %1224 = vst.msk [vmem:[%s1191 + $0x100] sm:$0xff] %vm549, %v999
        %1225 = vst.msk [vmem:[%s1191 + $0x108] sm:$0xff] %vm549, %v1001
        %1226 = vst.msk [vmem:[%s1191 + $0x110] sm:$0xff] %vm549, %v1003
        %1227 = vst.msk [vmem:[%s1191 + $0x118] sm:$0xff] %vm549, %v1005
        %1228 = vst.msk [vmem:[%s1191 + $0x120] sm:$0xff] %vm549, %v1007
        %1229 = vst.msk [vmem:[%s1191 + $0x128] sm:$0xff] %vm549, %v1009
        %1230 = vst.msk [vmem:[%s1191 + $0x130] sm:$0xff] %vm549, %v1011
        %1231 = vst.msk [vmem:[%s1191 + $0x138] sm:$0xff] %vm549, %v1013
        %1232 = vst.msk [vmem:[%s1191 + $0x140] sm:$0xff] %vm549, %v1015
        %1233 = vst.msk [vmem:[%s1191 + $0x148] sm:$0xff] %vm549, %v1017
        %1234 = vst.msk [vmem:[%s1191 + $0x150] sm:$0xff] %vm549, %v1019
        %1235 = vst.msk [vmem:[%s1191 + $0x158] sm:$0xff] %vm549, %v1021
        %1236 = vst.msk [vmem:[%s1191 + $0x160] sm:$0xff] %vm549, %v1023
        %1237 = vst.msk [vmem:[%s1191 + $0x168] sm:$0xff] %vm549, %v1025
        %1238 = vst.msk [vmem:[%s1191 + $0x170] sm:$0xff] %vm549, %v1027
        %1239 = vst.msk [vmem:[%s1191 + $0x178] sm:$0xff] %vm549, %v1029
        %1240 = vst.msk [vmem:[%s1191 + $0x180] sm:$0xff] %vm549, %v1031
        %1241 = vst.msk [vmem:[%s1191 + $0x188] sm:$0xff] %vm549, %v1033
        %1242 = vst.msk [vmem:[%s1191 + $0x190] sm:$0xff] %vm549, %v1035
        %1243 = vst.msk [vmem:[%s1191 + $0x198] sm:$0xff] %vm549, %v1037
        %1244 = vst.msk [vmem:[%s1191 + $0x1a0] sm:$0xff] %vm549, %v1039
        %1245 = vst.msk [vmem:[%s1191 + $0x1a8] sm:$0xff] %vm549, %v1041
        %1246 = vst.msk [vmem:[%s1191 + $0x1b0] sm:$0xff] %vm549, %v1043
        %1247 = vst.msk [vmem:[%s1191 + $0x1b8] sm:$0xff] %vm549, %v1045
        %1248 = vst.msk [vmem:[%s1191 + $0x1c0] sm:$0xff] %vm549, %v1047
        %1249 = vst.msk [vmem:[%s1191 + $0x1c8] sm:$0xff] %vm549, %v1049
        %1250 = vst.msk [vmem:[%s1191 + $0x1d0] sm:$0xff] %vm549, %v1051
        %1251 = vst.msk [vmem:[%s1191 + $0x1d8] sm:$0xff] %vm549, %v1053
        %1252 = vst.msk [vmem:[%s1191 + $0x1e0] sm:$0xff] %vm549, %v1055
        %1253 = vst.msk [vmem:[%s1191 + $0x1e8] sm:$0xff] %vm549, %v1057
        %1254 = vst.msk [vmem:[%s1191 + $0x1f0] sm:$0xff] %vm549, %v1059
        %1255 = vst.msk [vmem:[%s1191 + $0x1f8] sm:$0xff] %vm549, %v1061
        %1256 = vst.msk [vmem:[%s1191 + $0x200] sm:$0xff] %vm549, %v1063
        %1257 = vst.msk [vmem:[%s1191 + $0x208] sm:$0xff] %vm549, %v1065
        %1258 = vst.msk [vmem:[%s1191 + $0x210] sm:$0xff] %vm549, %v1067
        %1259 = vst.msk [vmem:[%s1191 + $0x218] sm:$0xff] %vm549, %v1069
        %1260 = vst.msk [vmem:[%s1191 + $0x220] sm:$0xff] %vm549, %v1071
        %1261 = vst.msk [vmem:[%s1191 + $0x228] sm:$0xff] %vm549, %v1073
        %1262 = vst.msk [vmem:[%s1191 + $0x230] sm:$0xff] %vm549, %v1075
        %1263 = vst.msk [vmem:[%s1191 + $0x238] sm:$0xff] %vm549, %v1077
        %1264 = vst.msk [vmem:[%s1191 + $0x240] sm:$0xff] %vm549, %v1079
        %1265 = vst.msk [vmem:[%s1191 + $0x248] sm:$0xff] %vm549, %v1081
        %1266 = vst.msk [vmem:[%s1191 + $0x250] sm:$0xff] %vm549, %v1083
        %1267 = vst.msk [vmem:[%s1191 + $0x258] sm:$0xff] %vm549, %v1085
        %1268 = vst.msk [vmem:[%s1191 + $0x260] sm:$0xff] %vm549, %v1087
        %1269 = vst.msk [vmem:[%s1191 + $0x268] sm:$0xff] %vm549, %v1089
        %1270 = vst.msk [vmem:[%s1191 + $0x270] sm:$0xff] %vm549, %v1091
        %1271 = vst.msk [vmem:[%s1191 + $0x278] sm:$0xff] %vm549, %v1093
        %1272 = vst.msk [vmem:[%s1191 + $0x280] sm:$0xff] %vm549, %v1095
        %1273 = vst.msk [vmem:[%s1191 + $0x288] sm:$0xff] %vm549, %v1097
        %1274 = vst.msk [vmem:[%s1191 + $0x290] sm:$0xff] %vm549, %v1099
        %1275 = vst.msk [vmem:[%s1191 + $0x298] sm:$0xff] %vm549, %v1101
        %1276 = vst.msk [vmem:[%s1191 + $0x2a0] sm:$0xff] %vm549, %v1103
        %1277 = vst.msk [vmem:[%s1191 + $0x2a8] sm:$0xff] %vm549, %v1105
        %1278 = vst.msk [vmem:[%s1191 + $0x2b0] sm:$0xff] %vm549, %v1107
        %1279 = vst.msk [vmem:[%s1191 + $0x2b8] sm:$0xff] %vm549, %v1109
        %1280 = vst.msk [vmem:[%s1191 + $0x2c0] sm:$0xff] %vm549, %v1111
        %1281 = vst.msk [vmem:[%s1191 + $0x2c8] sm:$0xff] %vm549, %v1113
        %1282 = vst.msk [vmem:[%s1191 + $0x2d0] sm:$0xff] %vm549, %v1115
        %1283 = vst.msk [vmem:[%s1191 + $0x2d8] sm:$0xff] %vm549, %v1117
        %1284 = vst.msk [vmem:[%s1191 + $0x2e0] sm:$0xff] %vm549, %v1119
        %1285 = vst.msk [vmem:[%s1191 + $0x2e8] sm:$0xff] %vm549, %v1121
        %1286 = vst.msk [vmem:[%s1191 + $0x2f0] sm:$0xff] %vm549, %v1123
        %1287 = vst.msk [vmem:[%s1191 + $0x2f8] sm:$0xff] %vm549, %v1125
        %1288 = vst.msk [vmem:[%s1191 + $0x300] sm:$0xff] %vm549, %v1127
        %1289 = vst.msk [vmem:[%s1191 + $0x308] sm:$0xff] %vm549, %v1129
        %1290 = vst.msk [vmem:[%s1191 + $0x310] sm:$0xff] %vm549, %v1131
        %1291 = vst.msk [vmem:[%s1191 + $0x318] sm:$0xff] %vm549, %v1133
        %1292 = vst.msk [vmem:[%s1191 + $0x320] sm:$0xff] %vm549, %v1135
        %1293 = vst.msk [vmem:[%s1191 + $0x328] sm:$0xff] %vm549, %v1137
        %1294 = vst.msk [vmem:[%s1191 + $0x330] sm:$0xff] %vm549, %v1139
        %1295 = vst.msk [vmem:[%s1191 + $0x338] sm:$0xff] %vm549, %v1141
        %1296 = vst.msk [vmem:[%s1191 + $0x340] sm:$0xff] %vm549, %v1143
        %1297 = vst.msk [vmem:[%s1191 + $0x348] sm:$0xff] %vm549, %v1145
        %1298 = vst.msk [vmem:[%s1191 + $0x350] sm:$0xff] %vm549, %v1147
        %1299 = vst.msk [vmem:[%s1191 + $0x358] sm:$0xff] %vm549, %v1149
        %1300 = vst.msk [vmem:[%s1191 + $0x360] sm:$0xff] %vm549, %v1151
        %1301 = vst.msk [vmem:[%s1191 + $0x368] sm:$0xff] %vm549, %v1153
        %1302 = vst.msk [vmem:[%s1191 + $0x370] sm:$0xff] %vm549, %v1155
        %1303 = vst.msk [vmem:[%s1191 + $0x378] sm:$0xff] %vm549, %v1157
        %1304 = vst.msk [vmem:[%s1191 + $0x380] sm:$0xff] %vm549, %v1159
        %1305 = vst.msk [vmem:[%s1191 + $0x388] sm:$0xff] %vm549, %v1161
        %1306 = vst.msk [vmem:[%s1191 + $0x390] sm:$0xff] %vm549, %v1163
        %1307 = vst.msk [vmem:[%s1191 + $0x398] sm:$0xff] %vm549, %v1165
        %1308 = vst.msk [vmem:[%s1191 + $0x3a0] sm:$0xff] %vm549, %v1167
        %1309 = vst.msk [vmem:[%s1191 + $0x3a8] sm:$0xff] %vm549, %v1169
        %1310 = vst.msk [vmem:[%s1191 + $0x3b0] sm:$0xff] %vm549, %v1171
        %1311 = vst.msk [vmem:[%s1191 + $0x3b8] sm:$0xff] %vm549, %v1173
        %1312 = vst.msk [vmem:[%s1191 + $0x3c0] sm:$0xff] %vm549, %v1175
        %1313 = vst.msk [vmem:[%s1191 + $0x3c8] sm:$0xff] %vm549, %v1177
        %1314 = vst.msk [vmem:[%s1191 + $0x3d0] sm:$0xff] %vm549, %v1179
        %1315 = vst.msk [vmem:[%s1191 + $0x3d8] sm:$0xff] %vm549, %v1181
        %1316 = vst.msk [vmem:[%s1191 + $0x3e0] sm:$0xff] %vm549, %v1183
        %1317 = vst.msk [vmem:[%s1191 + $0x3e8] sm:$0xff] %vm549, %v1185
        %1318 = vst.msk [vmem:[%s1191 + $0x3f0] sm:$0xff] %vm549, %v1187
        %1319 = vst.msk [vmem:[%s1191 + $0x3f8] sm:$0xff] %vm549, %v1189
        %v1322 = vrot.slane %v754, 1
        %v1323 = vrot.slane %v754, 2
        %v1324 = vrot.slane %v754, 3
        %v1325 = vrot.slane %v754, 4
        %v1326 = vrot.slane %v754, 5
        %v1327 = vrot.slane %v754, 6
        %v1328 = vrot.slane %v754, 7
        %v1329 = vrot.slane %v755, 1
        %v1330 = vrot.slane %v755, 2
        %v1331 = vrot.slane %v755, 3
        %v1332 = vrot.slane %v755, 4
        %v1333 = vrot.slane %v755, 5
        %v1334 = vrot.slane %v755, 6
        %v1335 = vrot.slane %v755, 7
        %v1336 = vperm.slane %v756, 0
        %v1337 = vlaneseq
        %v1338 = vshrl.u32 %v1337, 7
        %1340 = vset.pattern.permute.xlu0 %v1338
        %1341 = vperm.xlu0 %1340, %v1336
        %v1342 = vpop.permute.xlu0 %1341
        %v1343 = vlaneseq
        %v1344 = vshrl.u32 %v1343, 7
        %v1345 = vadd.s32 %v1344, 8
        %1346 = vset.pattern.permute.xlu0 %v1345
        %1347 = vperm.xlu0 %1346, %v1336
        %v1348 = vpop.permute.xlu0 %1347
        %v1349 = vlaneseq
        %v1350 = vshrl.u32 %v1349, 7
        %v1351 = vadd.s32 %v1350, 16
        %1352 = vset.pattern.permute.xlu0 %v1351
        %1353 = vperm.xlu0 %1352, %v1336
        %v1354 = vpop.permute.xlu0 %1353
        %v1355 = vlaneseq
        %v1356 = vshrl.u32 %v1355, 7
        %v1357 = vadd.s32 %v1356, 24
        %1358 = vset.pattern.permute.xlu0 %v1357
        %1359 = vperm.xlu0 %1358, %v1336
        %v1360 = vpop.permute.xlu0 %1359
        %v1361 = vlaneseq
        %v1362 = vshrl.u32 %v1361, 7
        %v1363 = vadd.s32 %v1362, 32
        %1364 = vset.pattern.permute.xlu0 %v1363
        %1365 = vperm.xlu0 %1364, %v1336
        %v1366 = vpop.permute.xlu0 %1365
        %v1367 = vlaneseq
        %v1368 = vshrl.u32 %v1367, 7
        %v1369 = vadd.s32 %v1368, 40
        %1370 = vset.pattern.permute.xlu0 %v1369
        %1371 = vperm.xlu0 %1370, %v1336
        %v1372 = vpop.permute.xlu0 %1371
        %v1373 = vlaneseq
        %v1374 = vshrl.u32 %v1373, 7
        %v1375 = vadd.s32 %v1374, 48
        %1376 = vset.pattern.permute.xlu0 %v1375
        %1377 = vperm.xlu0 %1376, %v1336
        %v1378 = vpop.permute.xlu0 %1377
        %v1379 = vlaneseq
        %v1380 = vshrl.u32 %v1379, 7
        %v1381 = vadd.s32 %v1380, 56
        %1382 = vset.pattern.permute.xlu0 %v1381
        %1383 = vperm.xlu0 %1382, %v1336
        %v1384 = vpop.permute.xlu0 %1383
        %v1385 = vperm.slane %v756, 1
        %v1386 = vlaneseq
        %v1387 = vshrl.u32 %v1386, 7
        %1389 = vset.pattern.permute.xlu0 %v1387
        %1390 = vperm.xlu0 %1389, %v1385
        %v1391 = vpop.permute.xlu0 %1390
        %v1392 = vlaneseq
        %v1393 = vshrl.u32 %v1392, 7
        %v1394 = vadd.s32 %v1393, 8
        %1395 = vset.pattern.permute.xlu0 %v1394
        %1396 = vperm.xlu0 %1395, %v1385
        %v1397 = vpop.permute.xlu0 %1396
        %v1398 = vlaneseq
        %v1399 = vshrl.u32 %v1398, 7
        %v1400 = vadd.s32 %v1399, 16
        %1401 = vset.pattern.permute.xlu0 %v1400
        %1402 = vperm.xlu0 %1401, %v1385
        %v1403 = vpop.permute.xlu0 %1402
        %v1404 = vlaneseq
        %v1405 = vshrl.u32 %v1404, 7
        %v1406 = vadd.s32 %v1405, 24
        %1407 = vset.pattern.permute.xlu0 %v1406
        %1408 = vperm.xlu0 %1407, %v1385
        %v1409 = vpop.permute.xlu0 %1408
        %v1410 = vlaneseq
        %v1411 = vshrl.u32 %v1410, 7
        %v1412 = vadd.s32 %v1411, 32
        %1413 = vset.pattern.permute.xlu0 %v1412
        %1414 = vperm.xlu0 %1413, %v1385
        %v1415 = vpop.permute.xlu0 %1414
        %v1416 = vlaneseq
        %v1417 = vshrl.u32 %v1416, 7
        %v1418 = vadd.s32 %v1417, 40
        %1419 = vset.pattern.permute.xlu0 %v1418
        %1420 = vperm.xlu0 %1419, %v1385
        %v1421 = vpop.permute.xlu0 %1420
        %v1422 = vlaneseq
        %v1423 = vshrl.u32 %v1422, 7
        %v1424 = vadd.s32 %v1423, 48
        %1425 = vset.pattern.permute.xlu0 %v1424
        %1426 = vperm.xlu0 %1425, %v1385
        %v1427 = vpop.permute.xlu0 %1426
        %v1428 = vlaneseq
        %v1429 = vshrl.u32 %v1428, 7
        %v1430 = vadd.s32 %v1429, 56
        %1431 = vset.pattern.permute.xlu0 %v1430
        %1432 = vperm.xlu0 %1431, %v1385
        %v1433 = vpop.permute.xlu0 %1432
        %v1434 = vperm.slane %v756, 2
        %v1435 = vlaneseq
        %v1436 = vshrl.u32 %v1435, 7
        %1438 = vset.pattern.permute.xlu0 %v1436
        %1439 = vperm.xlu0 %1438, %v1434
        %v1440 = vpop.permute.xlu0 %1439
        %v1441 = vlaneseq
        %v1442 = vshrl.u32 %v1441, 7
        %v1443 = vadd.s32 %v1442, 8
        %1444 = vset.pattern.permute.xlu0 %v1443
        %1445 = vperm.xlu0 %1444, %v1434
        %v1446 = vpop.permute.xlu0 %1445
        %v1447 = vlaneseq
        %v1448 = vshrl.u32 %v1447, 7
        %v1449 = vadd.s32 %v1448, 16
        %1450 = vset.pattern.permute.xlu0 %v1449
        %1451 = vperm.xlu0 %1450, %v1434
        %v1452 = vpop.permute.xlu0 %1451
        %v1453 = vlaneseq
        %v1454 = vshrl.u32 %v1453, 7
        %v1455 = vadd.s32 %v1454, 24
        %1456 = vset.pattern.permute.xlu0 %v1455
        %1457 = vperm.xlu0 %1456, %v1434
        %v1458 = vpop.permute.xlu0 %1457
        %v1459 = vlaneseq
        %v1460 = vshrl.u32 %v1459, 7
        %v1461 = vadd.s32 %v1460, 32
        %1462 = vset.pattern.permute.xlu0 %v1461
        %1463 = vperm.xlu0 %1462, %v1434
        %v1464 = vpop.permute.xlu0 %1463
        %v1465 = vlaneseq
        %v1466 = vshrl.u32 %v1465, 7
        %v1467 = vadd.s32 %v1466, 40
        %1468 = vset.pattern.permute.xlu0 %v1467
        %1469 = vperm.xlu0 %1468, %v1434
        %v1470 = vpop.permute.xlu0 %1469
        %v1471 = vlaneseq
        %v1472 = vshrl.u32 %v1471, 7
        %v1473 = vadd.s32 %v1472, 48
        %1474 = vset.pattern.permute.xlu0 %v1473
        %1475 = vperm.xlu0 %1474, %v1434
        %v1476 = vpop.permute.xlu0 %1475
        %v1477 = vlaneseq
        %v1478 = vshrl.u32 %v1477, 7
        %v1479 = vadd.s32 %v1478, 56
        %1480 = vset.pattern.permute.xlu0 %v1479
        %1481 = vperm.xlu0 %1480, %v1434
        %v1482 = vpop.permute.xlu0 %1481
        %v1483 = vperm.slane %v756, 3
        %v1484 = vlaneseq
        %v1485 = vshrl.u32 %v1484, 7
        %1487 = vset.pattern.permute.xlu0 %v1485
        %1488 = vperm.xlu0 %1487, %v1483
        %v1489 = vpop.permute.xlu0 %1488
        %v1490 = vlaneseq
        %v1491 = vshrl.u32 %v1490, 7
        %v1492 = vadd.s32 %v1491, 8
        %1493 = vset.pattern.permute.xlu0 %v1492
        %1494 = vperm.xlu0 %1493, %v1483
        %v1495 = vpop.permute.xlu0 %1494
        %v1496 = vlaneseq
        %v1497 = vshrl.u32 %v1496, 7
        %v1498 = vadd.s32 %v1497, 16
        %1499 = vset.pattern.permute.xlu0 %v1498
        %1500 = vperm.xlu0 %1499, %v1483
        %v1501 = vpop.permute.xlu0 %1500
        %v1502 = vlaneseq
        %v1503 = vshrl.u32 %v1502, 7
        %v1504 = vadd.s32 %v1503, 24
        %1505 = vset.pattern.permute.xlu0 %v1504
        %1506 = vperm.xlu0 %1505, %v1483
        %v1507 = vpop.permute.xlu0 %1506
        %v1508 = vlaneseq
        %v1509 = vshrl.u32 %v1508, 7
        %v1510 = vadd.s32 %v1509, 32
        %1511 = vset.pattern.permute.xlu0 %v1510
        %1512 = vperm.xlu0 %1511, %v1483
        %v1513 = vpop.permute.xlu0 %1512
        %v1514 = vlaneseq
        %v1515 = vshrl.u32 %v1514, 7
        %v1516 = vadd.s32 %v1515, 40
        %1517 = vset.pattern.permute.xlu0 %v1516
        %1518 = vperm.xlu0 %1517, %v1483
        %v1519 = vpop.permute.xlu0 %1518
        %v1520 = vlaneseq
        %v1521 = vshrl.u32 %v1520, 7
        %v1522 = vadd.s32 %v1521, 48
        %1523 = vset.pattern.permute.xlu0 %v1522
        %1524 = vperm.xlu0 %1523, %v1483
        %v1525 = vpop.permute.xlu0 %1524
        %v1526 = vlaneseq
        %v1527 = vshrl.u32 %v1526, 7
        %v1528 = vadd.s32 %v1527, 56
        %1529 = vset.pattern.permute.xlu0 %v1528
        %1530 = vperm.xlu0 %1529, %v1483
        %v1531 = vpop.permute.xlu0 %1530
        %v1532 = vperm.slane %v756, 4
        %v1533 = vlaneseq
        %v1534 = vshrl.u32 %v1533, 7
        %1536 = vset.pattern.permute.xlu0 %v1534
        %1537 = vperm.xlu0 %1536, %v1532
        %v1538 = vpop.permute.xlu0 %1537
        %v1539 = vlaneseq
        %v1540 = vshrl.u32 %v1539, 7
        %v1541 = vadd.s32 %v1540, 8
        %1542 = vset.pattern.permute.xlu0 %v1541
        %1543 = vperm.xlu0 %1542, %v1532
        %v1544 = vpop.permute.xlu0 %1543
        %v1545 = vlaneseq
        %v1546 = vshrl.u32 %v1545, 7
        %v1547 = vadd.s32 %v1546, 16
        %1548 = vset.pattern.permute.xlu0 %v1547
        %1549 = vperm.xlu0 %1548, %v1532
        %v1550 = vpop.permute.xlu0 %1549
        %v1551 = vlaneseq
        %v1552 = vshrl.u32 %v1551, 7
        %v1553 = vadd.s32 %v1552, 24
        %1554 = vset.pattern.permute.xlu0 %v1553
        %1555 = vperm.xlu0 %1554, %v1532
        %v1556 = vpop.permute.xlu0 %1555
        %v1557 = vlaneseq
        %v1558 = vshrl.u32 %v1557, 7
        %v1559 = vadd.s32 %v1558, 32
        %1560 = vset.pattern.permute.xlu0 %v1559
        %1561 = vperm.xlu0 %1560, %v1532
        %v1562 = vpop.permute.xlu0 %1561
        %v1563 = vlaneseq
        %v1564 = vshrl.u32 %v1563, 7
        %v1565 = vadd.s32 %v1564, 40
        %1566 = vset.pattern.permute.xlu0 %v1565
        %1567 = vperm.xlu0 %1566, %v1532
        %v1568 = vpop.permute.xlu0 %1567
        %v1569 = vlaneseq
        %v1570 = vshrl.u32 %v1569, 7
        %v1571 = vadd.s32 %v1570, 48
        %1572 = vset.pattern.permute.xlu0 %v1571
        %1573 = vperm.xlu0 %1572, %v1532
        %v1574 = vpop.permute.xlu0 %1573
        %v1575 = vlaneseq
        %v1576 = vshrl.u32 %v1575, 7
        %v1577 = vadd.s32 %v1576, 56
        %1578 = vset.pattern.permute.xlu0 %v1577
        %1579 = vperm.xlu0 %1578, %v1532
        %v1580 = vpop.permute.xlu0 %1579
        %v1581 = vperm.slane %v756, 5
        %v1582 = vlaneseq
        %v1583 = vshrl.u32 %v1582, 7
        %1585 = vset.pattern.permute.xlu0 %v1583
        %1586 = vperm.xlu0 %1585, %v1581
        %v1587 = vpop.permute.xlu0 %1586
        %v1588 = vlaneseq
        %v1589 = vshrl.u32 %v1588, 7
        %v1590 = vadd.s32 %v1589, 8
        %1591 = vset.pattern.permute.xlu0 %v1590
        %1592 = vperm.xlu0 %1591, %v1581
        %v1593 = vpop.permute.xlu0 %1592
        %v1594 = vlaneseq
        %v1595 = vshrl.u32 %v1594, 7
        %v1596 = vadd.s32 %v1595, 16
        %1597 = vset.pattern.permute.xlu0 %v1596
        %1598 = vperm.xlu0 %1597, %v1581
        %v1599 = vpop.permute.xlu0 %1598
        %v1600 = vlaneseq
        %v1601 = vshrl.u32 %v1600, 7
        %v1602 = vadd.s32 %v1601, 24
        %1603 = vset.pattern.permute.xlu0 %v1602
        %1604 = vperm.xlu0 %1603, %v1581
        %v1605 = vpop.permute.xlu0 %1604
        %v1606 = vlaneseq
        %v1607 = vshrl.u32 %v1606, 7
        %v1608 = vadd.s32 %v1607, 32
        %1609 = vset.pattern.permute.xlu0 %v1608
        %1610 = vperm.xlu0 %1609, %v1581
        %v1611 = vpop.permute.xlu0 %1610
        %v1612 = vlaneseq
        %v1613 = vshrl.u32 %v1612, 7
        %v1614 = vadd.s32 %v1613, 40
        %1615 = vset.pattern.permute.xlu0 %v1614
        %1616 = vperm.xlu0 %1615, %v1581
        %v1617 = vpop.permute.xlu0 %1616
        %v1618 = vlaneseq
        %v1619 = vshrl.u32 %v1618, 7
        %v1620 = vadd.s32 %v1619, 48
        %1621 = vset.pattern.permute.xlu0 %v1620
        %1622 = vperm.xlu0 %1621, %v1581
        %v1623 = vpop.permute.xlu0 %1622
        %v1624 = vlaneseq
        %v1625 = vshrl.u32 %v1624, 7
        %v1626 = vadd.s32 %v1625, 56
        %1627 = vset.pattern.permute.xlu0 %v1626
        %1628 = vperm.xlu0 %1627, %v1581
        %v1629 = vpop.permute.xlu0 %1628
        %v1630 = vperm.slane %v756, 6
        %v1631 = vlaneseq
        %v1632 = vshrl.u32 %v1631, 7
        %1634 = vset.pattern.permute.xlu0 %v1632
        %1635 = vperm.xlu0 %1634, %v1630
        %v1636 = vpop.permute.xlu0 %1635
        %v1637 = vlaneseq
        %v1638 = vshrl.u32 %v1637, 7
        %v1639 = vadd.s32 %v1638, 8
        %1640 = vset.pattern.permute.xlu0 %v1639
        %1641 = vperm.xlu0 %1640, %v1630
        %v1642 = vpop.permute.xlu0 %1641
        %v1643 = vlaneseq
        %v1644 = vshrl.u32 %v1643, 7
        %v1645 = vadd.s32 %v1644, 16
        %1646 = vset.pattern.permute.xlu0 %v1645
        %1647 = vperm.xlu0 %1646, %v1630
        %v1648 = vpop.permute.xlu0 %1647
        %v1649 = vlaneseq
        %v1650 = vshrl.u32 %v1649, 7
        %v1651 = vadd.s32 %v1650, 24
        %1652 = vset.pattern.permute.xlu0 %v1651
        %1653 = vperm.xlu0 %1652, %v1630
        %v1654 = vpop.permute.xlu0 %1653
        %v1655 = vlaneseq
        %v1656 = vshrl.u32 %v1655, 7
        %v1657 = vadd.s32 %v1656, 32
        %1658 = vset.pattern.permute.xlu0 %v1657
        %1659 = vperm.xlu0 %1658, %v1630
        %v1660 = vpop.permute.xlu0 %1659
        %v1661 = vlaneseq
        %v1662 = vshrl.u32 %v1661, 7
        %v1663 = vadd.s32 %v1662, 40
        %1664 = vset.pattern.permute.xlu0 %v1663
        %1665 = vperm.xlu0 %1664, %v1630
        %v1666 = vpop.permute.xlu0 %1665
        %v1667 = vlaneseq
        %v1668 = vshrl.u32 %v1667, 7
        %v1669 = vadd.s32 %v1668, 48
        %1670 = vset.pattern.permute.xlu0 %v1669
        %1671 = vperm.xlu0 %1670, %v1630
        %v1672 = vpop.permute.xlu0 %1671
        %v1673 = vlaneseq
        %v1674 = vshrl.u32 %v1673, 7
        %v1675 = vadd.s32 %v1674, 56
        %1676 = vset.pattern.permute.xlu0 %v1675
        %1677 = vperm.xlu0 %1676, %v1630
        %v1678 = vpop.permute.xlu0 %1677
        %v1679 = vperm.slane %v756, 7
        %v1680 = vlaneseq
        %v1681 = vshrl.u32 %v1680, 7
        %1683 = vset.pattern.permute.xlu0 %v1681
        %1684 = vperm.xlu0 %1683, %v1679
        %v1685 = vpop.permute.xlu0 %1684
        %v1686 = vlaneseq
        %v1687 = vshrl.u32 %v1686, 7
        %v1688 = vadd.s32 %v1687, 8
        %1689 = vset.pattern.permute.xlu0 %v1688
        %1690 = vperm.xlu0 %1689, %v1679
        %v1691 = vpop.permute.xlu0 %1690
        %v1692 = vlaneseq
        %v1693 = vshrl.u32 %v1692, 7
        %v1694 = vadd.s32 %v1693, 16
        %1695 = vset.pattern.permute.xlu0 %v1694
        %1696 = vperm.xlu0 %1695, %v1679
        %v1697 = vpop.permute.xlu0 %1696
        %v1698 = vlaneseq
        %v1699 = vshrl.u32 %v1698, 7
        %v1700 = vadd.s32 %v1699, 24
        %1701 = vset.pattern.permute.xlu0 %v1700
        %1702 = vperm.xlu0 %1701, %v1679
        %v1703 = vpop.permute.xlu0 %1702
        %v1704 = vlaneseq
        %v1705 = vshrl.u32 %v1704, 7
        %v1706 = vadd.s32 %v1705, 32
        %1707 = vset.pattern.permute.xlu0 %v1706
        %1708 = vperm.xlu0 %1707, %v1679
        %v1709 = vpop.permute.xlu0 %1708
        %v1710 = vlaneseq
        %v1711 = vshrl.u32 %v1710, 7
        %v1712 = vadd.s32 %v1711, 40
        %1713 = vset.pattern.permute.xlu0 %v1712
        %1714 = vperm.xlu0 %1713, %v1679
        %v1715 = vpop.permute.xlu0 %1714
        %v1716 = vlaneseq
        %v1717 = vshrl.u32 %v1716, 7
        %v1718 = vadd.s32 %v1717, 48
        %1719 = vset.pattern.permute.xlu0 %v1718
        %1720 = vperm.xlu0 %1719, %v1679
        %v1721 = vpop.permute.xlu0 %1720
        %v1722 = vlaneseq
        %v1723 = vshrl.u32 %v1722, 7
        %v1724 = vadd.s32 %v1723, 56
        %1725 = vset.pattern.permute.xlu0 %v1724
        %1726 = vperm.xlu0 %1725, %v1679
        %v1727 = vpop.permute.xlu0 %1726
        %v1728 = vperm.slane %v757, 0
        %v1729 = vlaneseq
        %v1730 = vshrl.u32 %v1729, 7
        %1732 = vset.pattern.permute.xlu0 %v1730
        %1733 = vperm.xlu0 %1732, %v1728
        %v1734 = vpop.permute.xlu0 %1733
        %v1735 = vlaneseq
        %v1736 = vshrl.u32 %v1735, 7
        %v1737 = vadd.s32 %v1736, 8
        %1738 = vset.pattern.permute.xlu0 %v1737
        %1739 = vperm.xlu0 %1738, %v1728
        %v1740 = vpop.permute.xlu0 %1739
        %v1741 = vlaneseq
        %v1742 = vshrl.u32 %v1741, 7
        %v1743 = vadd.s32 %v1742, 16
        %1744 = vset.pattern.permute.xlu0 %v1743
        %1745 = vperm.xlu0 %1744, %v1728
        %v1746 = vpop.permute.xlu0 %1745
        %v1747 = vlaneseq
        %v1748 = vshrl.u32 %v1747, 7
        %v1749 = vadd.s32 %v1748, 24
        %1750 = vset.pattern.permute.xlu0 %v1749
        %1751 = vperm.xlu0 %1750, %v1728
        %v1752 = vpop.permute.xlu0 %1751
        %v1753 = vlaneseq
        %v1754 = vshrl.u32 %v1753, 7
        %v1755 = vadd.s32 %v1754, 32
        %1756 = vset.pattern.permute.xlu0 %v1755
        %1757 = vperm.xlu0 %1756, %v1728
        %v1758 = vpop.permute.xlu0 %1757
        %v1759 = vlaneseq
        %v1760 = vshrl.u32 %v1759, 7
        %v1761 = vadd.s32 %v1760, 40
        %1762 = vset.pattern.permute.xlu0 %v1761
        %1763 = vperm.xlu0 %1762, %v1728
        %v1764 = vpop.permute.xlu0 %1763
        %v1765 = vlaneseq
        %v1766 = vshrl.u32 %v1765, 7
        %v1767 = vadd.s32 %v1766, 48
        %1768 = vset.pattern.permute.xlu0 %v1767
        %1769 = vperm.xlu0 %1768, %v1728
        %v1770 = vpop.permute.xlu0 %1769
        %v1771 = vlaneseq
        %v1772 = vshrl.u32 %v1771, 7
        %v1773 = vadd.s32 %v1772, 56
        %1774 = vset.pattern.permute.xlu0 %v1773
        %1775 = vperm.xlu0 %1774, %v1728
        %v1776 = vpop.permute.xlu0 %1775
        %v1777 = vperm.slane %v757, 1
        %v1778 = vlaneseq
        %v1779 = vshrl.u32 %v1778, 7
        %1781 = vset.pattern.permute.xlu0 %v1779
        %1782 = vperm.xlu0 %1781, %v1777
        %v1783 = vpop.permute.xlu0 %1782
        %v1784 = vlaneseq
        %v1785 = vshrl.u32 %v1784, 7
        %v1786 = vadd.s32 %v1785, 8
        %1787 = vset.pattern.permute.xlu0 %v1786
        %1788 = vperm.xlu0 %1787, %v1777
        %v1789 = vpop.permute.xlu0 %1788
        %v1790 = vlaneseq
        %v1791 = vshrl.u32 %v1790, 7
        %v1792 = vadd.s32 %v1791, 16
        %1793 = vset.pattern.permute.xlu0 %v1792
        %1794 = vperm.xlu0 %1793, %v1777
        %v1795 = vpop.permute.xlu0 %1794
        %v1796 = vlaneseq
        %v1797 = vshrl.u32 %v1796, 7
        %v1798 = vadd.s32 %v1797, 24
        %1799 = vset.pattern.permute.xlu0 %v1798
        %1800 = vperm.xlu0 %1799, %v1777
        %v1801 = vpop.permute.xlu0 %1800
        %v1802 = vlaneseq
        %v1803 = vshrl.u32 %v1802, 7
        %v1804 = vadd.s32 %v1803, 32
        %1805 = vset.pattern.permute.xlu0 %v1804
        %1806 = vperm.xlu0 %1805, %v1777
        %v1807 = vpop.permute.xlu0 %1806
        %v1808 = vlaneseq
        %v1809 = vshrl.u32 %v1808, 7
        %v1810 = vadd.s32 %v1809, 40
        %1811 = vset.pattern.permute.xlu0 %v1810
        %1812 = vperm.xlu0 %1811, %v1777
        %v1813 = vpop.permute.xlu0 %1812
        %v1814 = vlaneseq
        %v1815 = vshrl.u32 %v1814, 7
        %v1816 = vadd.s32 %v1815, 48
        %1817 = vset.pattern.permute.xlu0 %v1816
        %1818 = vperm.xlu0 %1817, %v1777
        %v1819 = vpop.permute.xlu0 %1818
        %v1820 = vlaneseq
        %v1821 = vshrl.u32 %v1820, 7
        %v1822 = vadd.s32 %v1821, 56
        %1823 = vset.pattern.permute.xlu0 %v1822
        %1824 = vperm.xlu0 %1823, %v1777
        %v1825 = vpop.permute.xlu0 %1824
        %v1826 = vperm.slane %v757, 2
        %v1827 = vlaneseq
        %v1828 = vshrl.u32 %v1827, 7
        %1830 = vset.pattern.permute.xlu0 %v1828
        %1831 = vperm.xlu0 %1830, %v1826
        %v1832 = vpop.permute.xlu0 %1831
        %v1833 = vlaneseq
        %v1834 = vshrl.u32 %v1833, 7
        %v1835 = vadd.s32 %v1834, 8
        %1836 = vset.pattern.permute.xlu0 %v1835
        %1837 = vperm.xlu0 %1836, %v1826
        %v1838 = vpop.permute.xlu0 %1837
        %v1839 = vlaneseq
        %v1840 = vshrl.u32 %v1839, 7
        %v1841 = vadd.s32 %v1840, 16
        %1842 = vset.pattern.permute.xlu0 %v1841
        %1843 = vperm.xlu0 %1842, %v1826
        %v1844 = vpop.permute.xlu0 %1843
        %v1845 = vlaneseq
        %v1846 = vshrl.u32 %v1845, 7
        %v1847 = vadd.s32 %v1846, 24
        %1848 = vset.pattern.permute.xlu0 %v1847
        %1849 = vperm.xlu0 %1848, %v1826
        %v1850 = vpop.permute.xlu0 %1849
        %v1851 = vlaneseq
        %v1852 = vshrl.u32 %v1851, 7
        %v1853 = vadd.s32 %v1852, 32
        %1854 = vset.pattern.permute.xlu0 %v1853
        %1855 = vperm.xlu0 %1854, %v1826
        %v1856 = vpop.permute.xlu0 %1855
        %v1857 = vlaneseq
        %v1858 = vshrl.u32 %v1857, 7
        %v1859 = vadd.s32 %v1858, 40
        %1860 = vset.pattern.permute.xlu0 %v1859
        %1861 = vperm.xlu0 %1860, %v1826
        %v1862 = vpop.permute.xlu0 %1861
        %v1863 = vlaneseq
        %v1864 = vshrl.u32 %v1863, 7
        %v1865 = vadd.s32 %v1864, 48
        %1866 = vset.pattern.permute.xlu0 %v1865
        %1867 = vperm.xlu0 %1866, %v1826
        %v1868 = vpop.permute.xlu0 %1867
        %v1869 = vlaneseq
        %v1870 = vshrl.u32 %v1869, 7
        %v1871 = vadd.s32 %v1870, 56
        %1872 = vset.pattern.permute.xlu0 %v1871
        %1873 = vperm.xlu0 %1872, %v1826
        %v1874 = vpop.permute.xlu0 %1873
        %v1875 = vperm.slane %v757, 3
        %v1876 = vlaneseq
        %v1877 = vshrl.u32 %v1876, 7
        %1879 = vset.pattern.permute.xlu0 %v1877
        %1880 = vperm.xlu0 %1879, %v1875
        %v1881 = vpop.permute.xlu0 %1880
        %v1882 = vlaneseq
        %v1883 = vshrl.u32 %v1882, 7
        %v1884 = vadd.s32 %v1883, 8
        %1885 = vset.pattern.permute.xlu0 %v1884
        %1886 = vperm.xlu0 %1885, %v1875
        %v1887 = vpop.permute.xlu0 %1886
        %v1888 = vlaneseq
        %v1889 = vshrl.u32 %v1888, 7
        %v1890 = vadd.s32 %v1889, 16
        %1891 = vset.pattern.permute.xlu0 %v1890
        %1892 = vperm.xlu0 %1891, %v1875
        %v1893 = vpop.permute.xlu0 %1892
        %v1894 = vlaneseq
        %v1895 = vshrl.u32 %v1894, 7
        %v1896 = vadd.s32 %v1895, 24
        %1897 = vset.pattern.permute.xlu0 %v1896
        %1898 = vperm.xlu0 %1897, %v1875
        %v1899 = vpop.permute.xlu0 %1898
        %v1900 = vlaneseq
        %v1901 = vshrl.u32 %v1900, 7
        %v1902 = vadd.s32 %v1901, 32
        %1903 = vset.pattern.permute.xlu0 %v1902
        %1904 = vperm.xlu0 %1903, %v1875
        %v1905 = vpop.permute.xlu0 %1904
        %v1906 = vlaneseq
        %v1907 = vshrl.u32 %v1906, 7
        %v1908 = vadd.s32 %v1907, 40
        %1909 = vset.pattern.permute.xlu0 %v1908
        %1910 = vperm.xlu0 %1909, %v1875
        %v1911 = vpop.permute.xlu0 %1910
        %v1912 = vlaneseq
        %v1913 = vshrl.u32 %v1912, 7
        %v1914 = vadd.s32 %v1913, 48
        %1915 = vset.pattern.permute.xlu0 %v1914
        %1916 = vperm.xlu0 %1915, %v1875
        %v1917 = vpop.permute.xlu0 %1916
        %v1918 = vlaneseq
        %v1919 = vshrl.u32 %v1918, 7
        %v1920 = vadd.s32 %v1919, 56
        %1921 = vset.pattern.permute.xlu0 %v1920
        %1922 = vperm.xlu0 %1921, %v1875
        %v1923 = vpop.permute.xlu0 %1922
        %v1924 = vperm.slane %v757, 4
        %v1925 = vlaneseq
        %v1926 = vshrl.u32 %v1925, 7
        %1928 = vset.pattern.permute.xlu0 %v1926
        %1929 = vperm.xlu0 %1928, %v1924
        %v1930 = vpop.permute.xlu0 %1929
        %v1931 = vlaneseq
        %v1932 = vshrl.u32 %v1931, 7
        %v1933 = vadd.s32 %v1932, 8
        %1934 = vset.pattern.permute.xlu0 %v1933
        %1935 = vperm.xlu0 %1934, %v1924
        %v1936 = vpop.permute.xlu0 %1935
        %v1937 = vlaneseq
        %v1938 = vshrl.u32 %v1937, 7
        %v1939 = vadd.s32 %v1938, 16
        %1940 = vset.pattern.permute.xlu0 %v1939
        %1941 = vperm.xlu0 %1940, %v1924
        %v1942 = vpop.permute.xlu0 %1941
        %v1943 = vlaneseq
        %v1944 = vshrl.u32 %v1943, 7
        %v1945 = vadd.s32 %v1944, 24
        %1946 = vset.pattern.permute.xlu0 %v1945
        %1947 = vperm.xlu0 %1946, %v1924
        %v1948 = vpop.permute.xlu0 %1947
        %v1949 = vlaneseq
        %v1950 = vshrl.u32 %v1949, 7
        %v1951 = vadd.s32 %v1950, 32
        %1952 = vset.pattern.permute.xlu0 %v1951
        %1953 = vperm.xlu0 %1952, %v1924
        %v1954 = vpop.permute.xlu0 %1953
        %v1955 = vlaneseq
        %v1956 = vshrl.u32 %v1955, 7
        %v1957 = vadd.s32 %v1956, 40
        %1958 = vset.pattern.permute.xlu0 %v1957
        %1959 = vperm.xlu0 %1958, %v1924
        %v1960 = vpop.permute.xlu0 %1959
        %v1961 = vlaneseq
        %v1962 = vshrl.u32 %v1961, 7
        %v1963 = vadd.s32 %v1962, 48
        %1964 = vset.pattern.permute.xlu0 %v1963
        %1965 = vperm.xlu0 %1964, %v1924
        %v1966 = vpop.permute.xlu0 %1965
        %v1967 = vlaneseq
        %v1968 = vshrl.u32 %v1967, 7
        %v1969 = vadd.s32 %v1968, 56
        %1970 = vset.pattern.permute.xlu0 %v1969
        %1971 = vperm.xlu0 %1970, %v1924
        %v1972 = vpop.permute.xlu0 %1971
        %v1973 = vperm.slane %v757, 5
        %v1974 = vlaneseq
        %v1975 = vshrl.u32 %v1974, 7
        %1977 = vset.pattern.permute.xlu0 %v1975
        %1978 = vperm.xlu0 %1977, %v1973
        %v1979 = vpop.permute.xlu0 %1978
        %v1980 = vlaneseq
        %v1981 = vshrl.u32 %v1980, 7
        %v1982 = vadd.s32 %v1981, 8
        %1983 = vset.pattern.permute.xlu0 %v1982
        %1984 = vperm.xlu0 %1983, %v1973
        %v1985 = vpop.permute.xlu0 %1984
        %v1986 = vlaneseq
        %v1987 = vshrl.u32 %v1986, 7
        %v1988 = vadd.s32 %v1987, 16
        %1989 = vset.pattern.permute.xlu0 %v1988
        %1990 = vperm.xlu0 %1989, %v1973
        %v1991 = vpop.permute.xlu0 %1990
        %v1992 = vlaneseq
        %v1993 = vshrl.u32 %v1992, 7
        %v1994 = vadd.s32 %v1993, 24
        %1995 = vset.pattern.permute.xlu0 %v1994
        %1996 = vperm.xlu0 %1995, %v1973
        %v1997 = vpop.permute.xlu0 %1996
        %v1998 = vlaneseq
        %v1999 = vshrl.u32 %v1998, 7
        %v2000 = vadd.s32 %v1999, 32
        %2001 = vset.pattern.permute.xlu0 %v2000
        %2002 = vperm.xlu0 %2001, %v1973
        %v2003 = vpop.permute.xlu0 %2002
        %v2004 = vlaneseq
        %v2005 = vshrl.u32 %v2004, 7
        %v2006 = vadd.s32 %v2005, 40
        %2007 = vset.pattern.permute.xlu0 %v2006
        %2008 = vperm.xlu0 %2007, %v1973
        %v2009 = vpop.permute.xlu0 %2008
        %v2010 = vlaneseq
        %v2011 = vshrl.u32 %v2010, 7
        %v2012 = vadd.s32 %v2011, 48
        %2013 = vset.pattern.permute.xlu0 %v2012
        %2014 = vperm.xlu0 %2013, %v1973
        %v2015 = vpop.permute.xlu0 %2014
        %v2016 = vlaneseq
        %v2017 = vshrl.u32 %v2016, 7
        %v2018 = vadd.s32 %v2017, 56
        %2019 = vset.pattern.permute.xlu0 %v2018
        %2020 = vperm.xlu0 %2019, %v1973
        %v2021 = vpop.permute.xlu0 %2020
        %v2022 = vperm.slane %v757, 6
        %v2023 = vlaneseq
        %v2024 = vshrl.u32 %v2023, 7
        %2026 = vset.pattern.permute.xlu0 %v2024
        %2027 = vperm.xlu0 %2026, %v2022
        %v2028 = vpop.permute.xlu0 %2027
        %v2029 = vlaneseq
        %v2030 = vshrl.u32 %v2029, 7
        %v2031 = vadd.s32 %v2030, 8
        %2032 = vset.pattern.permute.xlu0 %v2031
        %2033 = vperm.xlu0 %2032, %v2022
        %v2034 = vpop.permute.xlu0 %2033
        %v2035 = vlaneseq
        %v2036 = vshrl.u32 %v2035, 7
        %v2037 = vadd.s32 %v2036, 16
        %2038 = vset.pattern.permute.xlu0 %v2037
        %2039 = vperm.xlu0 %2038, %v2022
        %v2040 = vpop.permute.xlu0 %2039
        %v2041 = vlaneseq
        %v2042 = vshrl.u32 %v2041, 7
        %v2043 = vadd.s32 %v2042, 24
        %2044 = vset.pattern.permute.xlu0 %v2043
        %2045 = vperm.xlu0 %2044, %v2022
        %v2046 = vpop.permute.xlu0 %2045
        %v2047 = vlaneseq
        %v2048 = vshrl.u32 %v2047, 7
        %v2049 = vadd.s32 %v2048, 32
        %2050 = vset.pattern.permute.xlu0 %v2049
        %2051 = vperm.xlu0 %2050, %v2022
        %v2052 = vpop.permute.xlu0 %2051
        %v2053 = vlaneseq
        %v2054 = vshrl.u32 %v2053, 7
        %v2055 = vadd.s32 %v2054, 40
        %2056 = vset.pattern.permute.xlu0 %v2055
        %2057 = vperm.xlu0 %2056, %v2022
        %v2058 = vpop.permute.xlu0 %2057
        %v2059 = vlaneseq
        %v2060 = vshrl.u32 %v2059, 7
        %v2061 = vadd.s32 %v2060, 48
        %2062 = vset.pattern.permute.xlu0 %v2061
        %2063 = vperm.xlu0 %2062, %v2022
        %v2064 = vpop.permute.xlu0 %2063
        %v2065 = vlaneseq
        %v2066 = vshrl.u32 %v2065, 7
        %v2067 = vadd.s32 %v2066, 56
        %2068 = vset.pattern.permute.xlu0 %v2067
        %2069 = vperm.xlu0 %2068, %v2022
        %v2070 = vpop.permute.xlu0 %2069
        %v2071 = vperm.slane %v757, 7
        %v2072 = vlaneseq
        %v2073 = vshrl.u32 %v2072, 7
        %2075 = vset.pattern.permute.xlu0 %v2073
        %2076 = vperm.xlu0 %2075, %v2071
        %v2077 = vpop.permute.xlu0 %2076
        %v2078 = vlaneseq
        %v2079 = vshrl.u32 %v2078, 7
        %v2080 = vadd.s32 %v2079, 8
        %2081 = vset.pattern.permute.xlu0 %v2080
        %2082 = vperm.xlu0 %2081, %v2071
        %v2083 = vpop.permute.xlu0 %2082
        %v2084 = vlaneseq
        %v2085 = vshrl.u32 %v2084, 7
        %v2086 = vadd.s32 %v2085, 16
        %2087 = vset.pattern.permute.xlu0 %v2086
        %2088 = vperm.xlu0 %2087, %v2071
        %v2089 = vpop.permute.xlu0 %2088
        %v2090 = vlaneseq
        %v2091 = vshrl.u32 %v2090, 7
        %v2092 = vadd.s32 %v2091, 24
        %2093 = vset.pattern.permute.xlu0 %v2092
        %2094 = vperm.xlu0 %2093, %v2071
        %v2095 = vpop.permute.xlu0 %2094
        %v2096 = vlaneseq
        %v2097 = vshrl.u32 %v2096, 7
        %v2098 = vadd.s32 %v2097, 32
        %2099 = vset.pattern.permute.xlu0 %v2098
        %2100 = vperm.xlu0 %2099, %v2071
        %v2101 = vpop.permute.xlu0 %2100
        %v2102 = vlaneseq
        %v2103 = vshrl.u32 %v2102, 7
        %v2104 = vadd.s32 %v2103, 40
        %2105 = vset.pattern.permute.xlu0 %v2104
        %2106 = vperm.xlu0 %2105, %v2071
        %v2107 = vpop.permute.xlu0 %2106
        %v2108 = vlaneseq
        %v2109 = vshrl.u32 %v2108, 7
        %v2110 = vadd.s32 %v2109, 48
        %2111 = vset.pattern.permute.xlu0 %v2110
        %2112 = vperm.xlu0 %2111, %v2071
        %v2113 = vpop.permute.xlu0 %2112
        %v2114 = vlaneseq
        %v2115 = vshrl.u32 %v2114, 7
        %v2116 = vadd.s32 %v2115, 56
        %2117 = vset.pattern.permute.xlu0 %v2116
        %2118 = vperm.xlu0 %2117, %v2071
        %v2119 = vpop.permute.xlu0 %2118
        %v2120 = vperm.slane %v754, 0
        %v2121 = vperm.slane %v1322, 0
        %v2122 = vperm.slane %v1323, 0
        %v2123 = vperm.slane %v1324, 0
        %v2124 = vperm.slane %v1325, 0
        %v2125 = vperm.slane %v1326, 0
        %v2126 = vperm.slane %v1327, 0
        %v2127 = vperm.slane %v1328, 0
        %v2128 = vperm.slane %v755, 0
        %v2129 = vperm.slane %v1329, 0
        %v2130 = vperm.slane %v1330, 0
        %v2131 = vperm.slane %v1331, 0
        %v2132 = vperm.slane %v1332, 0
        %v2133 = vperm.slane %v1333, 0
        %v2134 = vperm.slane %v1334, 0
        %v2135 = vperm.slane %v1335, 0
        %v2152 = vmul.f32 %v2120, %v1342
        %v2153 = vmul.f32 %v2120, %v1348
        %v2154 = vmul.f32 %v2120, %v1354
        %v2155 = vmul.f32 %v2120, %v1360
        %v2156 = vmul.f32 %v2120, %v1366
        %v2157 = vmul.f32 %v2120, %v1372
        %v2158 = vmul.f32 %v2120, %v1378
        %v2159 = vmul.f32 %v2120, %v1384
        %v2160 = vmul.f32 %v2121, %v1391
        %v2161 = vmul.f32 %v2121, %v1397
        %v2162 = vmul.f32 %v2121, %v1403
        %v2163 = vmul.f32 %v2121, %v1409
        %v2164 = vmul.f32 %v2121, %v1415
        %v2165 = vmul.f32 %v2121, %v1421
        %v2166 = vmul.f32 %v2121, %v1427
        %v2167 = vmul.f32 %v2121, %v1433
        %v2168 = vmul.f32 %v2122, %v1440
        %v2169 = vmul.f32 %v2122, %v1446
        %v2170 = vmul.f32 %v2122, %v1452
        %v2171 = vmul.f32 %v2122, %v1458
        %v2172 = vmul.f32 %v2122, %v1464
        %v2173 = vmul.f32 %v2122, %v1470
        %v2174 = vmul.f32 %v2122, %v1476
        %v2175 = vmul.f32 %v2122, %v1482
        %v2176 = vmul.f32 %v2123, %v1489
        %v2177 = vmul.f32 %v2123, %v1495
        %v2178 = vmul.f32 %v2123, %v1501
        %v2179 = vmul.f32 %v2123, %v1507
        %v2180 = vmul.f32 %v2123, %v1513
        %v2181 = vmul.f32 %v2123, %v1519
        %v2182 = vmul.f32 %v2123, %v1525
        %v2183 = vmul.f32 %v2123, %v1531
        %v2184 = vmul.f32 %v2124, %v1538
        %v2185 = vmul.f32 %v2124, %v1544
        %v2186 = vmul.f32 %v2124, %v1550
        %v2187 = vmul.f32 %v2124, %v1556
        %v2188 = vmul.f32 %v2124, %v1562
        %v2189 = vmul.f32 %v2124, %v1568
        %v2190 = vmul.f32 %v2124, %v1574
        %v2191 = vmul.f32 %v2124, %v1580
        %v2192 = vmul.f32 %v2125, %v1587
        %v2193 = vmul.f32 %v2125, %v1593
        %v2194 = vmul.f32 %v2125, %v1599
        %v2195 = vmul.f32 %v2125, %v1605
        %v2196 = vmul.f32 %v2125, %v1611
        %v2197 = vmul.f32 %v2125, %v1617
        %v2198 = vmul.f32 %v2125, %v1623
        %v2199 = vmul.f32 %v2125, %v1629
        %v2200 = vmul.f32 %v2126, %v1636
        %v2201 = vmul.f32 %v2126, %v1642
        %v2202 = vmul.f32 %v2126, %v1648
        %v2203 = vmul.f32 %v2126, %v1654
        %v2204 = vmul.f32 %v2126, %v1660
        %v2205 = vmul.f32 %v2126, %v1666
        %v2206 = vmul.f32 %v2126, %v1672
        %v2207 = vmul.f32 %v2126, %v1678
        %v2208 = vmul.f32 %v2127, %v1685
        %v2209 = vmul.f32 %v2127, %v1691
        %v2210 = vmul.f32 %v2127, %v1697
        %v2211 = vmul.f32 %v2127, %v1703
        %v2212 = vmul.f32 %v2127, %v1709
        %v2213 = vmul.f32 %v2127, %v1715
        %v2214 = vmul.f32 %v2127, %v1721
        %v2215 = vmul.f32 %v2127, %v1727
        %v2216 = vmul.f32 %v2128, %v1734
        %v2217 = vmul.f32 %v2128, %v1740
        %v2218 = vmul.f32 %v2128, %v1746
        %v2219 = vmul.f32 %v2128, %v1752
        %v2220 = vmul.f32 %v2128, %v1758
        %v2221 = vmul.f32 %v2128, %v1764
        %v2222 = vmul.f32 %v2128, %v1770
        %v2223 = vmul.f32 %v2128, %v1776
        %v2224 = vmul.f32 %v2129, %v1783
        %v2225 = vmul.f32 %v2129, %v1789
        %v2226 = vmul.f32 %v2129, %v1795
        %v2227 = vmul.f32 %v2129, %v1801
        %v2228 = vmul.f32 %v2129, %v1807
        %v2229 = vmul.f32 %v2129, %v1813
        %v2230 = vmul.f32 %v2129, %v1819
        %v2231 = vmul.f32 %v2129, %v1825
        %v2232 = vmul.f32 %v2130, %v1832
        %v2233 = vmul.f32 %v2130, %v1838
        %v2234 = vmul.f32 %v2130, %v1844
        %v2235 = vmul.f32 %v2130, %v1850
        %v2236 = vmul.f32 %v2130, %v1856
        %v2237 = vmul.f32 %v2130, %v1862
        %v2238 = vmul.f32 %v2130, %v1868
        %v2239 = vmul.f32 %v2130, %v1874
        %v2240 = vmul.f32 %v2131, %v1881
        %v2241 = vmul.f32 %v2131, %v1887
        %v2242 = vmul.f32 %v2131, %v1893
        %v2243 = vmul.f32 %v2131, %v1899
        %v2244 = vmul.f32 %v2131, %v1905
        %v2245 = vmul.f32 %v2131, %v1911
        %v2246 = vmul.f32 %v2131, %v1917
        %v2247 = vmul.f32 %v2131, %v1923
        %v2248 = vmul.f32 %v2132, %v1930
        %v2249 = vmul.f32 %v2132, %v1936
        %v2250 = vmul.f32 %v2132, %v1942
        %v2251 = vmul.f32 %v2132, %v1948
        %v2252 = vmul.f32 %v2132, %v1954
        %v2253 = vmul.f32 %v2132, %v1960
        %v2254 = vmul.f32 %v2132, %v1966
        %v2255 = vmul.f32 %v2132, %v1972
        %v2256 = vmul.f32 %v2133, %v1979
        %v2257 = vmul.f32 %v2133, %v1985
        %v2258 = vmul.f32 %v2133, %v1991
        %v2259 = vmul.f32 %v2133, %v1997
        %v2260 = vmul.f32 %v2133, %v2003
        %v2261 = vmul.f32 %v2133, %v2009
        %v2262 = vmul.f32 %v2133, %v2015
        %v2263 = vmul.f32 %v2133, %v2021
        %v2264 = vmul.f32 %v2134, %v2028
        %v2265 = vmul.f32 %v2134, %v2034
        %v2266 = vmul.f32 %v2134, %v2040
        %v2267 = vmul.f32 %v2134, %v2046
        %v2268 = vmul.f32 %v2134, %v2052
        %v2269 = vmul.f32 %v2134, %v2058
        %v2270 = vmul.f32 %v2134, %v2064
        %v2271 = vmul.f32 %v2134, %v2070
        %v2272 = vmul.f32 %v2135, %v2077
        %v2273 = vmul.f32 %v2135, %v2083
        %v2274 = vmul.f32 %v2135, %v2089
        %v2275 = vmul.f32 %v2135, %v2095
        %v2276 = vmul.f32 %v2135, %v2101
        %v2277 = vmul.f32 %v2135, %v2107
        %v2278 = vmul.f32 %v2135, %v2113
        %v2279 = vmul.f32 %v2135, %v2119
        %s2280 = scalar_lea.vmem [#allocation9], %s1190
        %2281 = vst.msk [vmem:[%s2280] sm:$0xff] %vm549, %v2152
        %2282 = vst.msk [vmem:[%s2280 + $0x8] sm:$0xff] %vm549, %v2153
        %2283 = vst.msk [vmem:[%s2280 + $0x10] sm:$0xff] %vm549, %v2154
        %2284 = vst.msk [vmem:[%s2280 + $0x18] sm:$0xff] %vm549, %v2155
        %2285 = vst.msk [vmem:[%s2280 + $0x20] sm:$0xff] %vm549, %v2156
        %2286 = vst.msk [vmem:[%s2280 + $0x28] sm:$0xff] %vm549, %v2157
        %2287 = vst.msk [vmem:[%s2280 + $0x30] sm:$0xff] %vm549, %v2158
        %2288 = vst.msk [vmem:[%s2280 + $0x38] sm:$0xff] %vm549, %v2159
        %2289 = vst.msk [vmem:[%s2280 + $0x40] sm:$0xff] %vm549, %v2160
        %2290 = vst.msk [vmem:[%s2280 + $0x48] sm:$0xff] %vm549, %v2161
        %2291 = vst.msk [vmem:[%s2280 + $0x50] sm:$0xff] %vm549, %v2162
        %2292 = vst.msk [vmem:[%s2280 + $0x58] sm:$0xff] %vm549, %v2163
        %2293 = vst.msk [vmem:[%s2280 + $0x60] sm:$0xff] %vm549, %v2164
        %2294 = vst.msk [vmem:[%s2280 + $0x68] sm:$0xff] %vm549, %v2165
        %2295 = vst.msk [vmem:[%s2280 + $0x70] sm:$0xff] %vm549, %v2166
        %2296 = vst.msk [vmem:[%s2280 + $0x78] sm:$0xff] %vm549, %v2167
        %2297 = vst.msk [vmem:[%s2280 + $0x80] sm:$0xff] %vm549, %v2168
        %2298 = vst.msk [vmem:[%s2280 + $0x88] sm:$0xff] %vm549, %v2169
        %2299 = vst.msk [vmem:[%s2280 + $0x90] sm:$0xff] %vm549, %v2170
        %2300 = vst.msk [vmem:[%s2280 + $0x98] sm:$0xff] %vm549, %v2171
        %2301 = vst.msk [vmem:[%s2280 + $0xa0] sm:$0xff] %vm549, %v2172
        %2302 = vst.msk [vmem:[%s2280 + $0xa8] sm:$0xff] %vm549, %v2173
        %2303 = vst.msk [vmem:[%s2280 + $0xb0] sm:$0xff] %vm549, %v2174
        %2304 = vst.msk [vmem:[%s2280 + $0xb8] sm:$0xff] %vm549, %v2175
        %2305 = vst.msk [vmem:[%s2280 + $0xc0] sm:$0xff] %vm549, %v2176
        %2306 = vst.msk [vmem:[%s2280 + $0xc8] sm:$0xff] %vm549, %v2177
        %2307 = vst.msk [vmem:[%s2280 + $0xd0] sm:$0xff] %vm549, %v2178
        %2308 = vst.msk [vmem:[%s2280 + $0xd8] sm:$0xff] %vm549, %v2179
        %2309 = vst.msk [vmem:[%s2280 + $0xe0] sm:$0xff] %vm549, %v2180
        %2310 = vst.msk [vmem:[%s2280 + $0xe8] sm:$0xff] %vm549, %v2181
        %2311 = vst.msk [vmem:[%s2280 + $0xf0] sm:$0xff] %vm549, %v2182
        %2312 = vst.msk [vmem:[%s2280 + $0xf8] sm:$0xff] %vm549, %v2183
        %2313 = vst.msk [vmem:[%s2280 + $0x100] sm:$0xff] %vm549, %v2184
        %2314 = vst.msk [vmem:[%s2280 + $0x108] sm:$0xff] %vm549, %v2185
        %2315 = vst.msk [vmem:[%s2280 + $0x110] sm:$0xff] %vm549, %v2186
        %2316 = vst.msk [vmem:[%s2280 + $0x118] sm:$0xff] %vm549, %v2187
        %2317 = vst.msk [vmem:[%s2280 + $0x120] sm:$0xff] %vm549, %v2188
        %2318 = vst.msk [vmem:[%s2280 + $0x128] sm:$0xff] %vm549, %v2189
        %2319 = vst.msk [vmem:[%s2280 + $0x130] sm:$0xff] %vm549, %v2190
        %2320 = vst.msk [vmem:[%s2280 + $0x138] sm:$0xff] %vm549, %v2191
        %2321 = vst.msk [vmem:[%s2280 + $0x140] sm:$0xff] %vm549, %v2192
        %2322 = vst.msk [vmem:[%s2280 + $0x148] sm:$0xff] %vm549, %v2193
        %2323 = vst.msk [vmem:[%s2280 + $0x150] sm:$0xff] %vm549, %v2194
        %2324 = vst.msk [vmem:[%s2280 + $0x158] sm:$0xff] %vm549, %v2195
        %2325 = vst.msk [vmem:[%s2280 + $0x160] sm:$0xff] %vm549, %v2196
        %2326 = vst.msk [vmem:[%s2280 + $0x168] sm:$0xff] %vm549, %v2197
        %2327 = vst.msk [vmem:[%s2280 + $0x170] sm:$0xff] %vm549, %v2198
        %2328 = vst.msk [vmem:[%s2280 + $0x178] sm:$0xff] %vm549, %v2199
        %2329 = vst.msk [vmem:[%s2280 + $0x180] sm:$0xff] %vm549, %v2200
        %2330 = vst.msk [vmem:[%s2280 + $0x188] sm:$0xff] %vm549, %v2201
        %2331 = vst.msk [vmem:[%s2280 + $0x190] sm:$0xff] %vm549, %v2202
        %2332 = vst.msk [vmem:[%s2280 + $0x198] sm:$0xff] %vm549, %v2203
        %2333 = vst.msk [vmem:[%s2280 + $0x1a0] sm:$0xff] %vm549, %v2204
        %2334 = vst.msk [vmem:[%s2280 + $0x1a8] sm:$0xff] %vm549, %v2205
        %2335 = vst.msk [vmem:[%s2280 + $0x1b0] sm:$0xff] %vm549, %v2206
        %2336 = vst.msk [vmem:[%s2280 + $0x1b8] sm:$0xff] %vm549, %v2207
        %2337 = vst.msk [vmem:[%s2280 + $0x1c0] sm:$0xff] %vm549, %v2208
        %2338 = vst.msk [vmem:[%s2280 + $0x1c8] sm:$0xff] %vm549, %v2209
        %2339 = vst.msk [vmem:[%s2280 + $0x1d0] sm:$0xff] %vm549, %v2210
        %2340 = vst.msk [vmem:[%s2280 + $0x1d8] sm:$0xff] %vm549, %v2211
        %2341 = vst.msk [vmem:[%s2280 + $0x1e0] sm:$0xff] %vm549, %v2212
        %2342 = vst.msk [vmem:[%s2280 + $0x1e8] sm:$0xff] %vm549, %v2213
        %2343 = vst.msk [vmem:[%s2280 + $0x1f0] sm:$0xff] %vm549, %v2214
        %2344 = vst.msk [vmem:[%s2280 + $0x1f8] sm:$0xff] %vm549, %v2215
        %2345 = vst.msk [vmem:[%s2280 + $0x200] sm:$0xff] %vm549, %v2216
        %2346 = vst.msk [vmem:[%s2280 + $0x208] sm:$0xff] %vm549, %v2217
        %2347 = vst.msk [vmem:[%s2280 + $0x210] sm:$0xff] %vm549, %v2218
        %2348 = vst.msk [vmem:[%s2280 + $0x218] sm:$0xff] %vm549, %v2219
        %2349 = vst.msk [vmem:[%s2280 + $0x220] sm:$0xff] %vm549, %v2220
        %2350 = vst.msk [vmem:[%s2280 + $0x228] sm:$0xff] %vm549, %v2221
        %2351 = vst.msk [vmem:[%s2280 + $0x230] sm:$0xff] %vm549, %v2222
        %2352 = vst.msk [vmem:[%s2280 + $0x238] sm:$0xff] %vm549, %v2223
        %2353 = vst.msk [vmem:[%s2280 + $0x240] sm:$0xff] %vm549, %v2224
        %2354 = vst.msk [vmem:[%s2280 + $0x248] sm:$0xff] %vm549, %v2225
        %2355 = vst.msk [vmem:[%s2280 + $0x250] sm:$0xff] %vm549, %v2226
        %2356 = vst.msk [vmem:[%s2280 + $0x258] sm:$0xff] %vm549, %v2227
        %2357 = vst.msk [vmem:[%s2280 + $0x260] sm:$0xff] %vm549, %v2228
        %2358 = vst.msk [vmem:[%s2280 + $0x268] sm:$0xff] %vm549, %v2229
        %2359 = vst.msk [vmem:[%s2280 + $0x270] sm:$0xff] %vm549, %v2230
        %2360 = vst.msk [vmem:[%s2280 + $0x278] sm:$0xff] %vm549, %v2231
        %2361 = vst.msk [vmem:[%s2280 + $0x280] sm:$0xff] %vm549, %v2232
        %2362 = vst.msk [vmem:[%s2280 + $0x288] sm:$0xff] %vm549, %v2233
        %2363 = vst.msk [vmem:[%s2280 + $0x290] sm:$0xff] %vm549, %v2234
        %2364 = vst.msk [vmem:[%s2280 + $0x298] sm:$0xff] %vm549, %v2235
        %2365 = vst.msk [vmem:[%s2280 + $0x2a0] sm:$0xff] %vm549, %v2236
        %2366 = vst.msk [vmem:[%s2280 + $0x2a8] sm:$0xff] %vm549, %v2237
        %2367 = vst.msk [vmem:[%s2280 + $0x2b0] sm:$0xff] %vm549, %v2238
        %2368 = vst.msk [vmem:[%s2280 + $0x2b8] sm:$0xff] %vm549, %v2239
        %2369 = vst.msk [vmem:[%s2280 + $0x2c0] sm:$0xff] %vm549, %v2240
        %2370 = vst.msk [vmem:[%s2280 + $0x2c8] sm:$0xff] %vm549, %v2241
        %2371 = vst.msk [vmem:[%s2280 + $0x2d0] sm:$0xff] %vm549, %v2242
        %2372 = vst.msk [vmem:[%s2280 + $0x2d8] sm:$0xff] %vm549, %v2243
        %2373 = vst.msk [vmem:[%s2280 + $0x2e0] sm:$0xff] %vm549, %v2244
        %2374 = vst.msk [vmem:[%s2280 + $0x2e8] sm:$0xff] %vm549, %v2245
        %2375 = vst.msk [vmem:[%s2280 + $0x2f0] sm:$0xff] %vm549, %v2246
        %2376 = vst.msk [vmem:[%s2280 + $0x2f8] sm:$0xff] %vm549, %v2247
        %2377 = vst.msk [vmem:[%s2280 + $0x300] sm:$0xff] %vm549, %v2248
        %2378 = vst.msk [vmem:[%s2280 + $0x308] sm:$0xff] %vm549, %v2249
        %2379 = vst.msk [vmem:[%s2280 + $0x310] sm:$0xff] %vm549, %v2250
        %2380 = vst.msk [vmem:[%s2280 + $0x318] sm:$0xff] %vm549, %v2251
        %2381 = vst.msk [vmem:[%s2280 + $0x320] sm:$0xff] %vm549, %v2252
        %2382 = vst.msk [vmem:[%s2280 + $0x328] sm:$0xff] %vm549, %v2253
        %2383 = vst.msk [vmem:[%s2280 + $0x330] sm:$0xff] %vm549, %v2254
        %2384 = vst.msk [vmem:[%s2280 + $0x338] sm:$0xff] %vm549, %v2255
        %2385 = vst.msk [vmem:[%s2280 + $0x340] sm:$0xff] %vm549, %v2256
        %2386 = vst.msk [vmem:[%s2280 + $0x348] sm:$0xff] %vm549, %v2257
        %2387 = vst.msk [vmem:[%s2280 + $0x350] sm:$0xff] %vm549, %v2258
        %2388 = vst.msk [vmem:[%s2280 + $0x358] sm:$0xff] %vm549, %v2259
        %2389 = vst.msk [vmem:[%s2280 + $0x360] sm:$0xff] %vm549, %v2260
        %2390 = vst.msk [vmem:[%s2280 + $0x368] sm:$0xff] %vm549, %v2261
        %2391 = vst.msk [vmem:[%s2280 + $0x370] sm:$0xff] %vm549, %v2262
        %2392 = vst.msk [vmem:[%s2280 + $0x378] sm:$0xff] %vm549, %v2263
        %2393 = vst.msk [vmem:[%s2280 + $0x380] sm:$0xff] %vm549, %v2264
        %2394 = vst.msk [vmem:[%s2280 + $0x388] sm:$0xff] %vm549, %v2265
        %2395 = vst.msk [vmem:[%s2280 + $0x390] sm:$0xff] %vm549, %v2266
        %2396 = vst.msk [vmem:[%s2280 + $0x398] sm:$0xff] %vm549, %v2267
        %2397 = vst.msk [vmem:[%s2280 + $0x3a0] sm:$0xff] %vm549, %v2268
        %2398 = vst.msk [vmem:[%s2280 + $0x3a8] sm:$0xff] %vm549, %v2269
        %2399 = vst.msk [vmem:[%s2280 + $0x3b0] sm:$0xff] %vm549, %v2270
        %2400 = vst.msk [vmem:[%s2280 + $0x3b8] sm:$0xff] %vm549, %v2271
        %2401 = vst.msk [vmem:[%s2280 + $0x3c0] sm:$0xff] %vm549, %v2272
        %2402 = vst.msk [vmem:[%s2280 + $0x3c8] sm:$0xff] %vm549, %v2273
        %2403 = vst.msk [vmem:[%s2280 + $0x3d0] sm:$0xff] %vm549, %v2274
        %2404 = vst.msk [vmem:[%s2280 + $0x3d8] sm:$0xff] %vm549, %v2275
        %2405 = vst.msk [vmem:[%s2280 + $0x3e0] sm:$0xff] %vm549, %v2276
        %2406 = vst.msk [vmem:[%s2280 + $0x3e8] sm:$0xff] %vm549, %v2277
        %2407 = vst.msk [vmem:[%s2280 + $0x3f0] sm:$0xff] %vm549, %v2278
        %2408 = vst.msk [vmem:[%s2280 + $0x3f8] sm:$0xff] %vm549, %v2279
        %v2409 = vld [vmem:[#allocation6] sm:$0xff]
        %v2410 = vld [vmem:[#allocation6 + $0x8] sm:$0xff]
        %v2411 = vld [vmem:[#allocation8] sm:$0xff]
        %v2412 = vld [vmem:[#allocation8 + $0x8] sm:$0xff]
        %v2413 = vld [vmem:[#allocation8 + $0x10] sm:$0xff]
        %v2414 = vld [vmem:[#allocation8 + $0x18] sm:$0xff]
        %v2415 = vld [vmem:[#allocation8 + $0x20] sm:$0xff]
        %v2416 = vld [vmem:[#allocation8 + $0x28] sm:$0xff]
        %v2417 = vld [vmem:[#allocation8 + $0x30] sm:$0xff]
        %v2418 = vld [vmem:[#allocation8 + $0x38] sm:$0xff]
        %v2419 = vld [vmem:[#allocation8 + $0x200] sm:$0xff]
        %v2420 = vld [vmem:[#allocation8 + $0x208] sm:$0xff]
        %v2421 = vld [vmem:[#allocation8 + $0x210] sm:$0xff]
        %v2422 = vld [vmem:[#allocation8 + $0x218] sm:$0xff]
        %v2423 = vld [vmem:[#allocation8 + $0x220] sm:$0xff]
        %v2424 = vld [vmem:[#allocation8 + $0x228] sm:$0xff]
        %v2425 = vld [vmem:[#allocation8 + $0x230] sm:$0xff]
        %v2426 = vld [vmem:[#allocation8 + $0x238] sm:$0xff]
        %v2427 = vld [vmem:[#allocation9] sm:$0xff]
        %v2428 = vld [vmem:[#allocation9 + $0x8] sm:$0xff]
        %v2429 = vld [vmem:[#allocation9 + $0x10] sm:$0xff]
        %v2430 = vld [vmem:[#allocation9 + $0x18] sm:$0xff]
        %v2431 = vld [vmem:[#allocation9 + $0x20] sm:$0xff]
        %v2432 = vld [vmem:[#allocation9 + $0x28] sm:$0xff]
        %v2433 = vld [vmem:[#allocation9 + $0x30] sm:$0xff]
        %v2434 = vld [vmem:[#allocation9 + $0x38] sm:$0xff]
        %v2435 = vld [vmem:[#allocation9 + $0x200] sm:$0xff]
        %v2436 = vld [vmem:[#allocation9 + $0x208] sm:$0xff]
        %v2437 = vld [vmem:[#allocation9 + $0x210] sm:$0xff]
        %v2438 = vld [vmem:[#allocation9 + $0x218] sm:$0xff]
        %v2439 = vld [vmem:[#allocation9 + $0x220] sm:$0xff]
        %v2440 = vld [vmem:[#allocation9 + $0x228] sm:$0xff]
        %v2441 = vld [vmem:[#allocation9 + $0x230] sm:$0xff]
        %v2442 = vld [vmem:[#allocation9 + $0x238] sm:$0xff]
        %v2443 = vmul.f32 %v2411, 0.0
        %v2444 = vmul.f32 %v2412, 0.0
        %v2445 = vmul.f32 %v2413, 0.0
        %v2446 = vmul.f32 %v2414, 0.0
        %v2447 = vmul.f32 %v2415, 0.0
        %v2448 = vmul.f32 %v2416, 0.0
        %v2449 = vmul.f32 %v2417, 0.0
        %v2450 = vmul.f32 %v2418, 0.0
        %v2451 = vmul.f32 %v2419, 0.0
        %v2452 = vmul.f32 %v2420, 0.0
        %v2453 = vmul.f32 %v2421, 0.0
        %v2454 = vmul.f32 %v2422, 0.0
        %v2455 = vmul.f32 %v2423, 0.0
        %v2456 = vmul.f32 %v2424, 0.0
        %v2457 = vmul.f32 %v2425, 0.0
        %v2458 = vmul.f32 %v2426, 0.0
        %v2459 = vadd.f32 %v2443, %v2427
        %v2460 = vadd.f32 %v2444, %v2428
        %v2461 = vadd.f32 %v2445, %v2429
        %v2462 = vadd.f32 %v2446, %v2430
        %v2463 = vadd.f32 %v2447, %v2431
        %v2464 = vadd.f32 %v2448, %v2432
        %v2465 = vadd.f32 %v2449, %v2433
        %v2466 = vadd.f32 %v2450, %v2434
        %v2467 = vadd.f32 %v2451, %v2435
        %v2468 = vadd.f32 %v2452, %v2436
        %v2469 = vadd.f32 %v2453, %v2437
        %v2470 = vadd.f32 %v2454, %v2438
        %v2471 = vadd.f32 %v2455, %v2439
        %v2472 = vadd.f32 %v2456, %v2440
        %v2473 = vadd.f32 %v2457, %v2441
        %v2474 = vadd.f32 %v2458, %v2442
        %v2475 = vperm.slane %v2409, 0
        %v2476 = vlaneseq
        %v2477 = vshrl.u32 %v2476, 7
        %2479 = vset.pattern.permute.xlu0 %v2477
        %2480 = vperm.xlu0 %2479, %v2475
        %v2481 = vpop.permute.xlu0 %2480
        %v2482 = vlaneseq
        %v2483 = vshrl.u32 %v2482, 7
        %v2484 = vadd.s32 %v2483, 8
        %2485 = vset.pattern.permute.xlu0 %v2484
        %2486 = vperm.xlu0 %2485, %v2475
        %v2487 = vpop.permute.xlu0 %2486
        %v2488 = vlaneseq
        %v2489 = vshrl.u32 %v2488, 7
        %v2490 = vadd.s32 %v2489, 16
        %2491 = vset.pattern.permute.xlu0 %v2490
        %2492 = vperm.xlu0 %2491, %v2475
        %v2493 = vpop.permute.xlu0 %2492
        %v2494 = vlaneseq
        %v2495 = vshrl.u32 %v2494, 7
        %v2496 = vadd.s32 %v2495, 24
        %2497 = vset.pattern.permute.xlu0 %v2496
        %2498 = vperm.xlu0 %2497, %v2475
        %v2499 = vpop.permute.xlu0 %2498
        %v2500 = vlaneseq
        %v2501 = vshrl.u32 %v2500, 7
        %v2502 = vadd.s32 %v2501, 32
        %2503 = vset.pattern.permute.xlu0 %v2502
        %2504 = vperm.xlu0 %2503, %v2475
        %v2505 = vpop.permute.xlu0 %2504
        %v2506 = vlaneseq
        %v2507 = vshrl.u32 %v2506, 7
        %v2508 = vadd.s32 %v2507, 40
        %2509 = vset.pattern.permute.xlu0 %v2508
        %2510 = vperm.xlu0 %2509, %v2475
        %v2511 = vpop.permute.xlu0 %2510
        %v2512 = vlaneseq
        %v2513 = vshrl.u32 %v2512, 7
        %v2514 = vadd.s32 %v2513, 48
        %2515 = vset.pattern.permute.xlu0 %v2514
        %2516 = vperm.xlu0 %2515, %v2475
        %v2517 = vpop.permute.xlu0 %2516
        %v2518 = vlaneseq
        %v2519 = vshrl.u32 %v2518, 7
        %v2520 = vadd.s32 %v2519, 56
        %2521 = vset.pattern.permute.xlu0 %v2520
        %2522 = vperm.xlu0 %2521, %v2475
        %v2523 = vpop.permute.xlu0 %2522
        %v2524 = vperm.slane %v2410, 0
        %v2525 = vlaneseq
        %v2526 = vshrl.u32 %v2525, 7
        %2528 = vset.pattern.permute.xlu0 %v2526
        %2529 = vperm.xlu0 %2528, %v2524
        %v2530 = vpop.permute.xlu0 %2529
        %v2531 = vlaneseq
        %v2532 = vshrl.u32 %v2531, 7
        %v2533 = vadd.s32 %v2532, 8
        %2534 = vset.pattern.permute.xlu0 %v2533
        %2535 = vperm.xlu0 %2534, %v2524
        %v2536 = vpop.permute.xlu0 %2535
        %v2537 = vlaneseq
        %v2538 = vshrl.u32 %v2537, 7
        %v2539 = vadd.s32 %v2538, 16
        %2540 = vset.pattern.permute.xlu0 %v2539
        %2541 = vperm.xlu0 %2540, %v2524
        %v2542 = vpop.permute.xlu0 %2541
        %v2543 = vlaneseq
        %v2544 = vshrl.u32 %v2543, 7
        %v2545 = vadd.s32 %v2544, 24
        %2546 = vset.pattern.permute.xlu0 %v2545
        %2547 = vperm.xlu0 %2546, %v2524
        %v2548 = vpop.permute.xlu0 %2547
        %v2549 = vlaneseq
        %v2550 = vshrl.u32 %v2549, 7
        %v2551 = vadd.s32 %v2550, 32
        %2552 = vset.pattern.permute.xlu0 %v2551
        %2553 = vperm.xlu0 %2552, %v2524
        %v2554 = vpop.permute.xlu0 %2553
        %v2555 = vlaneseq
        %v2556 = vshrl.u32 %v2555, 7
        %v2557 = vadd.s32 %v2556, 40
        %2558 = vset.pattern.permute.xlu0 %v2557
        %2559 = vperm.xlu0 %2558, %v2524
        %v2560 = vpop.permute.xlu0 %2559
        %v2561 = vlaneseq
        %v2562 = vshrl.u32 %v2561, 7
        %v2563 = vadd.s32 %v2562, 48
        %2564 = vset.pattern.permute.xlu0 %v2563
        %2565 = vperm.xlu0 %2564, %v2524
        %v2566 = vpop.permute.xlu0 %2565
        %v2567 = vlaneseq
        %v2568 = vshrl.u32 %v2567, 7
        %v2569 = vadd.s32 %v2568, 56
        %2570 = vset.pattern.permute.xlu0 %v2569
        %2571 = vperm.xlu0 %2570, %v2524
        %v2572 = vpop.permute.xlu0 %2571
        %v2573 = vmul.f32 %v2459, %v2481
        %v2574 = vmul.f32 %v2460, %v2487
        %v2575 = vmul.f32 %v2461, %v2493
        %v2576 = vmul.f32 %v2462, %v2499
        %v2577 = vmul.f32 %v2463, %v2505
        %v2578 = vmul.f32 %v2464, %v2511
        %v2579 = vmul.f32 %v2465, %v2517
        %v2580 = vmul.f32 %v2466, %v2523
        %v2581 = vmul.f32 %v2467, %v2530
        %v2582 = vmul.f32 %v2468, %v2536
        %v2583 = vmul.f32 %v2469, %v2542
        %v2584 = vmul.f32 %v2470, %v2548
        %v2585 = vmul.f32 %v2471, %v2554
        %v2586 = vmul.f32 %v2472, %v2560
        %v2587 = vmul.f32 %v2473, %v2566
        %v2588 = vmul.f32 %v2474, %v2572
        %v2589 = vsel %vm549, %v2573, 0.0
        %v2590 = vsel %vm549, %v2574, 0.0
        %v2591 = vadd.f32 %v2589, %v2590
        %v2592 = vsel %vm549, %v2575, 0.0
        %v2593 = vadd.f32 %v2591, %v2592
        %v2594 = vsel %vm549, %v2576, 0.0
        %v2595 = vadd.f32 %v2593, %v2594
        %v2596 = vsel %vm549, %v2577, 0.0
        %v2597 = vadd.f32 %v2595, %v2596
        %v2598 = vsel %vm549, %v2578, 0.0
        %v2599 = vadd.f32 %v2597, %v2598
        %v2600 = vsel %vm549, %v2579, 0.0
        %v2601 = vadd.f32 %v2599, %v2600
        %v2602 = vsel %vm549, %v2580, 0.0
        %v2603 = vadd.f32 %v2601, %v2602
        %v2604 = vrot.slane %v2603, 4
        %v2605 = vadd.f32 %v2603, %v2604
        %v2606 = vrot.slane %v2605, 2
        %v2607 = vadd.f32 %v2605, %v2606
        %v2608 = vrot.slane %v2607, 1
        %v2609 = vadd.f32 %v2607, %v2608
        %v2610 = vsel %vm549, %v2581, 0.0
        %v2611 = vsel %vm549, %v2582, 0.0
        %v2612 = vadd.f32 %v2610, %v2611
        %v2613 = vsel %vm549, %v2583, 0.0
        %v2614 = vadd.f32 %v2612, %v2613
        %v2615 = vsel %vm549, %v2584, 0.0
        %v2616 = vadd.f32 %v2614, %v2615
        %v2617 = vsel %vm549, %v2585, 0.0
        %v2618 = vadd.f32 %v2616, %v2617
        %v2619 = vsel %vm549, %v2586, 0.0
        %v2620 = vadd.f32 %v2618, %v2619
        %v2621 = vsel %vm549, %v2587, 0.0
        %v2622 = vadd.f32 %v2620, %v2621
        %v2623 = vsel %vm549, %v2588, 0.0
        %v2624 = vadd.f32 %v2622, %v2623
        %v2625 = vrot.slane %v2624, 4
        %v2626 = vadd.f32 %v2624, %v2625
        %v2627 = vrot.slane %v2626, 2
        %v2628 = vadd.f32 %v2626, %v2627
        %v2629 = vrot.slane %v2628, 1
        %v2630 = vadd.f32 %v2628, %v2629
        %s2631 = scalar_lea.vmem [#allocation8], 64
        %v2632 = vld [vmem:[%s2631] sm:$0xff]
        %v2633 = vld [vmem:[%s2631 + $0x8] sm:$0xff]
        %v2634 = vld [vmem:[%s2631 + $0x10] sm:$0xff]
        %v2635 = vld [vmem:[%s2631 + $0x18] sm:$0xff]
        %v2636 = vld [vmem:[%s2631 + $0x20] sm:$0xff]
        %v2637 = vld [vmem:[%s2631 + $0x28] sm:$0xff]
        %v2638 = vld [vmem:[%s2631 + $0x30] sm:$0xff]
        %v2639 = vld [vmem:[%s2631 + $0x38] sm:$0xff]
        %v2640 = vld [vmem:[%s2631 + $0x200] sm:$0xff]
        %v2641 = vld [vmem:[%s2631 + $0x208] sm:$0xff]
        %v2642 = vld [vmem:[%s2631 + $0x210] sm:$0xff]
        %v2643 = vld [vmem:[%s2631 + $0x218] sm:$0xff]
        %v2644 = vld [vmem:[%s2631 + $0x220] sm:$0xff]
        %v2645 = vld [vmem:[%s2631 + $0x228] sm:$0xff]
        %v2646 = vld [vmem:[%s2631 + $0x230] sm:$0xff]
        %v2647 = vld [vmem:[%s2631 + $0x238] sm:$0xff]
        %s2648 = scalar_lea.vmem [#allocation9], 64
        %v2649 = vld [vmem:[%s2648] sm:$0xff]
        %v2650 = vld [vmem:[%s2648 + $0x8] sm:$0xff]
        %v2651 = vld [vmem:[%s2648 + $0x10] sm:$0xff]
        %v2652 = vld [vmem:[%s2648 + $0x18] sm:$0xff]
        %v2653 = vld [vmem:[%s2648 + $0x20] sm:$0xff]
        %v2654 = vld [vmem:[%s2648 + $0x28] sm:$0xff]
        %v2655 = vld [vmem:[%s2648 + $0x30] sm:$0xff]
        %v2656 = vld [vmem:[%s2648 + $0x38] sm:$0xff]
        %v2657 = vld [vmem:[%s2648 + $0x200] sm:$0xff]
        %v2658 = vld [vmem:[%s2648 + $0x208] sm:$0xff]
        %v2659 = vld [vmem:[%s2648 + $0x210] sm:$0xff]
        %v2660 = vld [vmem:[%s2648 + $0x218] sm:$0xff]
        %v2661 = vld [vmem:[%s2648 + $0x220] sm:$0xff]
        %v2662 = vld [vmem:[%s2648 + $0x228] sm:$0xff]
        %v2663 = vld [vmem:[%s2648 + $0x230] sm:$0xff]
        %v2664 = vld [vmem:[%s2648 + $0x238] sm:$0xff]
        %v2665 = vmul.f32 %v2632, %v2459
        %v2666 = vmul.f32 %v2633, %v2460
        %v2667 = vmul.f32 %v2634, %v2461
        %v2668 = vmul.f32 %v2635, %v2462
        %v2669 = vmul.f32 %v2636, %v2463
        %v2670 = vmul.f32 %v2637, %v2464
        %v2671 = vmul.f32 %v2638, %v2465
        %v2672 = vmul.f32 %v2639, %v2466
        %v2673 = vmul.f32 %v2640, %v2467
        %v2674 = vmul.f32 %v2641, %v2468
        %v2675 = vmul.f32 %v2642, %v2469
        %v2676 = vmul.f32 %v2643, %v2470
        %v2677 = vmul.f32 %v2644, %v2471
        %v2678 = vmul.f32 %v2645, %v2472
        %v2679 = vmul.f32 %v2646, %v2473
        %v2680 = vmul.f32 %v2647, %v2474
        %v2681 = vadd.f32 %v2665, %v2649
        %v2682 = vadd.f32 %v2666, %v2650
        %v2683 = vadd.f32 %v2667, %v2651
        %v2684 = vadd.f32 %v2668, %v2652
        %v2685 = vadd.f32 %v2669, %v2653
        %v2686 = vadd.f32 %v2670, %v2654
        %v2687 = vadd.f32 %v2671, %v2655
        %v2688 = vadd.f32 %v2672, %v2656
        %v2689 = vadd.f32 %v2673, %v2657
        %v2690 = vadd.f32 %v2674, %v2658
        %v2691 = vadd.f32 %v2675, %v2659
        %v2692 = vadd.f32 %v2676, %v2660
        %v2693 = vadd.f32 %v2677, %v2661
        %v2694 = vadd.f32 %v2678, %v2662
        %v2695 = vadd.f32 %v2679, %v2663
        %v2696 = vadd.f32 %v2680, %v2664
        %v2697 = vperm.slane %v2409, 1
        %v2698 = vlaneseq
        %v2699 = vshrl.u32 %v2698, 7
        %2701 = vset.pattern.permute.xlu0 %v2699
        %2702 = vperm.xlu0 %2701, %v2697
        %v2703 = vpop.permute.xlu0 %2702
        %v2704 = vlaneseq
        %v2705 = vshrl.u32 %v2704, 7
        %v2706 = vadd.s32 %v2705, 8
        %2707 = vset.pattern.permute.xlu0 %v2706
        %2708 = vperm.xlu0 %2707, %v2697
        %v2709 = vpop.permute.xlu0 %2708
        %v2710 = vlaneseq
        %v2711 = vshrl.u32 %v2710, 7
        %v2712 = vadd.s32 %v2711, 16
        %2713 = vset.pattern.permute.xlu0 %v2712
        %2714 = vperm.xlu0 %2713, %v2697
        %v2715 = vpop.permute.xlu0 %2714
        %v2716 = vlaneseq
        %v2717 = vshrl.u32 %v2716, 7
        %v2718 = vadd.s32 %v2717, 24
        %2719 = vset.pattern.permute.xlu0 %v2718
        %2720 = vperm.xlu0 %2719, %v2697
        %v2721 = vpop.permute.xlu0 %2720
        %v2722 = vlaneseq
        %v2723 = vshrl.u32 %v2722, 7
        %v2724 = vadd.s32 %v2723, 32
        %2725 = vset.pattern.permute.xlu0 %v2724
        %2726 = vperm.xlu0 %2725, %v2697
        %v2727 = vpop.permute.xlu0 %2726
        %v2728 = vlaneseq
        %v2729 = vshrl.u32 %v2728, 7
        %v2730 = vadd.s32 %v2729, 40
        %2731 = vset.pattern.permute.xlu0 %v2730
        %2732 = vperm.xlu0 %2731, %v2697
        %v2733 = vpop.permute.xlu0 %2732
        %v2734 = vlaneseq
        %v2735 = vshrl.u32 %v2734, 7
        %v2736 = vadd.s32 %v2735, 48
        %2737 = vset.pattern.permute.xlu0 %v2736
        %2738 = vperm.xlu0 %2737, %v2697
        %v2739 = vpop.permute.xlu0 %2738
        %v2740 = vlaneseq
        %v2741 = vshrl.u32 %v2740, 7
        %v2742 = vadd.s32 %v2741, 56
        %2743 = vset.pattern.permute.xlu0 %v2742
        %2744 = vperm.xlu0 %2743, %v2697
        %v2745 = vpop.permute.xlu0 %2744
        %v2746 = vperm.slane %v2410, 1
        %v2747 = vlaneseq
        %v2748 = vshrl.u32 %v2747, 7
        %2750 = vset.pattern.permute.xlu0 %v2748
        %2751 = vperm.xlu0 %2750, %v2746
        %v2752 = vpop.permute.xlu0 %2751
        %v2753 = vlaneseq
        %v2754 = vshrl.u32 %v2753, 7
        %v2755 = vadd.s32 %v2754, 8
        %2756 = vset.pattern.permute.xlu0 %v2755
        %2757 = vperm.xlu0 %2756, %v2746
        %v2758 = vpop.permute.xlu0 %2757
        %v2759 = vlaneseq
        %v2760 = vshrl.u32 %v2759, 7
        %v2761 = vadd.s32 %v2760, 16
        %2762 = vset.pattern.permute.xlu0 %v2761
        %2763 = vperm.xlu0 %2762, %v2746
        %v2764 = vpop.permute.xlu0 %2763
        %v2765 = vlaneseq
        %v2766 = vshrl.u32 %v2765, 7
        %v2767 = vadd.s32 %v2766, 24
        %2768 = vset.pattern.permute.xlu0 %v2767
        %2769 = vperm.xlu0 %2768, %v2746
        %v2770 = vpop.permute.xlu0 %2769
        %v2771 = vlaneseq
        %v2772 = vshrl.u32 %v2771, 7
        %v2773 = vadd.s32 %v2772, 32
        %2774 = vset.pattern.permute.xlu0 %v2773
        %2775 = vperm.xlu0 %2774, %v2746
        %v2776 = vpop.permute.xlu0 %2775
        %v2777 = vlaneseq
        %v2778 = vshrl.u32 %v2777, 7
        %v2779 = vadd.s32 %v2778, 40
        %2780 = vset.pattern.permute.xlu0 %v2779
        %2781 = vperm.xlu0 %2780, %v2746
        %v2782 = vpop.permute.xlu0 %2781
        %v2783 = vlaneseq
        %v2784 = vshrl.u32 %v2783, 7
        %v2785 = vadd.s32 %v2784, 48
        %2786 = vset.pattern.permute.xlu0 %v2785
        %2787 = vperm.xlu0 %2786, %v2746
        %v2788 = vpop.permute.xlu0 %2787
        %v2789 = vlaneseq
        %v2790 = vshrl.u32 %v2789, 7
        %v2791 = vadd.s32 %v2790, 56
        %2792 = vset.pattern.permute.xlu0 %v2791
        %2793 = vperm.xlu0 %2792, %v2746
        %v2794 = vpop.permute.xlu0 %2793
        %v2795 = vmul.f32 %v2681, %v2703
        %v2796 = vmul.f32 %v2682, %v2709
        %v2797 = vmul.f32 %v2683, %v2715
        %v2798 = vmul.f32 %v2684, %v2721
        %v2799 = vmul.f32 %v2685, %v2727
        %v2800 = vmul.f32 %v2686, %v2733
        %v2801 = vmul.f32 %v2687, %v2739
        %v2802 = vmul.f32 %v2688, %v2745
        %v2803 = vmul.f32 %v2689, %v2752
        %v2804 = vmul.f32 %v2690, %v2758
        %v2805 = vmul.f32 %v2691, %v2764
        %v2806 = vmul.f32 %v2692, %v2770
        %v2807 = vmul.f32 %v2693, %v2776
        %v2808 = vmul.f32 %v2694, %v2782
        %v2809 = vmul.f32 %v2695, %v2788
        %v2810 = vmul.f32 %v2696, %v2794
        %v2811 = vsel %vm549, %v2795, 0.0
        %v2812 = vsel %vm549, %v2796, 0.0
        %v2813 = vadd.f32 %v2811, %v2812
        %v2814 = vsel %vm549, %v2797, 0.0
        %v2815 = vadd.f32 %v2813, %v2814
        %v2816 = vsel %vm549, %v2798, 0.0
        %v2817 = vadd.f32 %v2815, %v2816
        %v2818 = vsel %vm549, %v2799, 0.0
        %v2819 = vadd.f32 %v2817, %v2818
        %v2820 = vsel %vm549, %v2800, 0.0
        %v2821 = vadd.f32 %v2819, %v2820
        %v2822 = vsel %vm549, %v2801, 0.0
        %v2823 = vadd.f32 %v2821, %v2822
        %v2824 = vsel %vm549, %v2802, 0.0
        %v2825 = vadd.f32 %v2823, %v2824
        %v2826 = vrot.slane %v2825, 4
        %v2827 = vadd.f32 %v2825, %v2826
        %v2828 = vrot.slane %v2827, 2
        %v2829 = vadd.f32 %v2827, %v2828
        %v2830 = vrot.slane %v2829, 1
        %v2831 = vadd.f32 %v2829, %v2830
        %v2832 = vsel %vm549, %v2803, 0.0
        %v2833 = vsel %vm549, %v2804, 0.0
        %v2834 = vadd.f32 %v2832, %v2833
        %v2835 = vsel %vm549, %v2805, 0.0
        %v2836 = vadd.f32 %v2834, %v2835
        %v2837 = vsel %vm549, %v2806, 0.0
        %v2838 = vadd.f32 %v2836, %v2837
        %v2839 = vsel %vm549, %v2807, 0.0
        %v2840 = vadd.f32 %v2838, %v2839
        %v2841 = vsel %vm549, %v2808, 0.0
        %v2842 = vadd.f32 %v2840, %v2841
        %v2843 = vsel %vm549, %v2809, 0.0
        %v2844 = vadd.f32 %v2842, %v2843
        %v2845 = vsel %vm549, %v2810, 0.0
        %v2846 = vadd.f32 %v2844, %v2845
        %v2847 = vrot.slane %v2846, 4
        %v2848 = vadd.f32 %v2846, %v2847
        %v2849 = vrot.slane %v2848, 2
        %v2850 = vadd.f32 %v2848, %v2849
        %v2851 = vrot.slane %v2850, 1
        %v2852 = vadd.f32 %v2850, %v2851
        %s2853 = scalar_lea.vmem [#allocation8], 128
        %v2854 = vld [vmem:[%s2853] sm:$0xff]
        %v2855 = vld [vmem:[%s2853 + $0x8] sm:$0xff]
        %v2856 = vld [vmem:[%s2853 + $0x10] sm:$0xff]
        %v2857 = vld [vmem:[%s2853 + $0x18] sm:$0xff]
        %v2858 = vld [vmem:[%s2853 + $0x20] sm:$0xff]
        %v2859 = vld [vmem:[%s2853 + $0x28] sm:$0xff]
        %v2860 = vld [vmem:[%s2853 + $0x30] sm:$0xff]
        %v2861 = vld [vmem:[%s2853 + $0x38] sm:$0xff]
        %v2862 = vld [vmem:[%s2853 + $0x200] sm:$0xff]
        %v2863 = vld [vmem:[%s2853 + $0x208] sm:$0xff]
        %v2864 = vld [vmem:[%s2853 + $0x210] sm:$0xff]
        %v2865 = vld [vmem:[%s2853 + $0x218] sm:$0xff]
        %v2866 = vld [vmem:[%s2853 + $0x220] sm:$0xff]
        %v2867 = vld [vmem:[%s2853 + $0x228] sm:$0xff]
        %v2868 = vld [vmem:[%s2853 + $0x230] sm:$0xff]
        %v2869 = vld [vmem:[%s2853 + $0x238] sm:$0xff]
        %s2870 = scalar_lea.vmem [#allocation9], 128
        %v2871 = vld [vmem:[%s2870] sm:$0xff]
        %v2872 = vld [vmem:[%s2870 + $0x8] sm:$0xff]
        %v2873 = vld [vmem:[%s2870 + $0x10] sm:$0xff]
        %v2874 = vld [vmem:[%s2870 + $0x18] sm:$0xff]
        %v2875 = vld [vmem:[%s2870 + $0x20] sm:$0xff]
        %v2876 = vld [vmem:[%s2870 + $0x28] sm:$0xff]
        %v2877 = vld [vmem:[%s2870 + $0x30] sm:$0xff]
        %v2878 = vld [vmem:[%s2870 + $0x38] sm:$0xff]
        %v2879 = vld [vmem:[%s2870 + $0x200] sm:$0xff]
        %v2880 = vld [vmem:[%s2870 + $0x208] sm:$0xff]
        %v2881 = vld [vmem:[%s2870 + $0x210] sm:$0xff]
        %v2882 = vld [vmem:[%s2870 + $0x218] sm:$0xff]
        %v2883 = vld [vmem:[%s2870 + $0x220] sm:$0xff]
        %v2884 = vld [vmem:[%s2870 + $0x228] sm:$0xff]
        %v2885 = vld [vmem:[%s2870 + $0x230] sm:$0xff]
        %v2886 = vld [vmem:[%s2870 + $0x238] sm:$0xff]
        %v2887 = vmul.f32 %v2854, %v2681
        %v2888 = vmul.f32 %v2855, %v2682
        %v2889 = vmul.f32 %v2856, %v2683
        %v2890 = vmul.f32 %v2857, %v2684
        %v2891 = vmul.f32 %v2858, %v2685
        %v2892 = vmul.f32 %v2859, %v2686
        %v2893 = vmul.f32 %v2860, %v2687
        %v2894 = vmul.f32 %v2861, %v2688
        %v2895 = vmul.f32 %v2862, %v2689
        %v2896 = vmul.f32 %v2863, %v2690
        %v2897 = vmul.f32 %v2864, %v2691
        %v2898 = vmul.f32 %v2865, %v2692
        %v2899 = vmul.f32 %v2866, %v2693
        %v2900 = vmul.f32 %v2867, %v2694
        %v2901 = vmul.f32 %v2868, %v2695
        %v2902 = vmul.f32 %v2869, %v2696
        %v2903 = vadd.f32 %v2887, %v2871
        %v2904 = vadd.f32 %v2888, %v2872
        %v2905 = vadd.f32 %v2889, %v2873
        %v2906 = vadd.f32 %v2890, %v2874
        %v2907 = vadd.f32 %v2891, %v2875
        %v2908 = vadd.f32 %v2892, %v2876
        %v2909 = vadd.f32 %v2893, %v2877
        %v2910 = vadd.f32 %v2894, %v2878
        %v2911 = vadd.f32 %v2895, %v2879
        %v2912 = vadd.f32 %v2896, %v2880
        %v2913 = vadd.f32 %v2897, %v2881
        %v2914 = vadd.f32 %v2898, %v2882
        %v2915 = vadd.f32 %v2899, %v2883
        %v2916 = vadd.f32 %v2900, %v2884
        %v2917 = vadd.f32 %v2901, %v2885
        %v2918 = vadd.f32 %v2902, %v2886
        %v2919 = vperm.slane %v2409, 2
        %v2920 = vlaneseq
        %v2921 = vshrl.u32 %v2920, 7
        %2923 = vset.pattern.permute.xlu0 %v2921
        %2924 = vperm.xlu0 %2923, %v2919
        %v2925 = vpop.permute.xlu0 %2924
        %v2926 = vlaneseq
        %v2927 = vshrl.u32 %v2926, 7
        %v2928 = vadd.s32 %v2927, 8
        %2929 = vset.pattern.permute.xlu0 %v2928
        %2930 = vperm.xlu0 %2929, %v2919
        %v2931 = vpop.permute.xlu0 %2930
        %v2932 = vlaneseq
        %v2933 = vshrl.u32 %v2932, 7
        %v2934 = vadd.s32 %v2933, 16
        %2935 = vset.pattern.permute.xlu0 %v2934
        %2936 = vperm.xlu0 %2935, %v2919
        %v2937 = vpop.permute.xlu0 %2936
        %v2938 = vlaneseq
        %v2939 = vshrl.u32 %v2938, 7
        %v2940 = vadd.s32 %v2939, 24
        %2941 = vset.pattern.permute.xlu0 %v2940
        %2942 = vperm.xlu0 %2941, %v2919
        %v2943 = vpop.permute.xlu0 %2942
        %v2944 = vlaneseq
        %v2945 = vshrl.u32 %v2944, 7
        %v2946 = vadd.s32 %v2945, 32
        %2947 = vset.pattern.permute.xlu0 %v2946
        %2948 = vperm.xlu0 %2947, %v2919
        %v2949 = vpop.permute.xlu0 %2948
        %v2950 = vlaneseq
        %v2951 = vshrl.u32 %v2950, 7
        %v2952 = vadd.s32 %v2951, 40
        %2953 = vset.pattern.permute.xlu0 %v2952
        %2954 = vperm.xlu0 %2953, %v2919
        %v2955 = vpop.permute.xlu0 %2954
        %v2956 = vlaneseq
        %v2957 = vshrl.u32 %v2956, 7
        %v2958 = vadd.s32 %v2957, 48
        %2959 = vset.pattern.permute.xlu0 %v2958
        %2960 = vperm.xlu0 %2959, %v2919
        %v2961 = vpop.permute.xlu0 %2960
        %v2962 = vlaneseq
        %v2963 = vshrl.u32 %v2962, 7
        %v2964 = vadd.s32 %v2963, 56
        %2965 = vset.pattern.permute.xlu0 %v2964
        %2966 = vperm.xlu0 %2965, %v2919
        %v2967 = vpop.permute.xlu0 %2966
        %v2968 = vperm.slane %v2410, 2
        %v2969 = vlaneseq
        %v2970 = vshrl.u32 %v2969, 7
        %2972 = vset.pattern.permute.xlu0 %v2970
        %2973 = vperm.xlu0 %2972, %v2968
        %v2974 = vpop.permute.xlu0 %2973
        %v2975 = vlaneseq
        %v2976 = vshrl.u32 %v2975, 7
        %v2977 = vadd.s32 %v2976, 8
        %2978 = vset.pattern.permute.xlu0 %v2977
        %2979 = vperm.xlu0 %2978, %v2968
        %v2980 = vpop.permute.xlu0 %2979
        %v2981 = vlaneseq
        %v2982 = vshrl.u32 %v2981, 7
        %v2983 = vadd.s32 %v2982, 16
        %2984 = vset.pattern.permute.xlu0 %v2983
        %2985 = vperm.xlu0 %2984, %v2968
        %v2986 = vpop.permute.xlu0 %2985
        %v2987 = vlaneseq
        %v2988 = vshrl.u32 %v2987, 7
        %v2989 = vadd.s32 %v2988, 24
        %2990 = vset.pattern.permute.xlu0 %v2989
        %2991 = vperm.xlu0 %2990, %v2968
        %v2992 = vpop.permute.xlu0 %2991
        %v2993 = vlaneseq
        %v2994 = vshrl.u32 %v2993, 7
        %v2995 = vadd.s32 %v2994, 32
        %2996 = vset.pattern.permute.xlu0 %v2995
        %2997 = vperm.xlu0 %2996, %v2968
        %v2998 = vpop.permute.xlu0 %2997
        %v2999 = vlaneseq
        %v3000 = vshrl.u32 %v2999, 7
        %v3001 = vadd.s32 %v3000, 40
        %3002 = vset.pattern.permute.xlu0 %v3001
        %3003 = vperm.xlu0 %3002, %v2968
        %v3004 = vpop.permute.xlu0 %3003
        %v3005 = vlaneseq
        %v3006 = vshrl.u32 %v3005, 7
        %v3007 = vadd.s32 %v3006, 48
        %3008 = vset.pattern.permute.xlu0 %v3007
        %3009 = vperm.xlu0 %3008, %v2968
        %v3010 = vpop.permute.xlu0 %3009
        %v3011 = vlaneseq
        %v3012 = vshrl.u32 %v3011, 7
        %v3013 = vadd.s32 %v3012, 56
        %3014 = vset.pattern.permute.xlu0 %v3013
        %3015 = vperm.xlu0 %3014, %v2968
        %v3016 = vpop.permute.xlu0 %3015
        %v3017 = vmul.f32 %v2903, %v2925
        %v3018 = vmul.f32 %v2904, %v2931
        %v3019 = vmul.f32 %v2905, %v2937
        %v3020 = vmul.f32 %v2906, %v2943
        %v3021 = vmul.f32 %v2907, %v2949
        %v3022 = vmul.f32 %v2908, %v2955
        %v3023 = vmul.f32 %v2909, %v2961
        %v3024 = vmul.f32 %v2910, %v2967
        %v3025 = vmul.f32 %v2911, %v2974
        %v3026 = vmul.f32 %v2912, %v2980
        %v3027 = vmul.f32 %v2913, %v2986
        %v3028 = vmul.f32 %v2914, %v2992
        %v3029 = vmul.f32 %v2915, %v2998
        %v3030 = vmul.f32 %v2916, %v3004
        %v3031 = vmul.f32 %v2917, %v3010
        %v3032 = vmul.f32 %v2918, %v3016
        %v3033 = vsel %vm549, %v3017, 0.0
        %v3034 = vsel %vm549, %v3018, 0.0
        %v3035 = vadd.f32 %v3033, %v3034
        %v3036 = vsel %vm549, %v3019, 0.0
        %v3037 = vadd.f32 %v3035, %v3036
        %v3038 = vsel %vm549, %v3020, 0.0
        %v3039 = vadd.f32 %v3037, %v3038
        %v3040 = vsel %vm549, %v3021, 0.0
        %v3041 = vadd.f32 %v3039, %v3040
        %v3042 = vsel %vm549, %v3022, 0.0
        %v3043 = vadd.f32 %v3041, %v3042
        %v3044 = vsel %vm549, %v3023, 0.0
        %v3045 = vadd.f32 %v3043, %v3044
        %v3046 = vsel %vm549, %v3024, 0.0
        %v3047 = vadd.f32 %v3045, %v3046
        %v3048 = vrot.slane %v3047, 4
        %v3049 = vadd.f32 %v3047, %v3048
        %v3050 = vrot.slane %v3049, 2
        %v3051 = vadd.f32 %v3049, %v3050
        %v3052 = vrot.slane %v3051, 1
        %v3053 = vadd.f32 %v3051, %v3052
        %v3054 = vsel %vm549, %v3025, 0.0
        %v3055 = vsel %vm549, %v3026, 0.0
        %v3056 = vadd.f32 %v3054, %v3055
        %v3057 = vsel %vm549, %v3027, 0.0
        %v3058 = vadd.f32 %v3056, %v3057
        %v3059 = vsel %vm549, %v3028, 0.0
        %v3060 = vadd.f32 %v3058, %v3059
        %v3061 = vsel %vm549, %v3029, 0.0
        %v3062 = vadd.f32 %v3060, %v3061
        %v3063 = vsel %vm549, %v3030, 0.0
        %v3064 = vadd.f32 %v3062, %v3063
        %v3065 = vsel %vm549, %v3031, 0.0
        %v3066 = vadd.f32 %v3064, %v3065
        %v3067 = vsel %vm549, %v3032, 0.0
        %v3068 = vadd.f32 %v3066, %v3067
        %v3069 = vrot.slane %v3068, 4
        %v3070 = vadd.f32 %v3068, %v3069
        %v3071 = vrot.slane %v3070, 2
        %v3072 = vadd.f32 %v3070, %v3071
        %v3073 = vrot.slane %v3072, 1
        %v3074 = vadd.f32 %v3072, %v3073
        %s3075 = scalar_lea.vmem [#allocation8], 192
        %v3076 = vld [vmem:[%s3075] sm:$0xff]
        %v3077 = vld [vmem:[%s3075 + $0x8] sm:$0xff]
        %v3078 = vld [vmem:[%s3075 + $0x10] sm:$0xff]
        %v3079 = vld [vmem:[%s3075 + $0x18] sm:$0xff]
        %v3080 = vld [vmem:[%s3075 + $0x20] sm:$0xff]
        %v3081 = vld [vmem:[%s3075 + $0x28] sm:$0xff]
        %v3082 = vld [vmem:[%s3075 + $0x30] sm:$0xff]
        %v3083 = vld [vmem:[%s3075 + $0x38] sm:$0xff]
        %v3084 = vld [vmem:[%s3075 + $0x200] sm:$0xff]
        %v3085 = vld [vmem:[%s3075 + $0x208] sm:$0xff]
        %v3086 = vld [vmem:[%s3075 + $0x210] sm:$0xff]
        %v3087 = vld [vmem:[%s3075 + $0x218] sm:$0xff]
        %v3088 = vld [vmem:[%s3075 + $0x220] sm:$0xff]
        %v3089 = vld [vmem:[%s3075 + $0x228] sm:$0xff]
        %v3090 = vld [vmem:[%s3075 + $0x230] sm:$0xff]
        %v3091 = vld [vmem:[%s3075 + $0x238] sm:$0xff]
        %s3092 = scalar_lea.vmem [#allocation9], 192
        %v3093 = vld [vmem:[%s3092] sm:$0xff]
        %v3094 = vld [vmem:[%s3092 + $0x8] sm:$0xff]
        %v3095 = vld [vmem:[%s3092 + $0x10] sm:$0xff]
        %v3096 = vld [vmem:[%s3092 + $0x18] sm:$0xff]
        %v3097 = vld [vmem:[%s3092 + $0x20] sm:$0xff]
        %v3098 = vld [vmem:[%s3092 + $0x28] sm:$0xff]
        %v3099 = vld [vmem:[%s3092 + $0x30] sm:$0xff]
        %v3100 = vld [vmem:[%s3092 + $0x38] sm:$0xff]
        %v3101 = vld [vmem:[%s3092 + $0x200] sm:$0xff]
        %v3102 = vld [vmem:[%s3092 + $0x208] sm:$0xff]
        %v3103 = vld [vmem:[%s3092 + $0x210] sm:$0xff]
        %v3104 = vld [vmem:[%s3092 + $0x218] sm:$0xff]
        %v3105 = vld [vmem:[%s3092 + $0x220] sm:$0xff]
        %v3106 = vld [vmem:[%s3092 + $0x228] sm:$0xff]
        %v3107 = vld [vmem:[%s3092 + $0x230] sm:$0xff]
        %v3108 = vld [vmem:[%s3092 + $0x238] sm:$0xff]
        %v3109 = vmul.f32 %v3076, %v2903
        %v3110 = vmul.f32 %v3077, %v2904
        %v3111 = vmul.f32 %v3078, %v2905
        %v3112 = vmul.f32 %v3079, %v2906
        %v3113 = vmul.f32 %v3080, %v2907
        %v3114 = vmul.f32 %v3081, %v2908
        %v3115 = vmul.f32 %v3082, %v2909
        %v3116 = vmul.f32 %v3083, %v2910
        %v3117 = vmul.f32 %v3084, %v2911
        %v3118 = vmul.f32 %v3085, %v2912
        %v3119 = vmul.f32 %v3086, %v2913
        %v3120 = vmul.f32 %v3087, %v2914
        %v3121 = vmul.f32 %v3088, %v2915
        %v3122 = vmul.f32 %v3089, %v2916
        %v3123 = vmul.f32 %v3090, %v2917
        %v3124 = vmul.f32 %v3091, %v2918
        %v3125 = vadd.f32 %v3109, %v3093
        %v3126 = vadd.f32 %v3110, %v3094
        %v3127 = vadd.f32 %v3111, %v3095
        %v3128 = vadd.f32 %v3112, %v3096
        %v3129 = vadd.f32 %v3113, %v3097
        %v3130 = vadd.f32 %v3114, %v3098
        %v3131 = vadd.f32 %v3115, %v3099
        %v3132 = vadd.f32 %v3116, %v3100
        %v3133 = vadd.f32 %v3117, %v3101
        %v3134 = vadd.f32 %v3118, %v3102
        %v3135 = vadd.f32 %v3119, %v3103
        %v3136 = vadd.f32 %v3120, %v3104
        %v3137 = vadd.f32 %v3121, %v3105
        %v3138 = vadd.f32 %v3122, %v3106
        %v3139 = vadd.f32 %v3123, %v3107
        %v3140 = vadd.f32 %v3124, %v3108
        %v3141 = vperm.slane %v2409, 3
        %v3142 = vlaneseq
        %v3143 = vshrl.u32 %v3142, 7
        %3145 = vset.pattern.permute.xlu0 %v3143
        %3146 = vperm.xlu0 %3145, %v3141
        %v3147 = vpop.permute.xlu0 %3146
        %v3148 = vlaneseq
        %v3149 = vshrl.u32 %v3148, 7
        %v3150 = vadd.s32 %v3149, 8
        %3151 = vset.pattern.permute.xlu0 %v3150
        %3152 = vperm.xlu0 %3151, %v3141
        %v3153 = vpop.permute.xlu0 %3152
        %v3154 = vlaneseq
        %v3155 = vshrl.u32 %v3154, 7
        %v3156 = vadd.s32 %v3155, 16
        %3157 = vset.pattern.permute.xlu0 %v3156
        %3158 = vperm.xlu0 %3157, %v3141
        %v3159 = vpop.permute.xlu0 %3158
        %v3160 = vlaneseq
        %v3161 = vshrl.u32 %v3160, 7
        %v3162 = vadd.s32 %v3161, 24
        %3163 = vset.pattern.permute.xlu0 %v3162
        %3164 = vperm.xlu0 %3163, %v3141
        %v3165 = vpop.permute.xlu0 %3164
        %v3166 = vlaneseq
        %v3167 = vshrl.u32 %v3166, 7
        %v3168 = vadd.s32 %v3167, 32
        %3169 = vset.pattern.permute.xlu0 %v3168
        %3170 = vperm.xlu0 %3169, %v3141
        %v3171 = vpop.permute.xlu0 %3170
        %v3172 = vlaneseq
        %v3173 = vshrl.u32 %v3172, 7
        %v3174 = vadd.s32 %v3173, 40
        %3175 = vset.pattern.permute.xlu0 %v3174
        %3176 = vperm.xlu0 %3175, %v3141
        %v3177 = vpop.permute.xlu0 %3176
        %v3178 = vlaneseq
        %v3179 = vshrl.u32 %v3178, 7
        %v3180 = vadd.s32 %v3179, 48
        %3181 = vset.pattern.permute.xlu0 %v3180
        %3182 = vperm.xlu0 %3181, %v3141
        %v3183 = vpop.permute.xlu0 %3182
        %v3184 = vlaneseq
        %v3185 = vshrl.u32 %v3184, 7
        %v3186 = vadd.s32 %v3185, 56
        %3187 = vset.pattern.permute.xlu0 %v3186
        %3188 = vperm.xlu0 %3187, %v3141
        %v3189 = vpop.permute.xlu0 %3188
        %v3190 = vperm.slane %v2410, 3
        %v3191 = vlaneseq
        %v3192 = vshrl.u32 %v3191, 7
        %3194 = vset.pattern.permute.xlu0 %v3192
        %3195 = vperm.xlu0 %3194, %v3190
        %v3196 = vpop.permute.xlu0 %3195
        %v3197 = vlaneseq
        %v3198 = vshrl.u32 %v3197, 7
        %v3199 = vadd.s32 %v3198, 8
        %3200 = vset.pattern.permute.xlu0 %v3199
        %3201 = vperm.xlu0 %3200, %v3190
        %v3202 = vpop.permute.xlu0 %3201
        %v3203 = vlaneseq
        %v3204 = vshrl.u32 %v3203, 7
        %v3205 = vadd.s32 %v3204, 16
        %3206 = vset.pattern.permute.xlu0 %v3205
        %3207 = vperm.xlu0 %3206, %v3190
        %v3208 = vpop.permute.xlu0 %3207
        %v3209 = vlaneseq
        %v3210 = vshrl.u32 %v3209, 7
        %v3211 = vadd.s32 %v3210, 24
        %3212 = vset.pattern.permute.xlu0 %v3211
        %3213 = vperm.xlu0 %3212, %v3190
        %v3214 = vpop.permute.xlu0 %3213
        %v3215 = vlaneseq
        %v3216 = vshrl.u32 %v3215, 7
        %v3217 = vadd.s32 %v3216, 32
        %3218 = vset.pattern.permute.xlu0 %v3217
        %3219 = vperm.xlu0 %3218, %v3190
        %v3220 = vpop.permute.xlu0 %3219
        %v3221 = vlaneseq
        %v3222 = vshrl.u32 %v3221, 7
        %v3223 = vadd.s32 %v3222, 40
        %3224 = vset.pattern.permute.xlu0 %v3223
        %3225 = vperm.xlu0 %3224, %v3190
        %v3226 = vpop.permute.xlu0 %3225
        %v3227 = vlaneseq
        %v3228 = vshrl.u32 %v3227, 7
        %v3229 = vadd.s32 %v3228, 48
        %3230 = vset.pattern.permute.xlu0 %v3229
        %3231 = vperm.xlu0 %3230, %v3190
        %v3232 = vpop.permute.xlu0 %3231
        %v3233 = vlaneseq
        %v3234 = vshrl.u32 %v3233, 7
        %v3235 = vadd.s32 %v3234, 56
        %3236 = vset.pattern.permute.xlu0 %v3235
        %3237 = vperm.xlu0 %3236, %v3190
        %v3238 = vpop.permute.xlu0 %3237
        %v3239 = vmul.f32 %v3125, %v3147
        %v3240 = vmul.f32 %v3126, %v3153
        %v3241 = vmul.f32 %v3127, %v3159
        %v3242 = vmul.f32 %v3128, %v3165
        %v3243 = vmul.f32 %v3129, %v3171
        %v3244 = vmul.f32 %v3130, %v3177
        %v3245 = vmul.f32 %v3131, %v3183
        %v3246 = vmul.f32 %v3132, %v3189
        %v3247 = vmul.f32 %v3133, %v3196
        %v3248 = vmul.f32 %v3134, %v3202
        %v3249 = vmul.f32 %v3135, %v3208
        %v3250 = vmul.f32 %v3136, %v3214
        %v3251 = vmul.f32 %v3137, %v3220
        %v3252 = vmul.f32 %v3138, %v3226
        %v3253 = vmul.f32 %v3139, %v3232
        %v3254 = vmul.f32 %v3140, %v3238
        %v3255 = vsel %vm549, %v3239, 0.0
        %v3256 = vsel %vm549, %v3240, 0.0
        %v3257 = vadd.f32 %v3255, %v3256
        %v3258 = vsel %vm549, %v3241, 0.0
        %v3259 = vadd.f32 %v3257, %v3258
        %v3260 = vsel %vm549, %v3242, 0.0
        %v3261 = vadd.f32 %v3259, %v3260
        %v3262 = vsel %vm549, %v3243, 0.0
        %v3263 = vadd.f32 %v3261, %v3262
        %v3264 = vsel %vm549, %v3244, 0.0
        %v3265 = vadd.f32 %v3263, %v3264
        %v3266 = vsel %vm549, %v3245, 0.0
        %v3267 = vadd.f32 %v3265, %v3266
        %v3268 = vsel %vm549, %v3246, 0.0
        %v3269 = vadd.f32 %v3267, %v3268
        %v3270 = vrot.slane %v3269, 4
        %v3271 = vadd.f32 %v3269, %v3270
        %v3272 = vrot.slane %v3271, 2
        %v3273 = vadd.f32 %v3271, %v3272
        %v3274 = vrot.slane %v3273, 1
        %v3275 = vadd.f32 %v3273, %v3274
        %v3276 = vsel %vm549, %v3247, 0.0
        %v3277 = vsel %vm549, %v3248, 0.0
        %v3278 = vadd.f32 %v3276, %v3277
        %v3279 = vsel %vm549, %v3249, 0.0
        %v3280 = vadd.f32 %v3278, %v3279
        %v3281 = vsel %vm549, %v3250, 0.0
        %v3282 = vadd.f32 %v3280, %v3281
        %v3283 = vsel %vm549, %v3251, 0.0
        %v3284 = vadd.f32 %v3282, %v3283
        %v3285 = vsel %vm549, %v3252, 0.0
        %v3286 = vadd.f32 %v3284, %v3285
        %v3287 = vsel %vm549, %v3253, 0.0
        %v3288 = vadd.f32 %v3286, %v3287
        %v3289 = vsel %vm549, %v3254, 0.0
        %v3290 = vadd.f32 %v3288, %v3289
        %v3291 = vrot.slane %v3290, 4
        %v3292 = vadd.f32 %v3290, %v3291
        %v3293 = vrot.slane %v3292, 2
        %v3294 = vadd.f32 %v3292, %v3293
        %v3295 = vrot.slane %v3294, 1
        %v3296 = vadd.f32 %v3294, %v3295
        %s3297 = scalar_lea.vmem [#allocation8], 256
        %v3298 = vld [vmem:[%s3297] sm:$0xff]
        %v3299 = vld [vmem:[%s3297 + $0x8] sm:$0xff]
        %v3300 = vld [vmem:[%s3297 + $0x10] sm:$0xff]
        %v3301 = vld [vmem:[%s3297 + $0x18] sm:$0xff]
        %v3302 = vld [vmem:[%s3297 + $0x20] sm:$0xff]
        %v3303 = vld [vmem:[%s3297 + $0x28] sm:$0xff]
        %v3304 = vld [vmem:[%s3297 + $0x30] sm:$0xff]
        %v3305 = vld [vmem:[%s3297 + $0x38] sm:$0xff]
        %v3306 = vld [vmem:[%s3297 + $0x200] sm:$0xff]
        %v3307 = vld [vmem:[%s3297 + $0x208] sm:$0xff]
        %v3308 = vld [vmem:[%s3297 + $0x210] sm:$0xff]
        %v3309 = vld [vmem:[%s3297 + $0x218] sm:$0xff]
        %v3310 = vld [vmem:[%s3297 + $0x220] sm:$0xff]
        %v3311 = vld [vmem:[%s3297 + $0x228] sm:$0xff]
        %v3312 = vld [vmem:[%s3297 + $0x230] sm:$0xff]
        %v3313 = vld [vmem:[%s3297 + $0x238] sm:$0xff]
        %s3314 = scalar_lea.vmem [#allocation9], 256
        %v3315 = vld [vmem:[%s3314] sm:$0xff]
        %v3316 = vld [vmem:[%s3314 + $0x8] sm:$0xff]
        %v3317 = vld [vmem:[%s3314 + $0x10] sm:$0xff]
        %v3318 = vld [vmem:[%s3314 + $0x18] sm:$0xff]
        %v3319 = vld [vmem:[%s3314 + $0x20] sm:$0xff]
        %v3320 = vld [vmem:[%s3314 + $0x28] sm:$0xff]
        %v3321 = vld [vmem:[%s3314 + $0x30] sm:$0xff]
        %v3322 = vld [vmem:[%s3314 + $0x38] sm:$0xff]
        %v3323 = vld [vmem:[%s3314 + $0x200] sm:$0xff]
        %v3324 = vld [vmem:[%s3314 + $0x208] sm:$0xff]
        %v3325 = vld [vmem:[%s3314 + $0x210] sm:$0xff]
        %v3326 = vld [vmem:[%s3314 + $0x218] sm:$0xff]
        %v3327 = vld [vmem:[%s3314 + $0x220] sm:$0xff]
        %v3328 = vld [vmem:[%s3314 + $0x228] sm:$0xff]
        %v3329 = vld [vmem:[%s3314 + $0x230] sm:$0xff]
        %v3330 = vld [vmem:[%s3314 + $0x238] sm:$0xff]
        %v3331 = vmul.f32 %v3298, %v3125
        %v3332 = vmul.f32 %v3299, %v3126
        %v3333 = vmul.f32 %v3300, %v3127
        %v3334 = vmul.f32 %v3301, %v3128
        %v3335 = vmul.f32 %v3302, %v3129
        %v3336 = vmul.f32 %v3303, %v3130
        %v3337 = vmul.f32 %v3304, %v3131
        %v3338 = vmul.f32 %v3305, %v3132
        %v3339 = vmul.f32 %v3306, %v3133
        %v3340 = vmul.f32 %v3307, %v3134
        %v3341 = vmul.f32 %v3308, %v3135
        %v3342 = vmul.f32 %v3309, %v3136
        %v3343 = vmul.f32 %v3310, %v3137
        %v3344 = vmul.f32 %v3311, %v3138
        %v3345 = vmul.f32 %v3312, %v3139
        %v3346 = vmul.f32 %v3313, %v3140
        %v3347 = vadd.f32 %v3331, %v3315
        %v3348 = vadd.f32 %v3332, %v3316
        %v3349 = vadd.f32 %v3333, %v3317
        %v3350 = vadd.f32 %v3334, %v3318
        %v3351 = vadd.f32 %v3335, %v3319
        %v3352 = vadd.f32 %v3336, %v3320
        %v3353 = vadd.f32 %v3337, %v3321
        %v3354 = vadd.f32 %v3338, %v3322
        %v3355 = vadd.f32 %v3339, %v3323
        %v3356 = vadd.f32 %v3340, %v3324
        %v3357 = vadd.f32 %v3341, %v3325
        %v3358 = vadd.f32 %v3342, %v3326
        %v3359 = vadd.f32 %v3343, %v3327
        %v3360 = vadd.f32 %v3344, %v3328
        %v3361 = vadd.f32 %v3345, %v3329
        %v3362 = vadd.f32 %v3346, %v3330
        %v3363 = vperm.slane %v2409, 4
        %v3364 = vlaneseq
        %v3365 = vshrl.u32 %v3364, 7
        %3367 = vset.pattern.permute.xlu0 %v3365
        %3368 = vperm.xlu0 %3367, %v3363
        %v3369 = vpop.permute.xlu0 %3368
        %v3370 = vlaneseq
        %v3371 = vshrl.u32 %v3370, 7
        %v3372 = vadd.s32 %v3371, 8
        %3373 = vset.pattern.permute.xlu0 %v3372
        %3374 = vperm.xlu0 %3373, %v3363
        %v3375 = vpop.permute.xlu0 %3374
        %v3376 = vlaneseq
        %v3377 = vshrl.u32 %v3376, 7
        %v3378 = vadd.s32 %v3377, 16
        %3379 = vset.pattern.permute.xlu0 %v3378
        %3380 = vperm.xlu0 %3379, %v3363
        %v3381 = vpop.permute.xlu0 %3380
        %v3382 = vlaneseq
        %v3383 = vshrl.u32 %v3382, 7
        %v3384 = vadd.s32 %v3383, 24
        %3385 = vset.pattern.permute.xlu0 %v3384
        %3386 = vperm.xlu0 %3385, %v3363
        %v3387 = vpop.permute.xlu0 %3386
        %v3388 = vlaneseq
        %v3389 = vshrl.u32 %v3388, 7
        %v3390 = vadd.s32 %v3389, 32
        %3391 = vset.pattern.permute.xlu0 %v3390
        %3392 = vperm.xlu0 %3391, %v3363
        %v3393 = vpop.permute.xlu0 %3392
        %v3394 = vlaneseq
        %v3395 = vshrl.u32 %v3394, 7
        %v3396 = vadd.s32 %v3395, 40
        %3397 = vset.pattern.permute.xlu0 %v3396
        %3398 = vperm.xlu0 %3397, %v3363
        %v3399 = vpop.permute.xlu0 %3398
        %v3400 = vlaneseq
        %v3401 = vshrl.u32 %v3400, 7
        %v3402 = vadd.s32 %v3401, 48
        %3403 = vset.pattern.permute.xlu0 %v3402
        %3404 = vperm.xlu0 %3403, %v3363
        %v3405 = vpop.permute.xlu0 %3404
        %v3406 = vlaneseq
        %v3407 = vshrl.u32 %v3406, 7
        %v3408 = vadd.s32 %v3407, 56
        %3409 = vset.pattern.permute.xlu0 %v3408
        %3410 = vperm.xlu0 %3409, %v3363
        %v3411 = vpop.permute.xlu0 %3410
        %v3412 = vperm.slane %v2410, 4
        %v3413 = vlaneseq
        %v3414 = vshrl.u32 %v3413, 7
        %3416 = vset.pattern.permute.xlu0 %v3414
        %3417 = vperm.xlu0 %3416, %v3412
        %v3418 = vpop.permute.xlu0 %3417
        %v3419 = vlaneseq
        %v3420 = vshrl.u32 %v3419, 7
        %v3421 = vadd.s32 %v3420, 8
        %3422 = vset.pattern.permute.xlu0 %v3421
        %3423 = vperm.xlu0 %3422, %v3412
        %v3424 = vpop.permute.xlu0 %3423
        %v3425 = vlaneseq
        %v3426 = vshrl.u32 %v3425, 7
        %v3427 = vadd.s32 %v3426, 16
        %3428 = vset.pattern.permute.xlu0 %v3427
        %3429 = vperm.xlu0 %3428, %v3412
        %v3430 = vpop.permute.xlu0 %3429
        %v3431 = vlaneseq
        %v3432 = vshrl.u32 %v3431, 7
        %v3433 = vadd.s32 %v3432, 24
        %3434 = vset.pattern.permute.xlu0 %v3433
        %3435 = vperm.xlu0 %3434, %v3412
        %v3436 = vpop.permute.xlu0 %3435
        %v3437 = vlaneseq
        %v3438 = vshrl.u32 %v3437, 7
        %v3439 = vadd.s32 %v3438, 32
        %3440 = vset.pattern.permute.xlu0 %v3439
        %3441 = vperm.xlu0 %3440, %v3412
        %v3442 = vpop.permute.xlu0 %3441
        %v3443 = vlaneseq
        %v3444 = vshrl.u32 %v3443, 7
        %v3445 = vadd.s32 %v3444, 40
        %3446 = vset.pattern.permute.xlu0 %v3445
        %3447 = vperm.xlu0 %3446, %v3412
        %v3448 = vpop.permute.xlu0 %3447
        %v3449 = vlaneseq
        %v3450 = vshrl.u32 %v3449, 7
        %v3451 = vadd.s32 %v3450, 48
        %3452 = vset.pattern.permute.xlu0 %v3451
        %3453 = vperm.xlu0 %3452, %v3412
        %v3454 = vpop.permute.xlu0 %3453
        %v3455 = vlaneseq
        %v3456 = vshrl.u32 %v3455, 7
        %v3457 = vadd.s32 %v3456, 56
        %3458 = vset.pattern.permute.xlu0 %v3457
        %3459 = vperm.xlu0 %3458, %v3412
        %v3460 = vpop.permute.xlu0 %3459
        %v3461 = vmul.f32 %v3347, %v3369
        %v3462 = vmul.f32 %v3348, %v3375
        %v3463 = vmul.f32 %v3349, %v3381
        %v3464 = vmul.f32 %v3350, %v3387
        %v3465 = vmul.f32 %v3351, %v3393
        %v3466 = vmul.f32 %v3352, %v3399
        %v3467 = vmul.f32 %v3353, %v3405
        %v3468 = vmul.f32 %v3354, %v3411
        %v3469 = vmul.f32 %v3355, %v3418
        %v3470 = vmul.f32 %v3356, %v3424
        %v3471 = vmul.f32 %v3357, %v3430
        %v3472 = vmul.f32 %v3358, %v3436
        %v3473 = vmul.f32 %v3359, %v3442
        %v3474 = vmul.f32 %v3360, %v3448
        %v3475 = vmul.f32 %v3361, %v3454
        %v3476 = vmul.f32 %v3362, %v3460
        %v3477 = vsel %vm549, %v3461, 0.0
        %v3478 = vsel %vm549, %v3462, 0.0
        %v3479 = vadd.f32 %v3477, %v3478
        %v3480 = vsel %vm549, %v3463, 0.0
        %v3481 = vadd.f32 %v3479, %v3480
        %v3482 = vsel %vm549, %v3464, 0.0
        %v3483 = vadd.f32 %v3481, %v3482
        %v3484 = vsel %vm549, %v3465, 0.0
        %v3485 = vadd.f32 %v3483, %v3484
        %v3486 = vsel %vm549, %v3466, 0.0
        %v3487 = vadd.f32 %v3485, %v3486
        %v3488 = vsel %vm549, %v3467, 0.0
        %v3489 = vadd.f32 %v3487, %v3488
        %v3490 = vsel %vm549, %v3468, 0.0
        %v3491 = vadd.f32 %v3489, %v3490
        %v3492 = vrot.slane %v3491, 4
        %v3493 = vadd.f32 %v3491, %v3492
        %v3494 = vrot.slane %v3493, 2
        %v3495 = vadd.f32 %v3493, %v3494
        %v3496 = vrot.slane %v3495, 1
        %v3497 = vadd.f32 %v3495, %v3496
        %v3498 = vsel %vm549, %v3469, 0.0
        %v3499 = vsel %vm549, %v3470, 0.0
        %v3500 = vadd.f32 %v3498, %v3499
        %v3501 = vsel %vm549, %v3471, 0.0
        %v3502 = vadd.f32 %v3500, %v3501
        %v3503 = vsel %vm549, %v3472, 0.0
        %v3504 = vadd.f32 %v3502, %v3503
        %v3505 = vsel %vm549, %v3473, 0.0
        %v3506 = vadd.f32 %v3504, %v3505
        %v3507 = vsel %vm549, %v3474, 0.0
        %v3508 = vadd.f32 %v3506, %v3507
        %v3509 = vsel %vm549, %v3475, 0.0
        %v3510 = vadd.f32 %v3508, %v3509
        %v3511 = vsel %vm549, %v3476, 0.0
        %v3512 = vadd.f32 %v3510, %v3511
        %v3513 = vrot.slane %v3512, 4
        %v3514 = vadd.f32 %v3512, %v3513
        %v3515 = vrot.slane %v3514, 2
        %v3516 = vadd.f32 %v3514, %v3515
        %v3517 = vrot.slane %v3516, 1
        %v3518 = vadd.f32 %v3516, %v3517
        %s3519 = scalar_lea.vmem [#allocation8], 320
        %v3520 = vld [vmem:[%s3519] sm:$0xff]
        %v3521 = vld [vmem:[%s3519 + $0x8] sm:$0xff]
        %v3522 = vld [vmem:[%s3519 + $0x10] sm:$0xff]
        %v3523 = vld [vmem:[%s3519 + $0x18] sm:$0xff]
        %v3524 = vld [vmem:[%s3519 + $0x20] sm:$0xff]
        %v3525 = vld [vmem:[%s3519 + $0x28] sm:$0xff]
        %v3526 = vld [vmem:[%s3519 + $0x30] sm:$0xff]
        %v3527 = vld [vmem:[%s3519 + $0x38] sm:$0xff]
        %v3528 = vld [vmem:[%s3519 + $0x200] sm:$0xff]
        %v3529 = vld [vmem:[%s3519 + $0x208] sm:$0xff]
        %v3530 = vld [vmem:[%s3519 + $0x210] sm:$0xff]
        %v3531 = vld [vmem:[%s3519 + $0x218] sm:$0xff]
        %v3532 = vld [vmem:[%s3519 + $0x220] sm:$0xff]
        %v3533 = vld [vmem:[%s3519 + $0x228] sm:$0xff]
        %v3534 = vld [vmem:[%s3519 + $0x230] sm:$0xff]
        %v3535 = vld [vmem:[%s3519 + $0x238] sm:$0xff]
        %s3536 = scalar_lea.vmem [#allocation9], 320
        %v3537 = vld [vmem:[%s3536] sm:$0xff]
        %v3538 = vld [vmem:[%s3536 + $0x8] sm:$0xff]
        %v3539 = vld [vmem:[%s3536 + $0x10] sm:$0xff]
        %v3540 = vld [vmem:[%s3536 + $0x18] sm:$0xff]
        %v3541 = vld [vmem:[%s3536 + $0x20] sm:$0xff]
        %v3542 = vld [vmem:[%s3536 + $0x28] sm:$0xff]
        %v3543 = vld [vmem:[%s3536 + $0x30] sm:$0xff]
        %v3544 = vld [vmem:[%s3536 + $0x38] sm:$0xff]
        %v3545 = vld [vmem:[%s3536 + $0x200] sm:$0xff]
        %v3546 = vld [vmem:[%s3536 + $0x208] sm:$0xff]
        %v3547 = vld [vmem:[%s3536 + $0x210] sm:$0xff]
        %v3548 = vld [vmem:[%s3536 + $0x218] sm:$0xff]
        %v3549 = vld [vmem:[%s3536 + $0x220] sm:$0xff]
        %v3550 = vld [vmem:[%s3536 + $0x228] sm:$0xff]
        %v3551 = vld [vmem:[%s3536 + $0x230] sm:$0xff]
        %v3552 = vld [vmem:[%s3536 + $0x238] sm:$0xff]
        %v3553 = vmul.f32 %v3520, %v3347
        %v3554 = vmul.f32 %v3521, %v3348
        %v3555 = vmul.f32 %v3522, %v3349
        %v3556 = vmul.f32 %v3523, %v3350
        %v3557 = vmul.f32 %v3524, %v3351
        %v3558 = vmul.f32 %v3525, %v3352
        %v3559 = vmul.f32 %v3526, %v3353
        %v3560 = vmul.f32 %v3527, %v3354
        %v3561 = vmul.f32 %v3528, %v3355
        %v3562 = vmul.f32 %v3529, %v3356
        %v3563 = vmul.f32 %v3530, %v3357
        %v3564 = vmul.f32 %v3531, %v3358
        %v3565 = vmul.f32 %v3532, %v3359
        %v3566 = vmul.f32 %v3533, %v3360
        %v3567 = vmul.f32 %v3534, %v3361
        %v3568 = vmul.f32 %v3535, %v3362
        %v3569 = vadd.f32 %v3553, %v3537
        %v3570 = vadd.f32 %v3554, %v3538
        %v3571 = vadd.f32 %v3555, %v3539
        %v3572 = vadd.f32 %v3556, %v3540
        %v3573 = vadd.f32 %v3557, %v3541
        %v3574 = vadd.f32 %v3558, %v3542
        %v3575 = vadd.f32 %v3559, %v3543
        %v3576 = vadd.f32 %v3560, %v3544
        %v3577 = vadd.f32 %v3561, %v3545
        %v3578 = vadd.f32 %v3562, %v3546
        %v3579 = vadd.f32 %v3563, %v3547
        %v3580 = vadd.f32 %v3564, %v3548
        %v3581 = vadd.f32 %v3565, %v3549
        %v3582 = vadd.f32 %v3566, %v3550
        %v3583 = vadd.f32 %v3567, %v3551
        %v3584 = vadd.f32 %v3568, %v3552
        %v3585 = vperm.slane %v2409, 5
        %v3586 = vlaneseq
        %v3587 = vshrl.u32 %v3586, 7
        %3589 = vset.pattern.permute.xlu0 %v3587
        %3590 = vperm.xlu0 %3589, %v3585
        %v3591 = vpop.permute.xlu0 %3590
        %v3592 = vlaneseq
        %v3593 = vshrl.u32 %v3592, 7
        %v3594 = vadd.s32 %v3593, 8
        %3595 = vset.pattern.permute.xlu0 %v3594
        %3596 = vperm.xlu0 %3595, %v3585
        %v3597 = vpop.permute.xlu0 %3596
        %v3598 = vlaneseq
        %v3599 = vshrl.u32 %v3598, 7
        %v3600 = vadd.s32 %v3599, 16
        %3601 = vset.pattern.permute.xlu0 %v3600
        %3602 = vperm.xlu0 %3601, %v3585
        %v3603 = vpop.permute.xlu0 %3602
        %v3604 = vlaneseq
        %v3605 = vshrl.u32 %v3604, 7
        %v3606 = vadd.s32 %v3605, 24
        %3607 = vset.pattern.permute.xlu0 %v3606
        %3608 = vperm.xlu0 %3607, %v3585
        %v3609 = vpop.permute.xlu0 %3608
        %v3610 = vlaneseq
        %v3611 = vshrl.u32 %v3610, 7
        %v3612 = vadd.s32 %v3611, 32
        %3613 = vset.pattern.permute.xlu0 %v3612
        %3614 = vperm.xlu0 %3613, %v3585
        %v3615 = vpop.permute.xlu0 %3614
        %v3616 = vlaneseq
        %v3617 = vshrl.u32 %v3616, 7
        %v3618 = vadd.s32 %v3617, 40
        %3619 = vset.pattern.permute.xlu0 %v3618
        %3620 = vperm.xlu0 %3619, %v3585
        %v3621 = vpop.permute.xlu0 %3620
        %v3622 = vlaneseq
        %v3623 = vshrl.u32 %v3622, 7
        %v3624 = vadd.s32 %v3623, 48
        %3625 = vset.pattern.permute.xlu0 %v3624
        %3626 = vperm.xlu0 %3625, %v3585
        %v3627 = vpop.permute.xlu0 %3626
        %v3628 = vlaneseq
        %v3629 = vshrl.u32 %v3628, 7
        %v3630 = vadd.s32 %v3629, 56
        %3631 = vset.pattern.permute.xlu0 %v3630
        %3632 = vperm.xlu0 %3631, %v3585
        %v3633 = vpop.permute.xlu0 %3632
        %v3634 = vperm.slane %v2410, 5
        %v3635 = vlaneseq
        %v3636 = vshrl.u32 %v3635, 7
        %3638 = vset.pattern.permute.xlu0 %v3636
        %3639 = vperm.xlu0 %3638, %v3634
        %v3640 = vpop.permute.xlu0 %3639
        %v3641 = vlaneseq
        %v3642 = vshrl.u32 %v3641, 7
        %v3643 = vadd.s32 %v3642, 8
        %3644 = vset.pattern.permute.xlu0 %v3643
        %3645 = vperm.xlu0 %3644, %v3634
        %v3646 = vpop.permute.xlu0 %3645
        %v3647 = vlaneseq
        %v3648 = vshrl.u32 %v3647, 7
        %v3649 = vadd.s32 %v3648, 16
        %3650 = vset.pattern.permute.xlu0 %v3649
        %3651 = vperm.xlu0 %3650, %v3634
        %v3652 = vpop.permute.xlu0 %3651
        %v3653 = vlaneseq
        %v3654 = vshrl.u32 %v3653, 7
        %v3655 = vadd.s32 %v3654, 24
        %3656 = vset.pattern.permute.xlu0 %v3655
        %3657 = vperm.xlu0 %3656, %v3634
        %v3658 = vpop.permute.xlu0 %3657
        %v3659 = vlaneseq
        %v3660 = vshrl.u32 %v3659, 7
        %v3661 = vadd.s32 %v3660, 32
        %3662 = vset.pattern.permute.xlu0 %v3661
        %3663 = vperm.xlu0 %3662, %v3634
        %v3664 = vpop.permute.xlu0 %3663
        %v3665 = vlaneseq
        %v3666 = vshrl.u32 %v3665, 7
        %v3667 = vadd.s32 %v3666, 40
        %3668 = vset.pattern.permute.xlu0 %v3667
        %3669 = vperm.xlu0 %3668, %v3634
        %v3670 = vpop.permute.xlu0 %3669
        %v3671 = vlaneseq
        %v3672 = vshrl.u32 %v3671, 7
        %v3673 = vadd.s32 %v3672, 48
        %3674 = vset.pattern.permute.xlu0 %v3673
        %3675 = vperm.xlu0 %3674, %v3634
        %v3676 = vpop.permute.xlu0 %3675
        %v3677 = vlaneseq
        %v3678 = vshrl.u32 %v3677, 7
        %v3679 = vadd.s32 %v3678, 56
        %3680 = vset.pattern.permute.xlu0 %v3679
        %3681 = vperm.xlu0 %3680, %v3634
        %v3682 = vpop.permute.xlu0 %3681
        %v3683 = vmul.f32 %v3569, %v3591
        %v3684 = vmul.f32 %v3570, %v3597
        %v3685 = vmul.f32 %v3571, %v3603
        %v3686 = vmul.f32 %v3572, %v3609
        %v3687 = vmul.f32 %v3573, %v3615
        %v3688 = vmul.f32 %v3574, %v3621
        %v3689 = vmul.f32 %v3575, %v3627
        %v3690 = vmul.f32 %v3576, %v3633
        %v3691 = vmul.f32 %v3577, %v3640
        %v3692 = vmul.f32 %v3578, %v3646
        %v3693 = vmul.f32 %v3579, %v3652
        %v3694 = vmul.f32 %v3580, %v3658
        %v3695 = vmul.f32 %v3581, %v3664
        %v3696 = vmul.f32 %v3582, %v3670
        %v3697 = vmul.f32 %v3583, %v3676
        %v3698 = vmul.f32 %v3584, %v3682
        %v3699 = vsel %vm549, %v3683, 0.0
        %v3700 = vsel %vm549, %v3684, 0.0
        %v3701 = vadd.f32 %v3699, %v3700
        %v3702 = vsel %vm549, %v3685, 0.0
        %v3703 = vadd.f32 %v3701, %v3702
        %v3704 = vsel %vm549, %v3686, 0.0
        %v3705 = vadd.f32 %v3703, %v3704
        %v3706 = vsel %vm549, %v3687, 0.0
        %v3707 = vadd.f32 %v3705, %v3706
        %v3708 = vsel %vm549, %v3688, 0.0
        %v3709 = vadd.f32 %v3707, %v3708
        %v3710 = vsel %vm549, %v3689, 0.0
        %v3711 = vadd.f32 %v3709, %v3710
        %v3712 = vsel %vm549, %v3690, 0.0
        %v3713 = vadd.f32 %v3711, %v3712
        %v3714 = vrot.slane %v3713, 4
        %v3715 = vadd.f32 %v3713, %v3714
        %v3716 = vrot.slane %v3715, 2
        %v3717 = vadd.f32 %v3715, %v3716
        %v3718 = vrot.slane %v3717, 1
        %v3719 = vadd.f32 %v3717, %v3718
        %v3720 = vsel %vm549, %v3691, 0.0
        %v3721 = vsel %vm549, %v3692, 0.0
        %v3722 = vadd.f32 %v3720, %v3721
        %v3723 = vsel %vm549, %v3693, 0.0
        %v3724 = vadd.f32 %v3722, %v3723
        %v3725 = vsel %vm549, %v3694, 0.0
        %v3726 = vadd.f32 %v3724, %v3725
        %v3727 = vsel %vm549, %v3695, 0.0
        %v3728 = vadd.f32 %v3726, %v3727
        %v3729 = vsel %vm549, %v3696, 0.0
        %v3730 = vadd.f32 %v3728, %v3729
        %v3731 = vsel %vm549, %v3697, 0.0
        %v3732 = vadd.f32 %v3730, %v3731
        %v3733 = vsel %vm549, %v3698, 0.0
        %v3734 = vadd.f32 %v3732, %v3733
        %v3735 = vrot.slane %v3734, 4
        %v3736 = vadd.f32 %v3734, %v3735
        %v3737 = vrot.slane %v3736, 2
        %v3738 = vadd.f32 %v3736, %v3737
        %v3739 = vrot.slane %v3738, 1
        %v3740 = vadd.f32 %v3738, %v3739
        %s3741 = scalar_lea.vmem [#allocation8], 384
        %v3742 = vld [vmem:[%s3741] sm:$0xff]
        %v3743 = vld [vmem:[%s3741 + $0x8] sm:$0xff]
        %v3744 = vld [vmem:[%s3741 + $0x10] sm:$0xff]
        %v3745 = vld [vmem:[%s3741 + $0x18] sm:$0xff]
        %v3746 = vld [vmem:[%s3741 + $0x20] sm:$0xff]
        %v3747 = vld [vmem:[%s3741 + $0x28] sm:$0xff]
        %v3748 = vld [vmem:[%s3741 + $0x30] sm:$0xff]
        %v3749 = vld [vmem:[%s3741 + $0x38] sm:$0xff]
        %v3750 = vld [vmem:[%s3741 + $0x200] sm:$0xff]
        %v3751 = vld [vmem:[%s3741 + $0x208] sm:$0xff]
        %v3752 = vld [vmem:[%s3741 + $0x210] sm:$0xff]
        %v3753 = vld [vmem:[%s3741 + $0x218] sm:$0xff]
        %v3754 = vld [vmem:[%s3741 + $0x220] sm:$0xff]
        %v3755 = vld [vmem:[%s3741 + $0x228] sm:$0xff]
        %v3756 = vld [vmem:[%s3741 + $0x230] sm:$0xff]
        %v3757 = vld [vmem:[%s3741 + $0x238] sm:$0xff]
        %s3758 = scalar_lea.vmem [#allocation9], 384
        %v3759 = vld [vmem:[%s3758] sm:$0xff]
        %v3760 = vld [vmem:[%s3758 + $0x8] sm:$0xff]
        %v3761 = vld [vmem:[%s3758 + $0x10] sm:$0xff]
        %v3762 = vld [vmem:[%s3758 + $0x18] sm:$0xff]
        %v3763 = vld [vmem:[%s3758 + $0x20] sm:$0xff]
        %v3764 = vld [vmem:[%s3758 + $0x28] sm:$0xff]
        %v3765 = vld [vmem:[%s3758 + $0x30] sm:$0xff]
        %v3766 = vld [vmem:[%s3758 + $0x38] sm:$0xff]
        %v3767 = vld [vmem:[%s3758 + $0x200] sm:$0xff]
        %v3768 = vld [vmem:[%s3758 + $0x208] sm:$0xff]
        %v3769 = vld [vmem:[%s3758 + $0x210] sm:$0xff]
        %v3770 = vld [vmem:[%s3758 + $0x218] sm:$0xff]
        %v3771 = vld [vmem:[%s3758 + $0x220] sm:$0xff]
        %v3772 = vld [vmem:[%s3758 + $0x228] sm:$0xff]
        %v3773 = vld [vmem:[%s3758 + $0x230] sm:$0xff]
        %v3774 = vld [vmem:[%s3758 + $0x238] sm:$0xff]
        %v3775 = vmul.f32 %v3742, %v3569
        %v3776 = vmul.f32 %v3743, %v3570
        %v3777 = vmul.f32 %v3744, %v3571
        %v3778 = vmul.f32 %v3745, %v3572
        %v3779 = vmul.f32 %v3746, %v3573
        %v3780 = vmul.f32 %v3747, %v3574
        %v3781 = vmul.f32 %v3748, %v3575
        %v3782 = vmul.f32 %v3749, %v3576
        %v3783 = vmul.f32 %v3750, %v3577
        %v3784 = vmul.f32 %v3751, %v3578
        %v3785 = vmul.f32 %v3752, %v3579
        %v3786 = vmul.f32 %v3753, %v3580
        %v3787 = vmul.f32 %v3754, %v3581
        %v3788 = vmul.f32 %v3755, %v3582
        %v3789 = vmul.f32 %v3756, %v3583
        %v3790 = vmul.f32 %v3757, %v3584
        %v3791 = vadd.f32 %v3775, %v3759
        %v3792 = vadd.f32 %v3776, %v3760
        %v3793 = vadd.f32 %v3777, %v3761
        %v3794 = vadd.f32 %v3778, %v3762
        %v3795 = vadd.f32 %v3779, %v3763
        %v3796 = vadd.f32 %v3780, %v3764
        %v3797 = vadd.f32 %v3781, %v3765
        %v3798 = vadd.f32 %v3782, %v3766
        %v3799 = vadd.f32 %v3783, %v3767
        %v3800 = vadd.f32 %v3784, %v3768
        %v3801 = vadd.f32 %v3785, %v3769
        %v3802 = vadd.f32 %v3786, %v3770
        %v3803 = vadd.f32 %v3787, %v3771
        %v3804 = vadd.f32 %v3788, %v3772
        %v3805 = vadd.f32 %v3789, %v3773
        %v3806 = vadd.f32 %v3790, %v3774
        %v3807 = vperm.slane %v2409, 6
        %v3808 = vlaneseq
        %v3809 = vshrl.u32 %v3808, 7
        %3811 = vset.pattern.permute.xlu0 %v3809
        %3812 = vperm.xlu0 %3811, %v3807
        %v3813 = vpop.permute.xlu0 %3812
        %v3814 = vlaneseq
        %v3815 = vshrl.u32 %v3814, 7
        %v3816 = vadd.s32 %v3815, 8
        %3817 = vset.pattern.permute.xlu0 %v3816
        %3818 = vperm.xlu0 %3817, %v3807
        %v3819 = vpop.permute.xlu0 %3818
        %v3820 = vlaneseq
        %v3821 = vshrl.u32 %v3820, 7
        %v3822 = vadd.s32 %v3821, 16
        %3823 = vset.pattern.permute.xlu0 %v3822
        %3824 = vperm.xlu0 %3823, %v3807
        %v3825 = vpop.permute.xlu0 %3824
        %v3826 = vlaneseq
        %v3827 = vshrl.u32 %v3826, 7
        %v3828 = vadd.s32 %v3827, 24
        %3829 = vset.pattern.permute.xlu0 %v3828
        %3830 = vperm.xlu0 %3829, %v3807
        %v3831 = vpop.permute.xlu0 %3830
        %v3832 = vlaneseq
        %v3833 = vshrl.u32 %v3832, 7
        %v3834 = vadd.s32 %v3833, 32
        %3835 = vset.pattern.permute.xlu0 %v3834
        %3836 = vperm.xlu0 %3835, %v3807
        %v3837 = vpop.permute.xlu0 %3836
        %v3838 = vlaneseq
        %v3839 = vshrl.u32 %v3838, 7
        %v3840 = vadd.s32 %v3839, 40
        %3841 = vset.pattern.permute.xlu0 %v3840
        %3842 = vperm.xlu0 %3841, %v3807
        %v3843 = vpop.permute.xlu0 %3842
        %v3844 = vlaneseq
        %v3845 = vshrl.u32 %v3844, 7
        %v3846 = vadd.s32 %v3845, 48
        %3847 = vset.pattern.permute.xlu0 %v3846
        %3848 = vperm.xlu0 %3847, %v3807
        %v3849 = vpop.permute.xlu0 %3848
        %v3850 = vlaneseq
        %v3851 = vshrl.u32 %v3850, 7
        %v3852 = vadd.s32 %v3851, 56
        %3853 = vset.pattern.permute.xlu0 %v3852
        %3854 = vperm.xlu0 %3853, %v3807
        %v3855 = vpop.permute.xlu0 %3854
        %v3856 = vperm.slane %v2410, 6
        %v3857 = vlaneseq
        %v3858 = vshrl.u32 %v3857, 7
        %3860 = vset.pattern.permute.xlu0 %v3858
        %3861 = vperm.xlu0 %3860, %v3856
        %v3862 = vpop.permute.xlu0 %3861
        %v3863 = vlaneseq
        %v3864 = vshrl.u32 %v3863, 7
        %v3865 = vadd.s32 %v3864, 8
        %3866 = vset.pattern.permute.xlu0 %v3865
        %3867 = vperm.xlu0 %3866, %v3856
        %v3868 = vpop.permute.xlu0 %3867
        %v3869 = vlaneseq
        %v3870 = vshrl.u32 %v3869, 7
        %v3871 = vadd.s32 %v3870, 16
        %3872 = vset.pattern.permute.xlu0 %v3871
        %3873 = vperm.xlu0 %3872, %v3856
        %v3874 = vpop.permute.xlu0 %3873
        %v3875 = vlaneseq
        %v3876 = vshrl.u32 %v3875, 7
        %v3877 = vadd.s32 %v3876, 24
        %3878 = vset.pattern.permute.xlu0 %v3877
        %3879 = vperm.xlu0 %3878, %v3856
        %v3880 = vpop.permute.xlu0 %3879
        %v3881 = vlaneseq
        %v3882 = vshrl.u32 %v3881, 7
        %v3883 = vadd.s32 %v3882, 32
        %3884 = vset.pattern.permute.xlu0 %v3883
        %3885 = vperm.xlu0 %3884, %v3856
        %v3886 = vpop.permute.xlu0 %3885
        %v3887 = vlaneseq
        %v3888 = vshrl.u32 %v3887, 7
        %v3889 = vadd.s32 %v3888, 40
        %3890 = vset.pattern.permute.xlu0 %v3889
        %3891 = vperm.xlu0 %3890, %v3856
        %v3892 = vpop.permute.xlu0 %3891
        %v3893 = vlaneseq
        %v3894 = vshrl.u32 %v3893, 7
        %v3895 = vadd.s32 %v3894, 48
        %3896 = vset.pattern.permute.xlu0 %v3895
        %3897 = vperm.xlu0 %3896, %v3856
        %v3898 = vpop.permute.xlu0 %3897
        %v3899 = vlaneseq
        %v3900 = vshrl.u32 %v3899, 7
        %v3901 = vadd.s32 %v3900, 56
        %3902 = vset.pattern.permute.xlu0 %v3901
        %3903 = vperm.xlu0 %3902, %v3856
        %v3904 = vpop.permute.xlu0 %3903
        %v3905 = vmul.f32 %v3791, %v3813
        %v3906 = vmul.f32 %v3792, %v3819
        %v3907 = vmul.f32 %v3793, %v3825
        %v3908 = vmul.f32 %v3794, %v3831
        %v3909 = vmul.f32 %v3795, %v3837
        %v3910 = vmul.f32 %v3796, %v3843
        %v3911 = vmul.f32 %v3797, %v3849
        %v3912 = vmul.f32 %v3798, %v3855
        %v3913 = vmul.f32 %v3799, %v3862
        %v3914 = vmul.f32 %v3800, %v3868
        %v3915 = vmul.f32 %v3801, %v3874
        %v3916 = vmul.f32 %v3802, %v3880
        %v3917 = vmul.f32 %v3803, %v3886
        %v3918 = vmul.f32 %v3804, %v3892
        %v3919 = vmul.f32 %v3805, %v3898
        %v3920 = vmul.f32 %v3806, %v3904
        %v3921 = vsel %vm549, %v3905, 0.0
        %v3922 = vsel %vm549, %v3906, 0.0
        %v3923 = vadd.f32 %v3921, %v3922
        %v3924 = vsel %vm549, %v3907, 0.0
        %v3925 = vadd.f32 %v3923, %v3924
        %v3926 = vsel %vm549, %v3908, 0.0
        %v3927 = vadd.f32 %v3925, %v3926
        %v3928 = vsel %vm549, %v3909, 0.0
        %v3929 = vadd.f32 %v3927, %v3928
        %v3930 = vsel %vm549, %v3910, 0.0
        %v3931 = vadd.f32 %v3929, %v3930
        %v3932 = vsel %vm549, %v3911, 0.0
        %v3933 = vadd.f32 %v3931, %v3932
        %v3934 = vsel %vm549, %v3912, 0.0
        %v3935 = vadd.f32 %v3933, %v3934
        %v3936 = vrot.slane %v3935, 4
        %v3937 = vadd.f32 %v3935, %v3936
        %v3938 = vrot.slane %v3937, 2
        %v3939 = vadd.f32 %v3937, %v3938
        %v3940 = vrot.slane %v3939, 1
        %v3941 = vadd.f32 %v3939, %v3940
        %v3942 = vsel %vm549, %v3913, 0.0
        %v3943 = vsel %vm549, %v3914, 0.0
        %v3944 = vadd.f32 %v3942, %v3943
        %v3945 = vsel %vm549, %v3915, 0.0
        %v3946 = vadd.f32 %v3944, %v3945
        %v3947 = vsel %vm549, %v3916, 0.0
        %v3948 = vadd.f32 %v3946, %v3947
        %v3949 = vsel %vm549, %v3917, 0.0
        %v3950 = vadd.f32 %v3948, %v3949
        %v3951 = vsel %vm549, %v3918, 0.0
        %v3952 = vadd.f32 %v3950, %v3951
        %v3953 = vsel %vm549, %v3919, 0.0
        %v3954 = vadd.f32 %v3952, %v3953
        %v3955 = vsel %vm549, %v3920, 0.0
        %v3956 = vadd.f32 %v3954, %v3955
        %v3957 = vrot.slane %v3956, 4
        %v3958 = vadd.f32 %v3956, %v3957
        %v3959 = vrot.slane %v3958, 2
        %v3960 = vadd.f32 %v3958, %v3959
        %v3961 = vrot.slane %v3960, 1
        %v3962 = vadd.f32 %v3960, %v3961
        %s3963 = scalar_lea.vmem [#allocation8], 448
        %v3964 = vld [vmem:[%s3963] sm:$0xff]
        %v3965 = vld [vmem:[%s3963 + $0x8] sm:$0xff]
        %v3966 = vld [vmem:[%s3963 + $0x10] sm:$0xff]
        %v3967 = vld [vmem:[%s3963 + $0x18] sm:$0xff]
        %v3968 = vld [vmem:[%s3963 + $0x20] sm:$0xff]
        %v3969 = vld [vmem:[%s3963 + $0x28] sm:$0xff]
        %v3970 = vld [vmem:[%s3963 + $0x30] sm:$0xff]
        %v3971 = vld [vmem:[%s3963 + $0x38] sm:$0xff]
        %v3972 = vld [vmem:[%s3963 + $0x200] sm:$0xff]
        %v3973 = vld [vmem:[%s3963 + $0x208] sm:$0xff]
        %v3974 = vld [vmem:[%s3963 + $0x210] sm:$0xff]
        %v3975 = vld [vmem:[%s3963 + $0x218] sm:$0xff]
        %v3976 = vld [vmem:[%s3963 + $0x220] sm:$0xff]
        %v3977 = vld [vmem:[%s3963 + $0x228] sm:$0xff]
        %v3978 = vld [vmem:[%s3963 + $0x230] sm:$0xff]
        %v3979 = vld [vmem:[%s3963 + $0x238] sm:$0xff]
        %s3980 = scalar_lea.vmem [#allocation9], 448
        %v3981 = vld [vmem:[%s3980] sm:$0xff]
        %v3982 = vld [vmem:[%s3980 + $0x8] sm:$0xff]
        %v3983 = vld [vmem:[%s3980 + $0x10] sm:$0xff]
        %v3984 = vld [vmem:[%s3980 + $0x18] sm:$0xff]
        %v3985 = vld [vmem:[%s3980 + $0x20] sm:$0xff]
        %v3986 = vld [vmem:[%s3980 + $0x28] sm:$0xff]
        %v3987 = vld [vmem:[%s3980 + $0x30] sm:$0xff]
        %v3988 = vld [vmem:[%s3980 + $0x38] sm:$0xff]
        %v3989 = vld [vmem:[%s3980 + $0x200] sm:$0xff]
        %v3990 = vld [vmem:[%s3980 + $0x208] sm:$0xff]
        %v3991 = vld [vmem:[%s3980 + $0x210] sm:$0xff]
        %v3992 = vld [vmem:[%s3980 + $0x218] sm:$0xff]
        %v3993 = vld [vmem:[%s3980 + $0x220] sm:$0xff]
        %v3994 = vld [vmem:[%s3980 + $0x228] sm:$0xff]
        %v3995 = vld [vmem:[%s3980 + $0x230] sm:$0xff]
        %v3996 = vld [vmem:[%s3980 + $0x238] sm:$0xff]
        %v3997 = vmul.f32 %v3964, %v3791
        %v3998 = vmul.f32 %v3965, %v3792
        %v3999 = vmul.f32 %v3966, %v3793
        %v4000 = vmul.f32 %v3967, %v3794
        %v4001 = vmul.f32 %v3968, %v3795
        %v4002 = vmul.f32 %v3969, %v3796
        %v4003 = vmul.f32 %v3970, %v3797
        %v4004 = vmul.f32 %v3971, %v3798
        %v4005 = vmul.f32 %v3972, %v3799
        %v4006 = vmul.f32 %v3973, %v3800
        %v4007 = vmul.f32 %v3974, %v3801
        %v4008 = vmul.f32 %v3975, %v3802
        %v4009 = vmul.f32 %v3976, %v3803
        %v4010 = vmul.f32 %v3977, %v3804
        %v4011 = vmul.f32 %v3978, %v3805
        %v4012 = vmul.f32 %v3979, %v3806
        %v4013 = vadd.f32 %v3997, %v3981
        %v4014 = vadd.f32 %v3998, %v3982
        %v4015 = vadd.f32 %v3999, %v3983
        %v4016 = vadd.f32 %v4000, %v3984
        %v4017 = vadd.f32 %v4001, %v3985
        %v4018 = vadd.f32 %v4002, %v3986
        %v4019 = vadd.f32 %v4003, %v3987
        %v4020 = vadd.f32 %v4004, %v3988
        %v4021 = vadd.f32 %v4005, %v3989
        %v4022 = vadd.f32 %v4006, %v3990
        %v4023 = vadd.f32 %v4007, %v3991
        %v4024 = vadd.f32 %v4008, %v3992
        %v4025 = vadd.f32 %v4009, %v3993
        %v4026 = vadd.f32 %v4010, %v3994
        %v4027 = vadd.f32 %v4011, %v3995
        %v4028 = vadd.f32 %v4012, %v3996
        %v4029 = vperm.slane %v2409, 7
        %v4030 = vlaneseq
        %v4031 = vshrl.u32 %v4030, 7
        %4033 = vset.pattern.permute.xlu0 %v4031
        %4034 = vperm.xlu0 %4033, %v4029
        %v4035 = vpop.permute.xlu0 %4034
        %v4036 = vlaneseq
        %v4037 = vshrl.u32 %v4036, 7
        %v4038 = vadd.s32 %v4037, 8
        %4039 = vset.pattern.permute.xlu0 %v4038
        %4040 = vperm.xlu0 %4039, %v4029
        %v4041 = vpop.permute.xlu0 %4040
        %v4042 = vlaneseq
        %v4043 = vshrl.u32 %v4042, 7
        %v4044 = vadd.s32 %v4043, 16
        %4045 = vset.pattern.permute.xlu0 %v4044
        %4046 = vperm.xlu0 %4045, %v4029
        %v4047 = vpop.permute.xlu0 %4046
        %v4048 = vlaneseq
        %v4049 = vshrl.u32 %v4048, 7
        %v4050 = vadd.s32 %v4049, 24
        %4051 = vset.pattern.permute.xlu0 %v4050
        %4052 = vperm.xlu0 %4051, %v4029
        %v4053 = vpop.permute.xlu0 %4052
        %v4054 = vlaneseq
        %v4055 = vshrl.u32 %v4054, 7
        %v4056 = vadd.s32 %v4055, 32
        %4057 = vset.pattern.permute.xlu0 %v4056
        %4058 = vperm.xlu0 %4057, %v4029
        %v4059 = vpop.permute.xlu0 %4058
        %v4060 = vlaneseq
        %v4061 = vshrl.u32 %v4060, 7
        %v4062 = vadd.s32 %v4061, 40
        %4063 = vset.pattern.permute.xlu0 %v4062
        %4064 = vperm.xlu0 %4063, %v4029
        %v4065 = vpop.permute.xlu0 %4064
        %v4066 = vlaneseq
        %v4067 = vshrl.u32 %v4066, 7
        %v4068 = vadd.s32 %v4067, 48
        %4069 = vset.pattern.permute.xlu0 %v4068
        %4070 = vperm.xlu0 %4069, %v4029
        %v4071 = vpop.permute.xlu0 %4070
        %v4072 = vlaneseq
        %v4073 = vshrl.u32 %v4072, 7
        %v4074 = vadd.s32 %v4073, 56
        %4075 = vset.pattern.permute.xlu0 %v4074
        %4076 = vperm.xlu0 %4075, %v4029
        %v4077 = vpop.permute.xlu0 %4076
        %v4078 = vperm.slane %v2410, 7
        %v4079 = vlaneseq
        %v4080 = vshrl.u32 %v4079, 7
        %4082 = vset.pattern.permute.xlu0 %v4080
        %4083 = vperm.xlu0 %4082, %v4078
        %v4084 = vpop.permute.xlu0 %4083
        %v4085 = vlaneseq
        %v4086 = vshrl.u32 %v4085, 7
        %v4087 = vadd.s32 %v4086, 8
        %4088 = vset.pattern.permute.xlu0 %v4087
        %4089 = vperm.xlu0 %4088, %v4078
        %v4090 = vpop.permute.xlu0 %4089
        %v4091 = vlaneseq
        %v4092 = vshrl.u32 %v4091, 7
        %v4093 = vadd.s32 %v4092, 16
        %4094 = vset.pattern.permute.xlu0 %v4093
        %4095 = vperm.xlu0 %4094, %v4078
        %v4096 = vpop.permute.xlu0 %4095
        %v4097 = vlaneseq
        %v4098 = vshrl.u32 %v4097, 7
        %v4099 = vadd.s32 %v4098, 24
        %4100 = vset.pattern.permute.xlu0 %v4099
        %4101 = vperm.xlu0 %4100, %v4078
        %v4102 = vpop.permute.xlu0 %4101
        %v4103 = vlaneseq
        %v4104 = vshrl.u32 %v4103, 7
        %v4105 = vadd.s32 %v4104, 32
        %4106 = vset.pattern.permute.xlu0 %v4105
        %4107 = vperm.xlu0 %4106, %v4078
        %v4108 = vpop.permute.xlu0 %4107
        %v4109 = vlaneseq
        %v4110 = vshrl.u32 %v4109, 7
        %v4111 = vadd.s32 %v4110, 40
        %4112 = vset.pattern.permute.xlu0 %v4111
        %4113 = vperm.xlu0 %4112, %v4078
        %v4114 = vpop.permute.xlu0 %4113
        %v4115 = vlaneseq
        %v4116 = vshrl.u32 %v4115, 7
        %v4117 = vadd.s32 %v4116, 48
        %4118 = vset.pattern.permute.xlu0 %v4117
        %4119 = vperm.xlu0 %4118, %v4078
        %v4120 = vpop.permute.xlu0 %4119
        %v4121 = vlaneseq
        %v4122 = vshrl.u32 %v4121, 7
        %v4123 = vadd.s32 %v4122, 56
        %4124 = vset.pattern.permute.xlu0 %v4123
        %4125 = vperm.xlu0 %4124, %v4078
        %v4126 = vpop.permute.xlu0 %4125
        %v4127 = vmul.f32 %v4013, %v4035
        %v4128 = vmul.f32 %v4014, %v4041
        %v4129 = vmul.f32 %v4015, %v4047
        %v4130 = vmul.f32 %v4016, %v4053
        %v4131 = vmul.f32 %v4017, %v4059
        %v4132 = vmul.f32 %v4018, %v4065
        %v4133 = vmul.f32 %v4019, %v4071
        %v4134 = vmul.f32 %v4020, %v4077
        %v4135 = vmul.f32 %v4021, %v4084
        %v4136 = vmul.f32 %v4022, %v4090
        %v4137 = vmul.f32 %v4023, %v4096
        %v4138 = vmul.f32 %v4024, %v4102
        %v4139 = vmul.f32 %v4025, %v4108
        %v4140 = vmul.f32 %v4026, %v4114
        %v4141 = vmul.f32 %v4027, %v4120
        %v4142 = vmul.f32 %v4028, %v4126
        %v4143 = vsel %vm549, %v4127, 0.0
        %v4144 = vsel %vm549, %v4128, 0.0
        %v4145 = vadd.f32 %v4143, %v4144
        %v4146 = vsel %vm549, %v4129, 0.0
        %v4147 = vadd.f32 %v4145, %v4146
        %v4148 = vsel %vm549, %v4130, 0.0
        %v4149 = vadd.f32 %v4147, %v4148
        %v4150 = vsel %vm549, %v4131, 0.0
        %v4151 = vadd.f32 %v4149, %v4150
        %v4152 = vsel %vm549, %v4132, 0.0
        %v4153 = vadd.f32 %v4151, %v4152
        %v4154 = vsel %vm549, %v4133, 0.0
        %v4155 = vadd.f32 %v4153, %v4154
        %v4156 = vsel %vm549, %v4134, 0.0
        %v4157 = vadd.f32 %v4155, %v4156
        %v4158 = vrot.slane %v4157, 4
        %v4159 = vadd.f32 %v4157, %v4158
        %v4160 = vrot.slane %v4159, 2
        %v4161 = vadd.f32 %v4159, %v4160
        %v4162 = vrot.slane %v4161, 1
        %v4163 = vadd.f32 %v4161, %v4162
        %v4164 = vsel %vm549, %v4135, 0.0
        %v4165 = vsel %vm549, %v4136, 0.0
        %v4166 = vadd.f32 %v4164, %v4165
        %v4167 = vsel %vm549, %v4137, 0.0
        %v4168 = vadd.f32 %v4166, %v4167
        %v4169 = vsel %vm549, %v4138, 0.0
        %v4170 = vadd.f32 %v4168, %v4169
        %v4171 = vsel %vm549, %v4139, 0.0
        %v4172 = vadd.f32 %v4170, %v4171
        %v4173 = vsel %vm549, %v4140, 0.0
        %v4174 = vadd.f32 %v4172, %v4173
        %v4175 = vsel %vm549, %v4141, 0.0
        %v4176 = vadd.f32 %v4174, %v4175
        %v4177 = vsel %vm549, %v4142, 0.0
        %v4178 = vadd.f32 %v4176, %v4177
        %v4179 = vrot.slane %v4178, 4
        %v4180 = vadd.f32 %v4178, %v4179
        %v4181 = vrot.slane %v4180, 2
        %v4182 = vadd.f32 %v4180, %v4181
        %v4183 = vrot.slane %v4182, 1
        %v4184 = vadd.f32 %v4182, %v4183
        %vm4185 = vcmask 1040384
        %v4186 = vsel %vm4185, %v2609, %v2831
        %v4187 = vsel %vm4185, %v2630, %v2852
        %vm4188 = vcmask 1041408
        %v4189 = vsel %vm4188, %v4186, %v3053
        %v4190 = vsel %vm4188, %v4187, %v3074
        %vm4191 = vcmask 1042432
        %v4192 = vsel %vm4191, %v4189, %v3275
        %v4193 = vsel %vm4191, %v4190, %v3296
        %vm4194 = vcmask 1043456
        %v4195 = vsel %vm4194, %v4192, %v3497
        %v4196 = vsel %vm4194, %v4193, %v3518
        %vm4197 = vcmask 1044480
        %v4198 = vsel %vm4197, %v4195, %v3719
        %v4199 = vsel %vm4197, %v4196, %v3740
        %vm4200 = vcmask 1045504
        %v4201 = vsel %vm4200, %v4198, %v3941
        %v4202 = vsel %vm4200, %v4199, %v3962
        %vm4203 = vcmask 1046528
        %v4204 = vsel %vm4203, %v4201, %v4163
        %v4205 = vsel %vm4203, %v4202, %v4184
        %4206 = vst.msk [vmem:[#allocation7] sm:$0xff] %vm549, %v4204
        %4207 = vst.msk [vmem:[#allocation7 + $0x8] sm:$0xff] %vm549, %v4205
        %v4208 = vld [vmem:[#allocation7] sm:$0xff]
        %v4209 = vld [vmem:[#allocation7 + $0x8] sm:$0xff]
        %v4210 = vperm.slane %v455, 4
        %v4211 = vmul.f32 %v4210, %v589
        %v4212 = vmul.f32 %v4210, %v590
        %v4213 = vadd.f32 %v4208, %v4211
        %v4214 = vadd.f32 %v4209, %v4212
        %v4215 = vmul.f32 %v544, 0.5
        %v4216 = vmul.f32 %v546, 0.5
        %v4217 = vtanh.pop %v4215
        %v4218 = vtanh.pop %v4216
        %v4219 = vmul.f32 %v4217, 0.5
        %v4220 = vmul.f32 %v4218, 0.5
        %v4221 = vadd.f32 %v4219, 0.5
        %v4222 = vadd.f32 %v4220, 0.5
        %v4223 = vmul.f32 %v544, %v4221
        %v4224 = vmul.f32 %v546, %v4222
        %4227 = vrot.lane.b32.xlu0 %v4223, 64
        %v4228 = vpop.permute.xlu0 %4227
        %4229 = vrot.lane.b32.xlu0 %v4224, 64
        %v4230 = vpop.permute.xlu0 %4229
        %v4233 = vmul.f32 %v4213, %v4228
        %v4234 = vmul.f32 %v4214, %v4230
        %v4235 = vpack.c.bf16 %v4234, %v4233
        %v4236 = vld [vmem:[%s437] sm:$0xf]
        %v4237 = vld [vmem:[%s437 + $0x4] sm:$0xf]
        %v4238 = vld [vmem:[%s437 + $0x8] sm:$0xf]
        %v4239 = vld [vmem:[%s437 + $0xc] sm:$0xf]
        %v4240 = vld [vmem:[%s437 + $0x10] sm:$0xf]
        %v4241 = vld [vmem:[%s437 + $0x14] sm:$0xf]
        %v4242 = vld [vmem:[%s437 + $0x18] sm:$0xf]
        %v4243 = vld [vmem:[%s437 + $0x1c] sm:$0xf]
        %v4252 = vunpack.c.l.b16 %v4236
        %v4253 = vunpack.c.l.b16 %v4237
        %v4254 = vunpack.c.l.b16 %v4238
        %v4255 = vunpack.c.l.b16 %v4239
        %v4256 = vunpack.c.l.b16 %v4240
        %v4257 = vunpack.c.l.b16 %v4241
        %v4258 = vunpack.c.l.b16 %v4242
        %v4259 = vunpack.c.l.b16 %v4243
        %v4260 = vpack.c.b16 %v4253, %v4252
        %v4261 = vpack.c.b16 %v4255, %v4254
        %v4262 = vpack.c.b16 %v4257, %v4256
        %v4263 = vpack.c.b16 %v4259, %v4258
        %v4269 = vsel %vm549, %v4235, 0
        %4271 = vmatpush.bf16.msra.mxu0 0
        %4272 = vmatpush.bf16.msra.mxu0 0
        %4273 = vmatpush.bf16.msra.mxu0 0
        %4274 = vmatpush.bf16.msra.mxu0 0
        %4275 = vmatpush.bf16.msra.mxu0 %v4263
        %4276 = vmatpush.bf16.msra.mxu0 %v4262
        %4277 = vmatpush.bf16.msra.mxu0 %v4261
        %4278 = vmatpush.bf16.msra.mxu0 %v4260
        %4279 = vmatmul.bf16.gmra.mxu0 %v4269
        %v4280 = vpop.f32.mrf.mxu0
        %v4281 = vadd.f32 0.0, %v4280
        %v4282 = vpop.f32.mrf.mxu0
        %v4283 = vadd.f32 0.0, %v4282
        %4284 = vdwg.mxu0
        %v4285 = vadd.f32 %v453, %v4281
        %v4286 = vadd.f32 %v454, %v4283
        %4287 = vst.msk [vmem:[#allocation15] sm:$0xff] %vm456, %v4285
        %4288 = vst.msk [vmem:[#allocation15 + $0x8] sm:$0xff] %vm456, %v4286
        // Predicated region
        $region61: #{tpu_custom_call.1} parent=47 // pred_check
          %p4289 = pneg %p237
        $region62: #{tpu_custom_call.1} parent=47 // pred_check_branch
          %4291 = sbr.rel (%p4289) target = $region64
        $region63: #{tpu_custom_call.1} parent=47 // pred_region
          %s4292 = smul.u32 2, %s29
          %4294 = vsyncadd [#allocation12], 0
          %s4295 = smul.addr %s4292, 8
          %s4296 = scalar_lea.hbm %s7, %s4295
          %s4297 = sshll.u32 [#allocation15], 4
          %s4298 = int_to_ptr.vmem [resolvable:$true] %s4297
          %s4299 = sshll.u32 %s4296, 4
          %s4300 = int_to_ptr.hbm [resolvable:$true] %s4299
          %4305 = dma.vmem_to_hbm [thread:$0]  %s4298, 256, %s4300, [#allocation12], 128, 128, 8
        $region64: #{tpu_custom_call.1} parent=47 // pred_fallthru
          _
        // Predicated region
        $region65: #{tpu_custom_call.1} parent=47 // pred_check
          %p4306 = pneg %p237
        $region66: #{tpu_custom_call.1} parent=47 // pred_check_branch
          %4308 = sbr.rel (%p4306) target = $region68
        $region67: #{tpu_custom_call.1} parent=47 // pred_region
          %4310 = dma.done [#allocation12], 256
        $region68: #{tpu_custom_call.1} parent=47 // pred_fallthru
          _
      $region48: #{tpu_custom_call.1} parent=5 // pred_fallthru
        _
      %p4311 = scmp.le.s32.totalorder 2, %s20
      // Predicated region
      $region69: #{tpu_custom_call.1} parent=5 // pred_check
        %p4312 = pneg %p4311
      $region70: #{tpu_custom_call.1} parent=5 // pred_check_branch
        %4314 = sbr.rel (%p4312) target = $region72
      $region71: #{tpu_custom_call.1} parent=5 // pred_region
        %s4315 = ssub.s32 %s20, 2
      $region72: #{tpu_custom_call.1} parent=5 // pred_fallthru
        _
    $region6: #{tpu_custom_call.1} parent=1 // loop_footer
      %s24 = sadd.s32 1, %s20
    $region7: #{tpu_custom_call.1} parent=1 // loop_footer_branch
      %19 = sbr.rel target = $region3
    $region8: #{tpu_custom_call.1} parent=1 // loop_exit
      _
    %4316 = vsyncpa [#allocation11], 1
    %s4317 = scalar_lea.sflag [#allocation11], 1
    %4318 = vsyncpa %s4317, 1
    %4319 = vsyncpa [#allocation14], 1
    %s4320 = scalar_lea.sflag [#allocation14], 1
    %4321 = vsyncpa %s4320, 1
    %4322 = vsyncpa [#allocation12], 1
    %s4323 = scalar_lea.sflag [#allocation12], 1
    %4324 = vsyncpa %s4323, 1

</llo_original>
